<compile_context>
chip_gen: v6e
topology: v6e:2x2x1
jax: 0.10.0
libtpu: 0.0.40
codegen_flags: <defaults>
</compile_context>

<pallas_src>
import functools

import jax
import jax.numpy as jnp
from jax.experimental import pallas as pl
from jax.experimental.pallas import tpu as pltpu


# ----------------------------------------------------------------------------
# Fused Pallas kernel
# ----------------------------------------------------------------------------

def fused_forward_kernel(xl_raw_ref, xr_raw_ref, e_in_ref, y_onehot_ref,
                         expl_ref, expr_ref, explT_ref, exprT_ref,
                         wl_ref, wr_ref, wemb_ref,
                         wlp_ref, blp_ref, wrp_ref, brp_ref,
                         weu_ref, beu_ref, bng_ref, bnb_ref,
                         wh_ref, bh_ref, wo_ref, bo_ref,
                         logits_ref, loss_ref,
                         *, num_layers, n_mlp_hidden, aggregation,
                         matmul_dtype):
    f32 = jnp.float32
    VL = xl_raw_ref.shape[0]
    VR = xr_raw_ref.shape[0]
    H = wl_ref.shape[1]
    n_edges = VL * VR

    def dot(a, b):
        # Optionally feed the MXU bf16 operands (f32 accumulation).
        if matmul_dtype is not None:
            a = a.astype(matmul_dtype)
            b = b.astype(matmul_dtype)
        return jnp.dot(a, b, preferred_element_type=f32)

    def bn_relu(x, gamma, beta):
        # Training-mode BatchNorm over the leading axis (biased variance,
        # eps=1e-5), two-pass variance for numerical safety, then ReLU.
        mean = jnp.mean(x, axis=0, keepdims=True)
        var = jnp.mean(jnp.square(x - mean), axis=0, keepdims=True)
        y = gamma * (x - mean) * jax.lax.rsqrt(var + 1e-5) + beta
        return jnp.maximum(y, 0.0)

    # ------------------------- input embeddings ------------------------------
    xl = dot(xl_raw_ref[...], wl_ref[...])            # (VL, H)
    xr = dot(xr_raw_ref[...], wr_ref[...])            # (VR, H)
    # Block-diagonal packed weight: e = [edge_vals @ We_vals | onehot @ Emb]
    # (matches torch.cat((e_vals, e_tags), dim=3)) in ONE matmul.
    e = dot(e_in_ref[...], wemb_ref[...])             # (E, H), E = VL*VR

    expl = expl_ref[...]                              # (E, VL)  row-broadcast
    expr = expr_ref[...]                              # (E, VR)  col-broadcast
    explT = explT_ref[...]                            # (VL, E)  reduce over j
    exprT = exprT_ref[...]                            # (VR, E)  reduce over i

    # --------------------- residual gated GCN layers -------------------------
    for layer in range(num_layers):
        # Packed per-side projections; lane order [V_edge | V_node | U].
        xl_proj = dot(xl, wlp_ref[layer]) + blp_ref[layer]     # (VL, 3H)
        xr_proj = dot(xr, wrp_ref[layer]) + brp_ref[layer]     # (VR, 3H)
        ul = xl_proj[:, 2 * H:3 * H]                           # (VL, H)
        ur = xr_proj[:, 2 * H:3 * H]                           # (VR, H)
        # Broadcast the first 2H lanes of each side to every edge row with a
        # single expansion matmul (no 3-D reshapes, no per-row loops).
        xl_exp = dot(expl, xl_proj[:, 0:2 * H])                # (E, 2H)
        xr_exp = dot(expr, xr_proj[:, 0:2 * H])                # (E, 2H)
        vle_f = xl_exp[:, 0:H]
        vln_f = xl_exp[:, H:2 * H]
        vre_f = xr_exp[:, 0:H]
        vrn_f = xr_exp[:, H:2 * H]

        # Edge update + gates: one (E,H)x(H,H) matmul + slab VPU/EUP ops.
        e_tmp = dot(e, weu_ref[layer]) + beu_ref[layer] + vle_f + vre_f
        gate = jax.nn.sigmoid(e_tmp)                           # (E, H)

        # Gated aggregations as segmented-sum matmuls over the flat edge axis.
        agg_l = dot(explT, gate * vrn_f)                       # (VL, H)
        agg_r = dot(exprT, gate * vln_f)                       # (VR, H)
        if aggregation == "mean":
            gate_l = dot(explT, gate)                          # (VL, H)
            gate_r = dot(exprT, gate)                          # (VR, H)
            agg_l = agg_l * pl.reciprocal(gate_l + 1e-20, approx=True)
            agg_r = agg_r * pl.reciprocal(gate_r + 1e-20, approx=True)

        xl_tmp = ul + agg_l
        xr_tmp = ur + agg_r

        # BatchNorm + ReLU + residual (edge / left / right).
        e = e + bn_relu(e_tmp, bng_ref[3 * layer + 0], bnb_ref[3 * layer + 0])
        xl = xl + bn_relu(xl_tmp, bng_ref[3 * layer + 1], bnb_ref[3 * layer + 1])
        xr = xr + bn_relu(xr_tmp, bng_ref[3 * layer + 2], bnb_ref[3 * layer + 2])

    # ------------------ MLP edge classifier + cross-entropy ------------------
    h = e                                                      # (E, H)
    for m in range(n_mlp_hidden):
        h = jnp.maximum(dot(h, wh_ref[m]) + bh_ref[m], 0.0)
    logits = dot(h, wo_ref[...]) + bo_ref[...]                 # (E, C)
    logits_ref[...] = logits                                   # one flat store

    # Cross-entropy (mean over edges), batched over the flat edge axis.
    mrow = jnp.max(logits, axis=-1, keepdims=True)
    lse = mrow + jnp.log(jnp.sum(jnp.exp(logits - mrow), axis=-1, keepdims=True))
    sel = jnp.sum(y_onehot_ref[...] * logits, axis=-1, keepdims=True)
    loss_ref[...] = jnp.sum(lse - sel, axis=0, keepdims=True) * (1.0 / n_edges)


# ----------------------------------------------------------------------------
# pallas_call wrapper
# ----------------------------------------------------------------------------

def _vmem_specs(n):
    return [pl.BlockSpec(memory_space=pltpu.MemorySpace.VMEM) for _ in range(n)]


def forward(packed, cfg, x_left, x_right, x_edges_values, x_edges, y_edges):
    VL, VR = x_edges.shape
    E = VL * VR
    H = cfg['hidden_dim']
    C = cfg['voc_edges_out']
    DE = cfg['edge_dim'] - 1
    voc_in = cfg['voc_edges_in']
    n_hidden = cfg['mlp_layers'] - 1
    assert n_hidden >= 1, "mlp_layers must be >= 2"
    f32 = jnp.float32

    # Lane-dense, flat-edge-axis inputs: no (VL, VR, 1) int tensors enter the
    # kernel; categorical inputs become f32 one-hots here.
    evals_flat = x_edges_values.reshape(E, DE).astype(f32)
    xe_onehot = jax.nn.one_hot(x_edges.reshape(E), voc_in, dtype=f32)
    e_in = jnp.concatenate([evals_flat, xe_onehot], axis=-1)       # (E, DE+voc)
    y_onehot = jax.nn.one_hot(y_edges.reshape(E), C, dtype=f32)    # (E, C)

    # 0/1 expansion matrices: per-left-node / per-right-node broadcasts and
    # segmented sums over the flat edge axis become plain 2-D MXU matmuls.
    expand_l = jnp.repeat(jnp.eye(VL, dtype=f32), VR, axis=0)      # (E, VL)
    expand_r = jnp.tile(jnp.eye(VR, dtype=f32), (VL, 1))           # (E, VR)

    kernel = functools.partial(
        fused_forward_kernel,
        num_layers=cfg['num_layers'],
        n_mlp_hidden=n_hidden,
        aggregation=cfg['aggregation'],
        matmul_dtype=cfg.get('matmul_dtype', None))

    logits_flat, loss = pl.pallas_call(
        kernel,
        out_shape=[jax.ShapeDtypeStruct((E, C), f32),
                   jax.ShapeDtypeStruct((1, 1), f32)],
        in_specs=_vmem_specs(23),
        out_specs=_vmem_specs(2),
        compiler_params=pltpu.CompilerParams(
            vmem_limit_bytes=32 * 1024 * 1024),
    )(x_left.astype(f32), x_right.astype(f32), e_in, y_onehot,
      expand_l, expand_r, expand_l.T, expand_r.T,
      packed['embed']['wl'], packed['embed']['wr'], packed['wemb'],
      packed['wlp'], packed['blp'], packed['wrp'], packed['brp'],
      packed['weu'], packed['beu'], packed['bng'], packed['bnb'],
      packed['mlp']['Wh'], packed['mlp']['Bh'],
      packed['mlp']['Wo'], packed['mlp']['Bo'])

    y_pred_edges = logits_flat.reshape(1, VL, VR, C)   # (1, VL, VR, voc_out)
    return y_pred_edges, loss[0, 0]


# ----------------------------------------------------------------------------
# Parameters: module-structured init + packing for the fused kernel
# ----------------------------------------------------------------------------

def init_params(key, cfg):
    hidden = cfg['hidden_dim']
    d_left, d_right = cfg['left_node_dim'], cfg['right_node_dim']
    d_edge = cfg['edge_dim'] - 1
    voc_in, voc_out = cfg['voc_edges_in'], cfg['voc_edges_out']
    n_layers, n_mlp = cfg['num_layers'], cfg['mlp_layers']

    keys = iter(jax.random.split(key, 16 + 8 * n_layers))

    def w(shape, scale=0.1):
        return (scale * jax.random.normal(next(keys), shape)).astype(jnp.float32)

    params = {
        'embed': {
            'wl': w((d_left, hidden)),
            'wr': w((d_right, hidden)),
            'we': w((d_edge, hidden // 2)),
            'emb': w((voc_in, hidden // 2)),
        },
        'gcn': [],
        'mlp': {
            'Wh': w((n_mlp - 1, hidden, hidden)),
            'Bh': w((n_mlp - 1, 1, hidden)),
            'Wo': w((hidden, voc_out)),
            'Bo': w((1, voc_out)),
        },
    }
    for _ in range(n_layers):
        params['gcn'].append({
            'We': w((3, hidden, hidden)),    # [U_edge, Vl_edge, Vr_edge]
            'Be': w((3, 1, hidden)),
            'Wn': w((4, hidden, hidden)),    # [U_left, Vr_node, U_right, Vl_node]
            'Bn': w((4, 1, hidden)),
            'bn_g': jnp.ones((3, 1, hidden), jnp.float32),   # [edge, left, right]
            'bn_b': jnp.zeros((3, 1, hidden), jnp.float32),
        })
    return params


def pack_params(params, cfg):
    """Stack per-layer weights, pack the per-side HxH matrices into (H, 3H)
    lane-packed matrices (lane order [V_edge | V_node | U] so the first 2H
    lanes are exactly the broadcast-to-edges ones), and fold the edge-value
    Linear + edge-tag Embedding into one block-diagonal matrix."""
    H = cfg['hidden_dim']
    DE = cfg['edge_dim'] - 1
    voc_in = cfg['voc_edges_in']
    emb = params['embed']

    wemb = jnp.zeros((DE + voc_in, H), jnp.float32)
    wemb = wemb.at[:DE, :H // 2].set(emb['we'])
    wemb = wemb.at[DE:, H // 2:].set(emb['emb'])

    gcn = params['gcn']
    wlp = jnp.stack([jnp.concatenate(
        [lp['We'][1], lp['Wn'][3], lp['Wn'][0]], axis=1) for lp in gcn])
    blp = jnp.stack([jnp.concatenate(
        [lp['Be'][1], lp['Bn'][3], lp['Bn'][0]], axis=1) for lp in gcn])
    wrp = jnp.stack([jnp.concatenate(
        [lp['We'][2], lp['Wn'][1], lp['Wn'][2]], axis=1) for lp in gcn])
    brp = jnp.stack([jnp.concatenate(
        [lp['Be'][2], lp['Bn'][1], lp['Bn'][2]], axis=1) for lp in gcn])
    weu = jnp.stack([lp['We'][0] for lp in gcn])                 # (L, H, H)
    beu = jnp.stack([lp['Be'][0] for lp in gcn])                 # (L, 1, H)
    bng = jnp.concatenate([lp['bn_g'] for lp in gcn], axis=0)    # (3L, 1, H)
    bnb = jnp.concatenate([lp['bn_b'] for lp in gcn], axis=0)    # (3L, 1, H)
    return {
        'embed': {'wl': emb['wl'], 'wr': emb['wr']},
        'wemb': wemb,
        'mlp': params['mlp'],
        'wlp': wlp, 'blp': blp, 'wrp': wrp, 'brp': brp,
        'weu': weu, 'beu': beu, 'bng': bng, 'bnb': bnb,
    }


# ----------------------------------------------------------------------------
# main
# ----------------------------------------------------------------------------

if __name__ == "__main__":
    cfg = dict(
        left_node_dim=4,
        right_node_dim=6,
        edge_dim=5,            # Linear uses edge_dim - 1 = 4 input features
        voc_edges_in=3,
        voc_edges_out=2,
        hidden_dim=32,
        num_layers=2,
        mlp_layers=2,
        aggregation="mean",
        # bf16 MXU operands (f32 accumulation) for v6e/v7x throughput; set to
        # None to keep exact f32 matmuls matching the PyTorch reference.
        matmul_dtype=jnp.bfloat16,
    )
    VL, VR = 8, 12

    key = jax.random.PRNGKey(0)
    k_data, k_params = jax.random.split(key)
    kd = iter(jax.random.split(k_data, 8))

    x_left = jax.random.normal(next(kd), (VL, cfg['left_node_dim']), jnp.float32)
    x_right = jax.random.normal(next(kd), (VR, cfg['right_node_dim']), jnp.float32)
    x_edges_values = jax.random.normal(next(kd), (VL, VR, cfg['edge_dim'] - 1),
                                       jnp.float32)
    x_edges = jax.random.randint(next(kd), (VL, VR), 0, cfg['voc_edges_in'])
    y_edges = jax.random.randint(next(kd), (VL, VR), 0, cfg['voc_edges_out'])

    params = init_params(k_params, cfg)
    packed = pack_params(params, cfg)

    y_pred_edges, loss = forward(packed, cfg, x_left, x_right,
                                 x_edges_values, x_edges, y_edges)
    jax.block_until_ready((y_pred_edges, loss))

    assert y_pred_edges.shape == (1, VL, VR, cfg['voc_edges_out'])
    assert loss.shape == ()
    assert bool(jnp.isfinite(loss))
    print("KERNEL_OK")
</pallas_src>

<mosaic_0001>
module attributes {stable_mosaic.version = 11 : i64} {
  func.func @fused_forward_kernel(%arg0: memref<8x4xf32, #tpu.memory_space<vmem>>, %arg1: memref<12x6xf32, #tpu.memory_space<vmem>>, %arg2: memref<96x7xf32, #tpu.memory_space<vmem>>, %arg3: memref<96x2xf32, #tpu.memory_space<vmem>>, %arg4: memref<96x8xf32, #tpu.memory_space<vmem>>, %arg5: memref<96x12xf32, #tpu.memory_space<vmem>>, %arg6: memref<8x96xf32, #tpu.memory_space<vmem>>, %arg7: memref<12x96xf32, #tpu.memory_space<vmem>>, %arg8: memref<4x32xf32, #tpu.memory_space<vmem>>, %arg9: memref<6x32xf32, #tpu.memory_space<vmem>>, %arg10: memref<7x32xf32, #tpu.memory_space<vmem>>, %arg11: memref<2x32x96xf32, #tpu.memory_space<vmem>>, %arg12: memref<2x1x96xf32, #tpu.memory_space<vmem>>, %arg13: memref<2x32x96xf32, #tpu.memory_space<vmem>>, %arg14: memref<2x1x96xf32, #tpu.memory_space<vmem>>, %arg15: memref<2x32x32xf32, #tpu.memory_space<vmem>>, %arg16: memref<2x1x32xf32, #tpu.memory_space<vmem>>, %arg17: memref<6x1x32xf32, #tpu.memory_space<vmem>>, %arg18: memref<6x1x32xf32, #tpu.memory_space<vmem>>, %arg19: memref<1x32x32xf32, #tpu.memory_space<vmem>>, %arg20: memref<1x1x32xf32, #tpu.memory_space<vmem>>, %arg21: memref<32x2xf32, #tpu.memory_space<vmem>>, %arg22: memref<1x2xf32, #tpu.memory_space<vmem>>, %arg23: memref<96x2xf32, #tpu.memory_space<vmem>>, %arg24: memref<1x1xf32, #tpu.memory_space<vmem>>) attributes {dimension_semantics = [], scalar_prefetch = 0 : i64, scratch_operands = 0 : i64, tpu.core_type = #tpu.core_type<tc>} {
    %c0 = arith.constant 0 : index
    %c0_0 = arith.constant 0 : index
    %0 = vector.load %arg0[%c0, %c0_0] : memref<8x4xf32, #tpu.memory_space<vmem>>, vector<8x4xf32>
    %c0_1 = arith.constant 0 : index
    %c0_2 = arith.constant 0 : index
    %1 = vector.load %arg8[%c0_1, %c0_2] : memref<4x32xf32, #tpu.memory_space<vmem>>, vector<4x32xf32>
    %2 = arith.truncf %0 : vector<8x4xf32> to vector<8x4xbf16>
    %3 = arith.truncf %1 : vector<4x32xf32> to vector<4x32xbf16>
    %cst = arith.constant dense<0.000000e+00> : vector<8x32xf32>
    %4 = tpu.matmul %2, %3, %cst {dimension_numbers = #tpu.dot_dimension_numbers<[1], [0], [0], [1], [0, 0, 1, 1], [], []>} : vector<8x4xbf16>, vector<4x32xbf16>, vector<8x32xf32> -> vector<8x32xf32>
    %c0_3 = arith.constant 0 : index
    %c0_4 = arith.constant 0 : index
    %5 = vector.load %arg1[%c0_3, %c0_4] : memref<12x6xf32, #tpu.memory_space<vmem>>, vector<12x6xf32>
    %c0_5 = arith.constant 0 : index
    %c0_6 = arith.constant 0 : index
    %6 = vector.load %arg9[%c0_5, %c0_6] : memref<6x32xf32, #tpu.memory_space<vmem>>, vector<6x32xf32>
    %7 = arith.truncf %5 : vector<12x6xf32> to vector<12x6xbf16>
    %8 = arith.truncf %6 : vector<6x32xf32> to vector<6x32xbf16>
    %cst_7 = arith.constant dense<0.000000e+00> : vector<12x32xf32>
    %9 = tpu.matmul %7, %8, %cst_7 {dimension_numbers = #tpu.dot_dimension_numbers<[1], [0], [0], [1], [0, 0, 1, 1], [], []>} : vector<12x6xbf16>, vector<6x32xbf16>, vector<12x32xf32> -> vector<12x32xf32>
    %c0_8 = arith.constant 0 : index
    %c0_9 = arith.constant 0 : index
    %10 = vector.load %arg2[%c0_8, %c0_9] : memref<96x7xf32, #tpu.memory_space<vmem>>, vector<96x7xf32>
    %c0_10 = arith.constant 0 : index
    %c0_11 = arith.constant 0 : index
    %11 = vector.load %arg10[%c0_10, %c0_11] : memref<7x32xf32, #tpu.memory_space<vmem>>, vector<7x32xf32>
    %12 = arith.truncf %10 : vector<96x7xf32> to vector<96x7xbf16>
    %13 = arith.truncf %11 : vector<7x32xf32> to vector<7x32xbf16>
    %cst_12 = arith.constant dense<0.000000e+00> : vector<96x32xf32>
    %14 = tpu.matmul %12, %13, %cst_12 {dimension_numbers = #tpu.dot_dimension_numbers<[1], [0], [0], [1], [0, 0, 1, 1], [], []>} : vector<96x7xbf16>, vector<7x32xbf16>, vector<96x32xf32> -> vector<96x32xf32>
    %c0_13 = arith.constant 0 : index
    %c0_14 = arith.constant 0 : index
    %15 = vector.load %arg4[%c0_13, %c0_14] : memref<96x8xf32, #tpu.memory_space<vmem>>, vector<96x8xf32>
    %c0_15 = arith.constant 0 : index
    %c0_16 = arith.constant 0 : index
    %16 = vector.load %arg5[%c0_15, %c0_16] : memref<96x12xf32, #tpu.memory_space<vmem>>, vector<96x12xf32>
    %c0_17 = arith.constant 0 : index
    %c0_18 = arith.constant 0 : index
    %17 = vector.load %arg6[%c0_17, %c0_18] : memref<8x96xf32, #tpu.memory_space<vmem>>, vector<8x96xf32>
    %c0_19 = arith.constant 0 : index
    %c0_20 = arith.constant 0 : index
    %18 = vector.load %arg7[%c0_19, %c0_20] : memref<12x96xf32, #tpu.memory_space<vmem>>, vector<12x96xf32>
    %c0_21 = arith.constant 0 : index
    %c0_22 = arith.constant 0 : index
    %c0_23 = arith.constant 0 : index
    %19 = vector.load %arg11[%c0_21, %c0_22, %c0_23] : memref<2x32x96xf32, #tpu.memory_space<vmem>>, vector<1x32x96xf32>
    %20 = vector.shape_cast %19 : vector<1x32x96xf32> to vector<32x96xf32>
    %21 = arith.truncf %4 : vector<8x32xf32> to vector<8x32xbf16>
    %22 = arith.truncf %20 : vector<32x96xf32> to vector<32x96xbf16>
    %cst_24 = arith.constant dense<0.000000e+00> : vector<8x96xf32>
    %23 = tpu.matmul %21, %22, %cst_24 {dimension_numbers = #tpu.dot_dimension_numbers<[1], [0], [0], [1], [0, 0, 1, 1], [], []>} : vector<8x32xbf16>, vector<32x96xbf16>, vector<8x96xf32> -> vector<8x96xf32>
    %c0_25 = arith.constant 0 : index
    %c0_26 = arith.constant 0 : index
    %c0_27 = arith.constant 0 : index
    %24 = vector.load %arg12[%c0_25, %c0_26, %c0_27] : memref<2x1x96xf32, #tpu.memory_space<vmem>>, vector<1x1x96xf32>
    %25 = vector.shape_cast %24 : vector<1x1x96xf32> to vector<1x96xf32>
    %26 = vector.broadcast %25 : vector<1x96xf32> to vector<8x96xf32>
    %27 = arith.addf %23, %26 : vector<8x96xf32>
    %c0_28 = arith.constant 0 : index
    %c0_29 = arith.constant 0 : index
    %c0_30 = arith.constant 0 : index
    %28 = vector.load %arg13[%c0_28, %c0_29, %c0_30] : memref<2x32x96xf32, #tpu.memory_space<vmem>>, vector<1x32x96xf32>
    %29 = vector.shape_cast %28 : vector<1x32x96xf32> to vector<32x96xf32>
    %30 = arith.truncf %9 : vector<12x32xf32> to vector<12x32xbf16>
    %31 = arith.truncf %29 : vector<32x96xf32> to vector<32x96xbf16>
    %cst_31 = arith.constant dense<0.000000e+00> : vector<12x96xf32>
    %32 = tpu.matmul %30, %31, %cst_31 {dimension_numbers = #tpu.dot_dimension_numbers<[1], [0], [0], [1], [0, 0, 1, 1], [], []>} : vector<12x32xbf16>, vector<32x96xbf16>, vector<12x96xf32> -> vector<12x96xf32>
    %c0_32 = arith.constant 0 : index
    %c0_33 = arith.constant 0 : index
    %c0_34 = arith.constant 0 : index
    %33 = vector.load %arg14[%c0_32, %c0_33, %c0_34] : memref<2x1x96xf32, #tpu.memory_space<vmem>>, vector<1x1x96xf32>
    %34 = vector.shape_cast %33 : vector<1x1x96xf32> to vector<1x96xf32>
    %35 = vector.broadcast %34 : vector<1x96xf32> to vector<12x96xf32>
    %36 = arith.addf %32, %35 : vector<12x96xf32>
    %37 = vector.extract_strided_slice %27 {offsets = [0, 64], sizes = [8, 32], strides = [1, 1]} : vector<8x96xf32> to vector<8x32xf32>
    %38 = vector.extract_strided_slice %36 {offsets = [0, 64], sizes = [12, 32], strides = [1, 1]} : vector<12x96xf32> to vector<12x32xf32>
    %39 = vector.extract_strided_slice %27 {offsets = [0, 0], sizes = [8, 64], strides = [1, 1]} : vector<8x96xf32> to vector<8x64xf32>
    %40 = arith.truncf %15 : vector<96x8xf32> to vector<96x8xbf16>
    %41 = arith.truncf %39 : vector<8x64xf32> to vector<8x64xbf16>
    %cst_35 = arith.constant dense<0.000000e+00> : vector<96x64xf32>
    %42 = tpu.matmul %40, %41, %cst_35 {dimension_numbers = #tpu.dot_dimension_numbers<[1], [0], [0], [1], [0, 0, 1, 1], [], []>} : vector<96x8xbf16>, vector<8x64xbf16>, vector<96x64xf32> -> vector<96x64xf32>
    %43 = vector.extract_strided_slice %36 {offsets = [0, 0], sizes = [12, 64], strides = [1, 1]} : vector<12x96xf32> to vector<12x64xf32>
    %44 = arith.truncf %16 : vector<96x12xf32> to vector<96x12xbf16>
    %45 = arith.truncf %43 : vector<12x64xf32> to vector<12x64xbf16>
    %cst_36 = arith.constant dense<0.000000e+00> : vector<96x64xf32>
    %46 = tpu.matmul %44, %45, %cst_36 {dimension_numbers = #tpu.dot_dimension_numbers<[1], [0], [0], [1], [0, 0, 1, 1], [], []>} : vector<96x12xbf16>, vector<12x64xbf16>, vector<96x64xf32> -> vector<96x64xf32>
    %47 = vector.extract_strided_slice %42 {offsets = [0, 0], sizes = [96, 32], strides = [1, 1]} : vector<96x64xf32> to vector<96x32xf32>
    %48 = vector.extract_strided_slice %42 {offsets = [0, 32], sizes = [96, 32], strides = [1, 1]} : vector<96x64xf32> to vector<96x32xf32>
    %49 = vector.extract_strided_slice %46 {offsets = [0, 0], sizes = [96, 32], strides = [1, 1]} : vector<96x64xf32> to vector<96x32xf32>
    %50 = vector.extract_strided_slice %46 {offsets = [0, 32], sizes = [96, 32], strides = [1, 1]} : vector<96x64xf32> to vector<96x32xf32>
    %c0_37 = arith.constant 0 : index
    %c0_38 = arith.constant 0 : index
    %c0_39 = arith.constant 0 : index
    %51 = vector.load %arg15[%c0_37, %c0_38, %c0_39] : memref<2x32x32xf32, #tpu.memory_space<vmem>>, vector<1x32x32xf32>
    %52 = vector.shape_cast %51 : vector<1x32x32xf32> to vector<32x32xf32>
    %53 = arith.truncf %14 : vector<96x32xf32> to vector<96x32xbf16>
    %54 = arith.truncf %52 : vector<32x32xf32> to vector<32x32xbf16>
    %cst_40 = arith.constant dense<0.000000e+00> : vector<96x32xf32>
    %55 = tpu.matmul %53, %54, %cst_40 {dimension_numbers = #tpu.dot_dimension_numbers<[1], [0], [0], [1], [0, 0, 1, 1], [], []>} : vector<96x32xbf16>, vector<32x32xbf16>, vector<96x32xf32> -> vector<96x32xf32>
    %c0_41 = arith.constant 0 : index
    %c0_42 = arith.constant 0 : index
    %c0_43 = arith.constant 0 : index
    %56 = vector.load %arg16[%c0_41, %c0_42, %c0_43] : memref<2x1x32xf32, #tpu.memory_space<vmem>>, vector<1x1x32xf32>
    %57 = vector.shape_cast %56 : vector<1x1x32xf32> to vector<1x32xf32>
    %58 = vector.broadcast %57 : vector<1x32xf32> to vector<96x32xf32>
    %59 = arith.addf %55, %58 : vector<96x32xf32>
    %60 = arith.addf %59, %47 : vector<96x32xf32>
    %61 = arith.addf %60, %49 : vector<96x32xf32>
    %62 = arith.negf %61 : vector<96x32xf32>
    %63 = math.exp %62 : vector<96x32xf32>
    %cst_44 = arith.constant 1.000000e+00 : f32
    %64 = vector.broadcast %cst_44 : f32 to vector<96x32xf32>
    %65 = arith.addf %64, %63 : vector<96x32xf32>
    %66 = arith.divf %64, %65 : vector<96x32xf32>
    %67 = arith.mulf %66, %50 : vector<96x32xf32>
    %68 = arith.truncf %17 : vector<8x96xf32> to vector<8x96xbf16>
    %69 = arith.truncf %67 : vector<96x32xf32> to vector<96x32xbf16>
    %cst_45 = arith.constant dense<0.000000e+00> : vector<8x32xf32>
    %70 = tpu.matmul %68, %69, %cst_45 {dimension_numbers = #tpu.dot_dimension_numbers<[1], [0], [0], [1], [0, 0, 1, 1], [], []>} : vector<8x96xbf16>, vector<96x32xbf16>, vector<8x32xf32> -> vector<8x32xf32>
    %71 = arith.mulf %66, %48 : vector<96x32xf32>
    %72 = arith.truncf %18 : vector<12x96xf32> to vector<12x96xbf16>
    %73 = arith.truncf %71 : vector<96x32xf32> to vector<96x32xbf16>
    %cst_46 = arith.constant dense<0.000000e+00> : vector<12x32xf32>
    %74 = tpu.matmul %72, %73, %cst_46 {dimension_numbers = #tpu.dot_dimension_numbers<[1], [0], [0], [1], [0, 0, 1, 1], [], []>} : vector<12x96xbf16>, vector<96x32xbf16>, vector<12x32xf32> -> vector<12x32xf32>
    %75 = arith.truncf %17 : vector<8x96xf32> to vector<8x96xbf16>
    %76 = arith.truncf %66 : vector<96x32xf32> to vector<96x32xbf16>
    %cst_47 = arith.constant dense<0.000000e+00> : vector<8x32xf32>
    %77 = tpu.matmul %75, %76, %cst_47 {dimension_numbers = #tpu.dot_dimension_numbers<[1], [0], [0], [1], [0, 0, 1, 1], [], []>} : vector<8x96xbf16>, vector<96x32xbf16>, vector<8x32xf32> -> vector<8x32xf32>
    %78 = arith.truncf %18 : vector<12x96xf32> to vector<12x96xbf16>
    %79 = arith.truncf %66 : vector<96x32xf32> to vector<96x32xbf16>
    %cst_48 = arith.constant dense<0.000000e+00> : vector<12x32xf32>
    %80 = tpu.matmul %78, %79, %cst_48 {dimension_numbers = #tpu.dot_dimension_numbers<[1], [0], [0], [1], [0, 0, 1, 1], [], []>} : vector<12x96xbf16>, vector<96x32xbf16>, vector<12x32xf32> -> vector<12x32xf32>
    %cst_49 = arith.constant 9.99999968E-21 : f32
    %81 = vector.broadcast %cst_49 : f32 to vector<8x32xf32>
    %82 = arith.addf %77, %81 : vector<8x32xf32>
    %83 = tpu.reciprocal %82 {approx = true} : vector<8x32xf32> -> vector<8x32xf32>
    %84 = arith.mulf %70, %83 : vector<8x32xf32>
    %cst_50 = arith.constant 9.99999968E-21 : f32
    %85 = vector.broadcast %cst_50 : f32 to vector<12x32xf32>
    %86 = arith.addf %80, %85 : vector<12x32xf32>
    %87 = tpu.reciprocal %86 {approx = true} : vector<12x32xf32> -> vector<12x32xf32>
    %88 = arith.mulf %74, %87 : vector<12x32xf32>
    %89 = arith.addf %37, %84 : vector<8x32xf32>
    %90 = arith.addf %38, %88 : vector<12x32xf32>
    %c0_51 = arith.constant 0 : index
    %c0_52 = arith.constant 0 : index
    %c0_53 = arith.constant 0 : index
    %91 = vector.load %arg17[%c0_51, %c0_52, %c0_53] : memref<6x1x32xf32, #tpu.memory_space<vmem>>, vector<1x1x32xf32>
    %92 = vector.shape_cast %91 : vector<1x1x32xf32> to vector<1x32xf32>
    %c0_54 = arith.constant 0 : index
    %c0_55 = arith.constant 0 : index
    %c0_56 = arith.constant 0 : index
    %93 = vector.load %arg18[%c0_54, %c0_55, %c0_56] : memref<6x1x32xf32, #tpu.memory_space<vmem>>, vector<1x1x32xf32>
    %94 = vector.shape_cast %93 : vector<1x1x32xf32> to vector<1x32xf32>
    %cst_57 = arith.constant dense<0.000000e+00> : vector<32xf32>
    %95 = vector.multi_reduction <add>, %61, %cst_57 [0] : vector<96x32xf32> to vector<32xf32>
    %96 = vector.shape_cast %95 : vector<32xf32> to vector<1x32xf32>
    %cst_58 = arith.constant 9.600000e+01 : f32
    %97 = vector.broadcast %cst_58 : f32 to vector<1x32xf32>
    %98 = arith.divf %96, %97 : vector<1x32xf32>
    %99 = vector.broadcast %98 : vector<1x32xf32> to vector<96x32xf32>
    %100 = arith.subf %61, %99 : vector<96x32xf32>
    %101 = arith.mulf %100, %100 : vector<96x32xf32>
    %cst_59 = arith.constant dense<0.000000e+00> : vector<32xf32>
    %102 = vector.multi_reduction <add>, %101, %cst_59 [0] : vector<96x32xf32> to vector<32xf32>
    %103 = vector.shape_cast %102 : vector<32xf32> to vector<1x32xf32>
    %cst_60 = arith.constant 9.600000e+01 : f32
    %104 = vector.broadcast %cst_60 : f32 to vector<1x32xf32>
    %105 = arith.divf %103, %104 : vector<1x32xf32>
    %106 = vector.broadcast %98 : vector<1x32xf32> to vector<96x32xf32>
    %107 = arith.subf %61, %106 : vector<96x32xf32>
    %108 = vector.broadcast %92 : vector<1x32xf32> to vector<96x32xf32>
    %109 = arith.mulf %108, %107 : vector<96x32xf32>
    %cst_61 = arith.constant 9.99999974E-6 : f32
    %110 = vector.broadcast %cst_61 : f32 to vector<1x32xf32>
    %111 = arith.addf %105, %110 : vector<1x32xf32>
    %112 = math.rsqrt %111 : vector<1x32xf32>
    %113 = vector.broadcast %112 : vector<1x32xf32> to vector<96x32xf32>
    %114 = arith.mulf %109, %113 : vector<96x32xf32>
    %115 = vector.broadcast %94 : vector<1x32xf32> to vector<96x32xf32>
    %116 = arith.addf %114, %115 : vector<96x32xf32>
    %cst_62 = arith.constant 0.000000e+00 : f32
    %117 = vector.broadcast %cst_62 : f32 to vector<96x32xf32>
    %118 = arith.maximumf %116, %117 : vector<96x32xf32>
    %119 = arith.addf %14, %118 : vector<96x32xf32>
    %c1 = arith.constant 1 : index
    %c0_63 = arith.constant 0 : index
    %c0_64 = arith.constant 0 : index
    %120 = vector.load %arg17[%c1, %c0_63, %c0_64] : memref<6x1x32xf32, #tpu.memory_space<vmem>>, vector<1x1x32xf32>
    %121 = vector.shape_cast %120 : vector<1x1x32xf32> to vector<1x32xf32>
    %c1_65 = arith.constant 1 : index
    %c0_66 = arith.constant 0 : index
    %c0_67 = arith.constant 0 : index
    %122 = vector.load %arg18[%c1_65, %c0_66, %c0_67] : memref<6x1x32xf32, #tpu.memory_space<vmem>>, vector<1x1x32xf32>
    %123 = vector.shape_cast %122 : vector<1x1x32xf32> to vector<1x32xf32>
    %cst_68 = arith.constant dense<0.000000e+00> : vector<32xf32>
    %124 = vector.multi_reduction <add>, %89, %cst_68 [0] : vector<8x32xf32> to vector<32xf32>
    %125 = vector.shape_cast %124 : vector<32xf32> to vector<1x32xf32>
    %cst_69 = arith.constant 8.000000e+00 : f32
    %126 = vector.broadcast %cst_69 : f32 to vector<1x32xf32>
    %127 = arith.divf %125, %126 : vector<1x32xf32>
    %128 = vector.broadcast %127 : vector<1x32xf32> to vector<8x32xf32>
    %129 = arith.subf %89, %128 : vector<8x32xf32>
    %130 = arith.mulf %129, %129 : vector<8x32xf32>
    %cst_70 = arith.constant dense<0.000000e+00> : vector<32xf32>
    %131 = vector.multi_reduction <add>, %130, %cst_70 [0] : vector<8x32xf32> to vector<32xf32>
    %132 = vector.shape_cast %131 : vector<32xf32> to vector<1x32xf32>
    %cst_71 = arith.constant 8.000000e+00 : f32
    %133 = vector.broadcast %cst_71 : f32 to vector<1x32xf32>
    %134 = arith.divf %132, %133 : vector<1x32xf32>
    %135 = vector.broadcast %127 : vector<1x32xf32> to vector<8x32xf32>
    %136 = arith.subf %89, %135 : vector<8x32xf32>
    %137 = vector.broadcast %121 : vector<1x32xf32> to vector<8x32xf32>
    %138 = arith.mulf %137, %136 : vector<8x32xf32>
    %cst_72 = arith.constant 9.99999974E-6 : f32
    %139 = vector.broadcast %cst_72 : f32 to vector<1x32xf32>
    %140 = arith.addf %134, %139 : vector<1x32xf32>
    %141 = math.rsqrt %140 : vector<1x32xf32>
    %142 = vector.broadcast %141 : vector<1x32xf32> to vector<8x32xf32>
    %143 = arith.mulf %138, %142 : vector<8x32xf32>
    %144 = vector.broadcast %123 : vector<1x32xf32> to vector<8x32xf32>
    %145 = arith.addf %143, %144 : vector<8x32xf32>
    %cst_73 = arith.constant 0.000000e+00 : f32
    %146 = vector.broadcast %cst_73 : f32 to vector<8x32xf32>
    %147 = arith.maximumf %145, %146 : vector<8x32xf32>
    %148 = arith.addf %4, %147 : vector<8x32xf32>
    %c2 = arith.constant 2 : index
    %c0_74 = arith.constant 0 : index
    %c0_75 = arith.constant 0 : index
    %149 = vector.load %arg17[%c2, %c0_74, %c0_75] : memref<6x1x32xf32, #tpu.memory_space<vmem>>, vector<1x1x32xf32>
    %150 = vector.shape_cast %149 : vector<1x1x32xf32> to vector<1x32xf32>
    %c2_76 = arith.constant 2 : index
    %c0_77 = arith.constant 0 : index
    %c0_78 = arith.constant 0 : index
    %151 = vector.load %arg18[%c2_76, %c0_77, %c0_78] : memref<6x1x32xf32, #tpu.memory_space<vmem>>, vector<1x1x32xf32>
    %152 = vector.shape_cast %151 : vector<1x1x32xf32> to vector<1x32xf32>
    %cst_79 = arith.constant dense<0.000000e+00> : vector<32xf32>
    %153 = vector.multi_reduction <add>, %90, %cst_79 [0] : vector<12x32xf32> to vector<32xf32>
    %154 = vector.shape_cast %153 : vector<32xf32> to vector<1x32xf32>
    %cst_80 = arith.constant 1.200000e+01 : f32
    %155 = vector.broadcast %cst_80 : f32 to vector<1x32xf32>
    %156 = arith.divf %154, %155 : vector<1x32xf32>
    %157 = vector.broadcast %156 : vector<1x32xf32> to vector<12x32xf32>
    %158 = arith.subf %90, %157 : vector<12x32xf32>
    %159 = arith.mulf %158, %158 : vector<12x32xf32>
    %cst_81 = arith.constant dense<0.000000e+00> : vector<32xf32>
    %160 = vector.multi_reduction <add>, %159, %cst_81 [0] : vector<12x32xf32> to vector<32xf32>
    %161 = vector.shape_cast %160 : vector<32xf32> to vector<1x32xf32>
    %cst_82 = arith.constant 1.200000e+01 : f32
    %162 = vector.broadcast %cst_82 : f32 to vector<1x32xf32>
    %163 = arith.divf %161, %162 : vector<1x32xf32>
    %164 = vector.broadcast %156 : vector<1x32xf32> to vector<12x32xf32>
    %165 = arith.subf %90, %164 : vector<12x32xf32>
    %166 = vector.broadcast %150 : vector<1x32xf32> to vector<12x32xf32>
    %167 = arith.mulf %166, %165 : vector<12x32xf32>
    %cst_83 = arith.constant 9.99999974E-6 : f32
    %168 = vector.broadcast %cst_83 : f32 to vector<1x32xf32>
    %169 = arith.addf %163, %168 : vector<1x32xf32>
    %170 = math.rsqrt %169 : vector<1x32xf32>
    %171 = vector.broadcast %170 : vector<1x32xf32> to vector<12x32xf32>
    %172 = arith.mulf %167, %171 : vector<12x32xf32>
    %173 = vector.broadcast %152 : vector<1x32xf32> to vector<12x32xf32>
    %174 = arith.addf %172, %173 : vector<12x32xf32>
    %cst_84 = arith.constant 0.000000e+00 : f32
    %175 = vector.broadcast %cst_84 : f32 to vector<12x32xf32>
    %176 = arith.maximumf %174, %175 : vector<12x32xf32>
    %177 = arith.addf %9, %176 : vector<12x32xf32>
    %c1_85 = arith.constant 1 : index
    %c0_86 = arith.constant 0 : index
    %c0_87 = arith.constant 0 : index
    %178 = vector.load %arg11[%c1_85, %c0_86, %c0_87] : memref<2x32x96xf32, #tpu.memory_space<vmem>>, vector<1x32x96xf32>
    %179 = vector.shape_cast %178 : vector<1x32x96xf32> to vector<32x96xf32>
    %180 = arith.truncf %148 : vector<8x32xf32> to vector<8x32xbf16>
    %181 = arith.truncf %179 : vector<32x96xf32> to vector<32x96xbf16>
    %cst_88 = arith.constant dense<0.000000e+00> : vector<8x96xf32>
    %182 = tpu.matmul %180, %181, %cst_88 {dimension_numbers = #tpu.dot_dimension_numbers<[1], [0], [0], [1], [0, 0, 1, 1], [], []>} : vector<8x32xbf16>, vector<32x96xbf16>, vector<8x96xf32> -> vector<8x96xf32>
    %c1_89 = arith.constant 1 : index
    %c0_90 = arith.constant 0 : index
    %c0_91 = arith.constant 0 : index
    %183 = vector.load %arg12[%c1_89, %c0_90, %c0_91] : memref<2x1x96xf32, #tpu.memory_space<vmem>>, vector<1x1x96xf32>
    %184 = vector.shape_cast %183 : vector<1x1x96xf32> to vector<1x96xf32>
    %185 = vector.broadcast %184 : vector<1x96xf32> to vector<8x96xf32>
    %186 = arith.addf %182, %185 : vector<8x96xf32>
    %c1_92 = arith.constant 1 : index
    %c0_93 = arith.constant 0 : index
    %c0_94 = arith.constant 0 : index
    %187 = vector.load %arg13[%c1_92, %c0_93, %c0_94] : memref<2x32x96xf32, #tpu.memory_space<vmem>>, vector<1x32x96xf32>
    %188 = vector.shape_cast %187 : vector<1x32x96xf32> to vector<32x96xf32>
    %189 = arith.truncf %177 : vector<12x32xf32> to vector<12x32xbf16>
    %190 = arith.truncf %188 : vector<32x96xf32> to vector<32x96xbf16>
    %cst_95 = arith.constant dense<0.000000e+00> : vector<12x96xf32>
    %191 = tpu.matmul %189, %190, %cst_95 {dimension_numbers = #tpu.dot_dimension_numbers<[1], [0], [0], [1], [0, 0, 1, 1], [], []>} : vector<12x32xbf16>, vector<32x96xbf16>, vector<12x96xf32> -> vector<12x96xf32>
    %c1_96 = arith.constant 1 : index
    %c0_97 = arith.constant 0 : index
    %c0_98 = arith.constant 0 : index
    %192 = vector.load %arg14[%c1_96, %c0_97, %c0_98] : memref<2x1x96xf32, #tpu.memory_space<vmem>>, vector<1x1x96xf32>
    %193 = vector.shape_cast %192 : vector<1x1x96xf32> to vector<1x96xf32>
    %194 = vector.broadcast %193 : vector<1x96xf32> to vector<12x96xf32>
    %195 = arith.addf %191, %194 : vector<12x96xf32>
    %196 = vector.extract_strided_slice %186 {offsets = [0, 0], sizes = [8, 64], strides = [1, 1]} : vector<8x96xf32> to vector<8x64xf32>
    %197 = arith.truncf %15 : vector<96x8xf32> to vector<96x8xbf16>
    %198 = arith.truncf %196 : vector<8x64xf32> to vector<8x64xbf16>
    %cst_99 = arith.constant dense<0.000000e+00> : vector<96x64xf32>
    %199 = tpu.matmul %197, %198, %cst_99 {dimension_numbers = #tpu.dot_dimension_numbers<[1], [0], [0], [1], [0, 0, 1, 1], [], []>} : vector<96x8xbf16>, vector<8x64xbf16>, vector<96x64xf32> -> vector<96x64xf32>
    %200 = vector.extract_strided_slice %195 {offsets = [0, 0], sizes = [12, 64], strides = [1, 1]} : vector<12x96xf32> to vector<12x64xf32>
    %201 = arith.truncf %16 : vector<96x12xf32> to vector<96x12xbf16>
    %202 = arith.truncf %200 : vector<12x64xf32> to vector<12x64xbf16>
    %cst_100 = arith.constant dense<0.000000e+00> : vector<96x64xf32>
    %203 = tpu.matmul %201, %202, %cst_100 {dimension_numbers = #tpu.dot_dimension_numbers<[1], [0], [0], [1], [0, 0, 1, 1], [], []>} : vector<96x12xbf16>, vector<12x64xbf16>, vector<96x64xf32> -> vector<96x64xf32>
    %204 = vector.extract_strided_slice %199 {offsets = [0, 0], sizes = [96, 32], strides = [1, 1]} : vector<96x64xf32> to vector<96x32xf32>
    %205 = vector.extract_strided_slice %203 {offsets = [0, 0], sizes = [96, 32], strides = [1, 1]} : vector<96x64xf32> to vector<96x32xf32>
    %c1_101 = arith.constant 1 : index
    %c0_102 = arith.constant 0 : index
    %c0_103 = arith.constant 0 : index
    %206 = vector.load %arg15[%c1_101, %c0_102, %c0_103] : memref<2x32x32xf32, #tpu.memory_space<vmem>>, vector<1x32x32xf32>
    %207 = vector.shape_cast %206 : vector<1x32x32xf32> to vector<32x32xf32>
    %208 = arith.truncf %119 : vector<96x32xf32> to vector<96x32xbf16>
    %209 = arith.truncf %207 : vector<32x32xf32> to vector<32x32xbf16>
    %cst_104 = arith.constant dense<0.000000e+00> : vector<96x32xf32>
    %210 = tpu.matmul %208, %209, %cst_104 {dimension_numbers = #tpu.dot_dimension_numbers<[1], [0], [0], [1], [0, 0, 1, 1], [], []>} : vector<96x32xbf16>, vector<32x32xbf16>, vector<96x32xf32> -> vector<96x32xf32>
    %c1_105 = arith.constant 1 : index
    %c0_106 = arith.constant 0 : index
    %c0_107 = arith.constant 0 : index
    %211 = vector.load %arg16[%c1_105, %c0_106, %c0_107] : memref<2x1x32xf32, #tpu.memory_space<vmem>>, vector<1x1x32xf32>
    %212 = vector.shape_cast %211 : vector<1x1x32xf32> to vector<1x32xf32>
    %213 = vector.broadcast %212 : vector<1x32xf32> to vector<96x32xf32>
    %214 = arith.addf %210, %213 : vector<96x32xf32>
    %215 = arith.addf %214, %204 : vector<96x32xf32>
    %216 = arith.addf %215, %205 : vector<96x32xf32>
    %c3 = arith.constant 3 : index
    %c0_108 = arith.constant 0 : index
    %c0_109 = arith.constant 0 : index
    %217 = vector.load %arg17[%c3, %c0_108, %c0_109] : memref<6x1x32xf32, #tpu.memory_space<vmem>>, vector<1x1x32xf32>
    %218 = vector.shape_cast %217 : vector<1x1x32xf32> to vector<1x32xf32>
    %c3_110 = arith.constant 3 : index
    %c0_111 = arith.constant 0 : index
    %c0_112 = arith.constant 0 : index
    %219 = vector.load %arg18[%c3_110, %c0_111, %c0_112] : memref<6x1x32xf32, #tpu.memory_space<vmem>>, vector<1x1x32xf32>
    %220 = vector.shape_cast %219 : vector<1x1x32xf32> to vector<1x32xf32>
    %cst_113 = arith.constant dense<0.000000e+00> : vector<32xf32>
    %221 = vector.multi_reduction <add>, %216, %cst_113 [0] : vector<96x32xf32> to vector<32xf32>
    %222 = vector.shape_cast %221 : vector<32xf32> to vector<1x32xf32>
    %cst_114 = arith.constant 9.600000e+01 : f32
    %223 = vector.broadcast %cst_114 : f32 to vector<1x32xf32>
    %224 = arith.divf %222, %223 : vector<1x32xf32>
    %225 = vector.broadcast %224 : vector<1x32xf32> to vector<96x32xf32>
    %226 = arith.subf %216, %225 : vector<96x32xf32>
    %227 = arith.mulf %226, %226 : vector<96x32xf32>
    %cst_115 = arith.constant dense<0.000000e+00> : vector<32xf32>
    %228 = vector.multi_reduction <add>, %227, %cst_115 [0] : vector<96x32xf32> to vector<32xf32>
    %229 = vector.shape_cast %228 : vector<32xf32> to vector<1x32xf32>
    %cst_116 = arith.constant 9.600000e+01 : f32
    %230 = vector.broadcast %cst_116 : f32 to vector<1x32xf32>
    %231 = arith.divf %229, %230 : vector<1x32xf32>
    %232 = vector.broadcast %224 : vector<1x32xf32> to vector<96x32xf32>
    %233 = arith.subf %216, %232 : vector<96x32xf32>
    %234 = vector.broadcast %218 : vector<1x32xf32> to vector<96x32xf32>
    %235 = arith.mulf %234, %233 : vector<96x32xf32>
    %cst_117 = arith.constant 9.99999974E-6 : f32
    %236 = vector.broadcast %cst_117 : f32 to vector<1x32xf32>
    %237 = arith.addf %231, %236 : vector<1x32xf32>
    %238 = math.rsqrt %237 : vector<1x32xf32>
    %239 = vector.broadcast %238 : vector<1x32xf32> to vector<96x32xf32>
    %240 = arith.mulf %235, %239 : vector<96x32xf32>
    %241 = vector.broadcast %220 : vector<1x32xf32> to vector<96x32xf32>
    %242 = arith.addf %240, %241 : vector<96x32xf32>
    %cst_118 = arith.constant 0.000000e+00 : f32
    %243 = vector.broadcast %cst_118 : f32 to vector<96x32xf32>
    %244 = arith.maximumf %242, %243 : vector<96x32xf32>
    %245 = arith.addf %119, %244 : vector<96x32xf32>
    %c0_119 = arith.constant 0 : index
    %c0_120 = arith.constant 0 : index
    %c0_121 = arith.constant 0 : index
    %246 = vector.load %arg19[%c0_119, %c0_120, %c0_121] : memref<1x32x32xf32, #tpu.memory_space<vmem>>, vector<1x32x32xf32>
    %247 = vector.shape_cast %246 : vector<1x32x32xf32> to vector<32x32xf32>
    %248 = arith.truncf %245 : vector<96x32xf32> to vector<96x32xbf16>
    %249 = arith.truncf %247 : vector<32x32xf32> to vector<32x32xbf16>
    %cst_122 = arith.constant dense<0.000000e+00> : vector<96x32xf32>
    %250 = tpu.matmul %248, %249, %cst_122 {dimension_numbers = #tpu.dot_dimension_numbers<[1], [0], [0], [1], [0, 0, 1, 1], [], []>} : vector<96x32xbf16>, vector<32x32xbf16>, vector<96x32xf32> -> vector<96x32xf32>
    %c0_123 = arith.constant 0 : index
    %c0_124 = arith.constant 0 : index
    %c0_125 = arith.constant 0 : index
    %251 = vector.load %arg20[%c0_123, %c0_124, %c0_125] : memref<1x1x32xf32, #tpu.memory_space<vmem>>, vector<1x1x32xf32>
    %252 = vector.shape_cast %251 : vector<1x1x32xf32> to vector<1x32xf32>
    %253 = vector.broadcast %252 : vector<1x32xf32> to vector<96x32xf32>
    %254 = arith.addf %250, %253 : vector<96x32xf32>
    %cst_126 = arith.constant 0.000000e+00 : f32
    %255 = vector.broadcast %cst_126 : f32 to vector<96x32xf32>
    %256 = arith.maximumf %254, %255 : vector<96x32xf32>
    %c0_127 = arith.constant 0 : index
    %c0_128 = arith.constant 0 : index
    %257 = vector.load %arg21[%c0_127, %c0_128] : memref<32x2xf32, #tpu.memory_space<vmem>>, vector<32x2xf32>
    %258 = arith.truncf %256 : vector<96x32xf32> to vector<96x32xbf16>
    %259 = arith.truncf %257 : vector<32x2xf32> to vector<32x2xbf16>
    %cst_129 = arith.constant dense<0.000000e+00> : vector<96x2xf32>
    %260 = tpu.matmul %258, %259, %cst_129 {dimension_numbers = #tpu.dot_dimension_numbers<[1], [0], [0], [1], [0, 0, 1, 1], [], []>} : vector<96x32xbf16>, vector<32x2xbf16>, vector<96x2xf32> -> vector<96x2xf32>
    %c0_130 = arith.constant 0 : index
    %c0_131 = arith.constant 0 : index
    %261 = vector.load %arg22[%c0_130, %c0_131] : memref<1x2xf32, #tpu.memory_space<vmem>>, vector<1x2xf32>
    %262 = vector.broadcast %261 : vector<1x2xf32> to vector<96x2xf32>
    %263 = arith.addf %260, %262 : vector<96x2xf32>
    %c0_132 = arith.constant 0 : index
    %c0_133 = arith.constant 0 : index
    %264 = vector.load %arg23[%c0_132, %c0_133] : memref<96x2xf32, #tpu.memory_space<vmem>>, vector<96x2xf32>
    tpu.vector_store %arg23[%c0_132, %c0_133], %263 {strides = array<i32>} : memref<96x2xf32, #tpu.memory_space<vmem>>, vector<96x2xf32>,
    %cst_134 = arith.constant dense<0xFF800000> : vector<96xf32>
    %265 = vector.multi_reduction <maximumf>, %263, %cst_134 [1] : vector<96x2xf32> to vector<96xf32>
    %266 = vector.shape_cast %265 : vector<96xf32> to vector<96x1xf32>
    %267 = vector.broadcast %266 : vector<96x1xf32> to vector<96x2xf32>
    %268 = arith.subf %263, %267 : vector<96x2xf32>
    %269 = math.exp %268 : vector<96x2xf32>
    %cst_135 = arith.constant dense<0.000000e+00> : vector<96xf32>
    %270 = vector.multi_reduction <add>, %269, %cst_135 [1] : vector<96x2xf32> to vector<96xf32>
    %271 = vector.shape_cast %270 : vector<96xf32> to vector<96x1xf32>
    %272 = math.log %271 : vector<96x1xf32>
    %273 = arith.addf %266, %272 : vector<96x1xf32>
    %c0_136 = arith.constant 0 : index
    %c0_137 = arith.constant 0 : index
    %274 = vector.load %arg3[%c0_136, %c0_137] : memref<96x2xf32, #tpu.memory_space<vmem>>, vector<96x2xf32>
    %275 = arith.mulf %274, %263 : vector<96x2xf32>
    %cst_138 = arith.constant dense<0.000000e+00> : vector<96xf32>
    %276 = vector.multi_reduction <add>, %275, %cst_138 [1] : vector<96x2xf32> to vector<96xf32>
    %277 = vector.shape_cast %276 : vector<96xf32> to vector<96x1xf32>
    %278 = arith.subf %273, %277 : vector<96x1xf32>
    %cst_139 = arith.constant dense<0.000000e+00> : vector<1xf32>
    %279 = vector.multi_reduction <add>, %278, %cst_139 [0] : vector<96x1xf32> to vector<1xf32>
    %280 = vector.shape_cast %279 : vector<1xf32> to vector<1x1xf32>
    %cst_140 = arith.constant 0.010416667 : f32
    %281 = vector.broadcast %cst_140 : f32 to vector<1x1xf32>
    %282 = arith.mulf %280, %281 : vector<1x1xf32>
    %c0_141 = arith.constant 0 : index
    %c0_142 = arith.constant 0 : index
    %283 = vector.load %arg24[%c0_141, %c0_142] : memref<1x1xf32, #tpu.memory_space<vmem>>, vector<1x1xf32>
    tpu.vector_store %arg24[%c0_141, %c0_142], %282 {strides = array<i32>} : memref<1x1xf32, #tpu.memory_space<vmem>>, vector<1x1xf32>,
    return
  }
}

</mosaic_0001>

<llo_original>
// kernel: tpu_custom_call.1
$region0: #{tpu_custom_call.1}
  #allocation0 [shape = 'u32[]', space=smem, size = 0x4, offset = 0x4, fixed_abs, tag = 'smem constant byte address 0x4 - core index']
  #allocation1 [shape = 'u32[144,128]{1,0:T(1,128)}', space=vmem, size = 0x12000, scoped, tag = 'internal scratch']
  %s0 = inlined_call_operand.vmem [shape: f32[8,4], index: 0, kind: input, shape index: {}]
  %s1 = inlined_call_operand.vmem [shape: f32[12,6], index: 1, kind: input, shape index: {}]
  %s2 = inlined_call_operand.vmem [shape: f32[96,7], index: 2, kind: input, shape index: {}]
  %s3 = inlined_call_operand.vmem [shape: f32[96,2], index: 3, kind: input, shape index: {}]
  %s4 = inlined_call_operand.vmem [shape: f32[96,8], index: 4, kind: input, shape index: {}]
  %s5 = inlined_call_operand.vmem [shape: f32[96,12], index: 5, kind: input, shape index: {}]
  %s6 = inlined_call_operand.vmem [shape: f32[8,96], index: 6, kind: input, shape index: {}]
  %s7 = inlined_call_operand.vmem [shape: f32[12,96], index: 7, kind: input, shape index: {}]
  %s8 = inlined_call_operand.vmem [shape: f32[4,32], index: 8, kind: input, shape index: {}]
  %s9 = inlined_call_operand.vmem [shape: f32[6,32], index: 9, kind: input, shape index: {}]
  %s10 = inlined_call_operand.vmem [shape: f32[7,32], index: 10, kind: input, shape index: {}]
  %s11 = inlined_call_operand.vmem [shape: f32[2,32,96], index: 11, kind: input, shape index: {}]
  %s12 = inlined_call_operand.vmem [shape: f32[2,1,96], index: 12, kind: input, shape index: {}]
  %s13 = inlined_call_operand.vmem [shape: f32[2,32,96], index: 13, kind: input, shape index: {}]
  %s14 = inlined_call_operand.vmem [shape: f32[2,1,96], index: 14, kind: input, shape index: {}]
  %s15 = inlined_call_operand.vmem [shape: f32[2,32,32], index: 15, kind: input, shape index: {}]
  %s16 = inlined_call_operand.vmem [shape: f32[2,1,32], index: 16, kind: input, shape index: {}]
  %s17 = inlined_call_operand.vmem [shape: f32[6,1,32], index: 17, kind: input, shape index: {}]
  %s18 = inlined_call_operand.vmem [shape: f32[6,1,32], index: 18, kind: input, shape index: {}]
  %s19 = inlined_call_operand.vmem [shape: f32[1,32,32], index: 19, kind: input, shape index: {}]
  %s20 = inlined_call_operand.vmem [shape: f32[1,1,32], index: 20, kind: input, shape index: {}]
  %s21 = inlined_call_operand.vmem [shape: f32[32,2], index: 21, kind: input, shape index: {}]
  %s22 = inlined_call_operand.vmem [shape: f32[1,2], index: 22, kind: input, shape index: {}]
  %s23 = inlined_call_operand.vmem [shape: f32[96,2], index: 23, kind: output, shape index: {0}]
  %s24 = inlined_call_operand.hbm [shape: f32[1,1], index: 24, kind: output, shape index: {1}]
  %25 = xla_tuple %s23, %s24
  %s26 = sld [smem:[#allocation0]]
  $region110: #{tpu_custom_call.1} parent=0
    _
  %s28 = ssub.s32 1, %s26
  %s29 = scalar_select 0, %s28, %s26
  $region1: #{tpu_custom_call.1} parent=0
    #allocation2 [shape = 'u8[512]{0}', space=vmem, size = 0x400, scoped, tag = 'output window, operand 1, single buffered']
    #allocation3 [shape = 's32[1]{0}', space=sflag, size = 0x4, scoped, tag = 'scoped memory for tpu_custom_call.1']
    %30 = vsyncpa [#allocation3], 0
    // Predicated region
    $region2: #{tpu_custom_call.1} parent=1 // pred_check
      _
    $region3: #{tpu_custom_call.1} parent=1 // pred_check_branch
      %32 = sbr.rel (0) target = $region5
    $region4: #{tpu_custom_call.1} parent=1 // pred_region
      _
    $region5: #{tpu_custom_call.1} parent=1 // pred_fallthru
      _
    // Predicated region
    $region6: #{tpu_custom_call.1} parent=1 // pred_check
      _
    $region7: #{tpu_custom_call.1} parent=1 // pred_check_branch
      %34 = sbr.rel (0) target = $region9
    $region8: #{tpu_custom_call.1} parent=1 // pred_region
      _
    $region9: #{tpu_custom_call.1} parent=1 // pred_fallthru
      _
    // Predicated region
    $region10: #{tpu_custom_call.1} parent=1 // pred_check
      _
    $region11: #{tpu_custom_call.1} parent=1 // pred_check_branch
      %36 = sbr.rel (0) target = $region13
    $region12: #{tpu_custom_call.1} parent=1 // pred_region
      _
    $region13: #{tpu_custom_call.1} parent=1 // pred_fallthru
      _
    // Predicated region
    $region14: #{tpu_custom_call.1} parent=1 // pred_check
      _
    $region15: #{tpu_custom_call.1} parent=1 // pred_check_branch
      %38 = sbr.rel (0) target = $region17
    $region16: #{tpu_custom_call.1} parent=1 // pred_region
      _
    $region17: #{tpu_custom_call.1} parent=1 // pred_fallthru
      _
    // Predicated region
    $region18: #{tpu_custom_call.1} parent=1 // pred_check
      _
    $region19: #{tpu_custom_call.1} parent=1 // pred_check_branch
      %40 = sbr.rel (0) target = $region21
    $region20: #{tpu_custom_call.1} parent=1 // pred_region
      _
    $region21: #{tpu_custom_call.1} parent=1 // pred_fallthru
      _
    // Predicated region
    $region22: #{tpu_custom_call.1} parent=1 // pred_check
      _
    $region23: #{tpu_custom_call.1} parent=1 // pred_check_branch
      %42 = sbr.rel (0) target = $region25
    $region24: #{tpu_custom_call.1} parent=1 // pred_region
      _
    $region25: #{tpu_custom_call.1} parent=1 // pred_fallthru
      _
    // Predicated region
    $region26: #{tpu_custom_call.1} parent=1 // pred_check
      _
    $region27: #{tpu_custom_call.1} parent=1 // pred_check_branch
      %44 = sbr.rel (0) target = $region29
    $region28: #{tpu_custom_call.1} parent=1 // pred_region
      _
    $region29: #{tpu_custom_call.1} parent=1 // pred_fallthru
      _
    // Predicated region
    $region30: #{tpu_custom_call.1} parent=1 // pred_check
      _
    $region31: #{tpu_custom_call.1} parent=1 // pred_check_branch
      %46 = sbr.rel (0) target = $region33
    $region32: #{tpu_custom_call.1} parent=1 // pred_region
      _
    $region33: #{tpu_custom_call.1} parent=1 // pred_fallthru
      _
    // Predicated region
    $region34: #{tpu_custom_call.1} parent=1 // pred_check
      _
    $region35: #{tpu_custom_call.1} parent=1 // pred_check_branch
      %48 = sbr.rel (0) target = $region37
    $region36: #{tpu_custom_call.1} parent=1 // pred_region
      _
    $region37: #{tpu_custom_call.1} parent=1 // pred_fallthru
      _
    // Predicated region
    $region38: #{tpu_custom_call.1} parent=1 // pred_check
      _
    $region39: #{tpu_custom_call.1} parent=1 // pred_check_branch
      %50 = sbr.rel (0) target = $region41
    $region40: #{tpu_custom_call.1} parent=1 // pred_region
      _
    $region41: #{tpu_custom_call.1} parent=1 // pred_fallthru
      _
    // Predicated region
    $region42: #{tpu_custom_call.1} parent=1 // pred_check
      _
    $region43: #{tpu_custom_call.1} parent=1 // pred_check_branch
      %52 = sbr.rel (0) target = $region45
    $region44: #{tpu_custom_call.1} parent=1 // pred_region
      _
    $region45: #{tpu_custom_call.1} parent=1 // pred_fallthru
      _
    // Predicated region
    $region46: #{tpu_custom_call.1} parent=1 // pred_check
      _
    $region47: #{tpu_custom_call.1} parent=1 // pred_check_branch
      %54 = sbr.rel (0) target = $region49
    $region48: #{tpu_custom_call.1} parent=1 // pred_region
      _
    $region49: #{tpu_custom_call.1} parent=1 // pred_fallthru
      _
    // Predicated region
    $region50: #{tpu_custom_call.1} parent=1 // pred_check
      _
    $region51: #{tpu_custom_call.1} parent=1 // pred_check_branch
      %56 = sbr.rel (0) target = $region53
    $region52: #{tpu_custom_call.1} parent=1 // pred_region
      _
    $region53: #{tpu_custom_call.1} parent=1 // pred_fallthru
      _
    // Predicated region
    $region54: #{tpu_custom_call.1} parent=1 // pred_check
      _
    $region55: #{tpu_custom_call.1} parent=1 // pred_check_branch
      %58 = sbr.rel (0) target = $region57
    $region56: #{tpu_custom_call.1} parent=1 // pred_region
      _
    $region57: #{tpu_custom_call.1} parent=1 // pred_fallthru
      _
    // Predicated region
    $region58: #{tpu_custom_call.1} parent=1 // pred_check
      _
    $region59: #{tpu_custom_call.1} parent=1 // pred_check_branch
      %60 = sbr.rel (0) target = $region61
    $region60: #{tpu_custom_call.1} parent=1 // pred_region
      _
    $region61: #{tpu_custom_call.1} parent=1 // pred_fallthru
      _
    // Predicated region
    $region62: #{tpu_custom_call.1} parent=1 // pred_check
      _
    $region63: #{tpu_custom_call.1} parent=1 // pred_check_branch
      %62 = sbr.rel (0) target = $region65
    $region64: #{tpu_custom_call.1} parent=1 // pred_region
      _
    $region65: #{tpu_custom_call.1} parent=1 // pred_fallthru
      _
    // Predicated region
    $region66: #{tpu_custom_call.1} parent=1 // pred_check
      _
    $region67: #{tpu_custom_call.1} parent=1 // pred_check_branch
      %64 = sbr.rel (0) target = $region69
    $region68: #{tpu_custom_call.1} parent=1 // pred_region
      _
    $region69: #{tpu_custom_call.1} parent=1 // pred_fallthru
      _
    // Predicated region
    $region70: #{tpu_custom_call.1} parent=1 // pred_check
      _
    $region71: #{tpu_custom_call.1} parent=1 // pred_check_branch
      %66 = sbr.rel (0) target = $region73
    $region72: #{tpu_custom_call.1} parent=1 // pred_region
      _
    $region73: #{tpu_custom_call.1} parent=1 // pred_fallthru
      _
    // Predicated region
    $region74: #{tpu_custom_call.1} parent=1 // pred_check
      _
    $region75: #{tpu_custom_call.1} parent=1 // pred_check_branch
      %68 = sbr.rel (0) target = $region77
    $region76: #{tpu_custom_call.1} parent=1 // pred_region
      _
    $region77: #{tpu_custom_call.1} parent=1 // pred_fallthru
      _
    // Predicated region
    $region78: #{tpu_custom_call.1} parent=1 // pred_check
      _
    $region79: #{tpu_custom_call.1} parent=1 // pred_check_branch
      %70 = sbr.rel (0) target = $region81
    $region80: #{tpu_custom_call.1} parent=1 // pred_region
      _
    $region81: #{tpu_custom_call.1} parent=1 // pred_fallthru
      _
    // Predicated region
    $region82: #{tpu_custom_call.1} parent=1 // pred_check
      _
    $region83: #{tpu_custom_call.1} parent=1 // pred_check_branch
      %72 = sbr.rel (0) target = $region85
    $region84: #{tpu_custom_call.1} parent=1 // pred_region
      _
    $region85: #{tpu_custom_call.1} parent=1 // pred_fallthru
      _
    // Predicated region
    $region86: #{tpu_custom_call.1} parent=1 // pred_check
      _
    $region87: #{tpu_custom_call.1} parent=1 // pred_check_branch
      %74 = sbr.rel (0) target = $region89
    $region88: #{tpu_custom_call.1} parent=1 // pred_region
      _
    $region89: #{tpu_custom_call.1} parent=1 // pred_fallthru
      _
    // Predicated region
    $region90: #{tpu_custom_call.1} parent=1 // pred_check
      _
    $region91: #{tpu_custom_call.1} parent=1 // pred_check_branch
      %76 = sbr.rel (0) target = $region93
    $region92: #{tpu_custom_call.1} parent=1 // pred_region
      _
    $region93: #{tpu_custom_call.1} parent=1 // pred_fallthru
      _
    %v78 = vld [vmem:[%s0] sm:$0xff]
    %v79 = vld [vmem:[%s8] sm:$0xf]
    %v80 = vpack.c.bf16 %v78, %v78
    %v81 = vpack.c.bf16 %v79, %v79
    %vm82 = vcmask 31744
    %v84 = vsel %vm82, %v80, 0
    %vm86 = vcmask 1041408
    %v88 = vsel %vm86, %v81, 0
    %90 = vmatprep.subr.bf16.mxu0 0
    %91 = vmatpush1.bf16.msra.mxu0 0
    %92 = vmatprep.subr.bf16.mxu0 0
    %93 = vmatpush1.bf16.msra.mxu0 0
    %94 = vmatprep.subr.bf16.mxu0 0
    %95 = vmatpush1.bf16.msra.mxu0 0
    %96 = vmatprep.subr.bf16.mxu0 0
    %97 = vmatpush1.bf16.msra.mxu0 0
    %98 = vmatprep.subr.bf16.mxu0 0
    %99 = vmatpush1.bf16.msra.mxu0 0
    %100 = vmatprep.subr.bf16.mxu0 0
    %101 = vmatpush1.bf16.msra.mxu0 0
    %102 = vmatprep.subr.bf16.mxu0 0
    %103 = vmatpush1.bf16.msra.mxu0 0
    %104 = vmatprep.subr.bf16.mxu0 0
    %105 = vmatpush1.bf16.msra.mxu0 %v88
    %106 = vmatprep.subr.bf16.mxu0 0
    %107 = vmatpush2.bf16.msra.mxu0 0
    %108 = vmatprep.subr.bf16.mxu0 0
    %109 = vmatpush2.bf16.msra.mxu0 0
    %110 = vmatprep.subr.bf16.mxu0 0
    %111 = vmatpush2.bf16.msra.mxu0 0
    %112 = vmatprep.subr.bf16.mxu0 0
    %113 = vmatpush2.bf16.msra.mxu0 0
    %114 = vmatprep.subr.bf16.mxu0 0
    %115 = vmatpush2.bf16.msra.mxu0 0
    %116 = vmatprep.subr.bf16.mxu0 0
    %117 = vmatpush2.bf16.msra.mxu0 0
    %118 = vmatprep.subr.bf16.mxu0 0
    %119 = vmatpush2.bf16.msra.mxu0 0
    %120 = vmatprep.subr.bf16.mxu0 0
    %121 = vmatpush2.bf16.msra.mxu0 0
    %122 = vmatprep.mubr.bf16.mxu0 0
    %123 = vmatmul.mubr.bf16.gmra.mxu0 %v84
    %v124 = vpop.f32.mrf.mxu0
    %v125 = vadd.f32 0.0, %v124
    %v126 = vpop.f32.mrf.mxu0
    %v127 = vpop.f32.mrf.mxu0
    %v128 = vpop.f32.mrf.mxu0
    %129 = vdwg.mxu0
    %v130 = vld [vmem:[%s1] sm:$0xff]
    %v131 = vld [vmem:[%s1 + $0x8] sm:$0xf]
    %v132 = vld [vmem:[%s9] sm:$0x3f]
    %v133 = vpack.c.bf16 %v131, %v130
    %v134 = vpack.c.bf16 %v132, %v132
    %vm135 = vcmask 48128
    %v137 = vsel %vm135, %v133, 0
    %vm139 = vcmask 1042432
    %v141 = vsel %vm139, %v134, 0
    %143 = vmatprep.subr.bf16.mxu0 0
    %144 = vmatpush1.bf16.msra.mxu0 0
    %145 = vmatprep.subr.bf16.mxu0 0
    %146 = vmatpush1.bf16.msra.mxu0 0
    %147 = vmatprep.subr.bf16.mxu0 0
    %148 = vmatpush1.bf16.msra.mxu0 0
    %149 = vmatprep.subr.bf16.mxu0 0
    %150 = vmatpush1.bf16.msra.mxu0 0
    %151 = vmatprep.subr.bf16.mxu0 0
    %152 = vmatpush1.bf16.msra.mxu0 0
    %153 = vmatprep.subr.bf16.mxu0 0
    %154 = vmatpush1.bf16.msra.mxu0 0
    %155 = vmatprep.subr.bf16.mxu0 0
    %156 = vmatpush1.bf16.msra.mxu0 0
    %157 = vmatprep.subr.bf16.mxu0 0
    %158 = vmatpush1.bf16.msra.mxu0 %v141
    %159 = vmatprep.subr.bf16.mxu0 0
    %160 = vmatpush2.bf16.msra.mxu0 0
    %161 = vmatprep.subr.bf16.mxu0 0
    %162 = vmatpush2.bf16.msra.mxu0 0
    %163 = vmatprep.subr.bf16.mxu0 0
    %164 = vmatpush2.bf16.msra.mxu0 0
    %165 = vmatprep.subr.bf16.mxu0 0
    %166 = vmatpush2.bf16.msra.mxu0 0
    %167 = vmatprep.subr.bf16.mxu0 0
    %168 = vmatpush2.bf16.msra.mxu0 0
    %169 = vmatprep.subr.bf16.mxu0 0
    %170 = vmatpush2.bf16.msra.mxu0 0
    %171 = vmatprep.subr.bf16.mxu0 0
    %172 = vmatpush2.bf16.msra.mxu0 0
    %173 = vmatprep.subr.bf16.mxu0 0
    %174 = vmatpush2.bf16.msra.mxu0 0
    %175 = vmatprep.mubr.bf16.mxu0 0
    %176 = vmatmul.mubr.bf16.gmra.mxu0 %v137
    %v177 = vpop.f32.mrf.mxu0
    %v178 = vadd.f32 0.0, %v177
    %v179 = vpop.f32.mrf.mxu0
    %v180 = vpop.f32.mrf.mxu0
    %v181 = vadd.f32 0.0, %v180
    %v182 = vpop.f32.mrf.mxu0
    %183 = vdwg.mxu0
    %v184 = vld [vmem:[%s2] sm:$0xff]
    %v185 = vld [vmem:[%s2 + $0x8] sm:$0xff]
    %v186 = vld [vmem:[%s2 + $0x10] sm:$0xff]
    %v187 = vld [vmem:[%s2 + $0x18] sm:$0xff]
    %v188 = vld [vmem:[%s2 + $0x20] sm:$0xff]
    %v189 = vld [vmem:[%s2 + $0x28] sm:$0xff]
    %v190 = vld [vmem:[%s2 + $0x30] sm:$0xff]
    %v191 = vld [vmem:[%s2 + $0x38] sm:$0xff]
    %v192 = vld [vmem:[%s2 + $0x40] sm:$0xff]
    %v193 = vld [vmem:[%s2 + $0x48] sm:$0xff]
    %v194 = vld [vmem:[%s2 + $0x50] sm:$0xff]
    %v195 = vld [vmem:[%s2 + $0x58] sm:$0xff]
    %v196 = vld [vmem:[%s10] sm:$0x7f]
    %v197 = vpack.c.bf16 %v185, %v184
    %v198 = vpack.c.bf16 %v187, %v186
    %v199 = vpack.c.bf16 %v189, %v188
    %v200 = vpack.c.bf16 %v191, %v190
    %v201 = vpack.c.bf16 %v193, %v192
    %v202 = vpack.c.bf16 %v195, %v194
    %v203 = vpack.c.bf16 %v196, %v196
    %vm204 = vcmask 56320
    %v206 = vsel %vm204, %v197, 0
    %v209 = vsel %vm204, %v198, 0
    %v212 = vsel %vm204, %v199, 0
    %v215 = vsel %vm204, %v200, 0
    %v218 = vsel %vm204, %v201, 0
    %v221 = vsel %vm204, %v202, 0
    %vm223 = vcmask 1043456
    %v224 = vsel %vm139, 4294967295, 65535
    %v225 = vsel %vm223, %v224, 0
    %v227 = vand.u32 %v203, %v225
    %229 = vmatprep.subr.bf16.mxu0 0
    %230 = vmatpush1.bf16.msra.mxu0 0
    %231 = vmatprep.subr.bf16.mxu0 0
    %232 = vmatpush1.bf16.msra.mxu0 0
    %233 = vmatprep.subr.bf16.mxu0 0
    %234 = vmatpush1.bf16.msra.mxu0 0
    %235 = vmatprep.subr.bf16.mxu0 0
    %236 = vmatpush1.bf16.msra.mxu0 0
    %237 = vmatprep.subr.bf16.mxu0 0
    %238 = vmatpush1.bf16.msra.mxu0 0
    %239 = vmatprep.subr.bf16.mxu0 0
    %240 = vmatpush1.bf16.msra.mxu0 0
    %241 = vmatprep.subr.bf16.mxu0 0
    %242 = vmatpush1.bf16.msra.mxu0 0
    %243 = vmatprep.subr.bf16.mxu0 0
    %244 = vmatpush1.bf16.msra.mxu0 %v227
    %245 = vmatprep.subr.bf16.mxu0 0
    %246 = vmatpush2.bf16.msra.mxu0 0
    %247 = vmatprep.subr.bf16.mxu0 0
    %248 = vmatpush2.bf16.msra.mxu0 0
    %249 = vmatprep.subr.bf16.mxu0 0
    %250 = vmatpush2.bf16.msra.mxu0 0
    %251 = vmatprep.subr.bf16.mxu0 0
    %252 = vmatpush2.bf16.msra.mxu0 0
    %253 = vmatprep.subr.bf16.mxu0 0
    %254 = vmatpush2.bf16.msra.mxu0 0
    %255 = vmatprep.subr.bf16.mxu0 0
    %256 = vmatpush2.bf16.msra.mxu0 0
    %257 = vmatprep.subr.bf16.mxu0 0
    %258 = vmatpush2.bf16.msra.mxu0 0
    %259 = vmatprep.subr.bf16.mxu0 0
    %260 = vmatpush2.bf16.msra.mxu0 0
    %261 = vmatprep.mubr.bf16.mxu0 0
    %262 = vmatmul.mubr.bf16.gmra.mxu0 %v206
    %v263 = vpop.f32.mrf.mxu0
    %v264 = vadd.f32 0.0, %v263
    %v265 = vpop.f32.mrf.mxu0
    %v266 = vpop.f32.mrf.mxu0
    %v267 = vadd.f32 0.0, %v266
    %v268 = vpop.f32.mrf.mxu0
    %269 = vmatprep.mubr.bf16.mxu0 0
    %270 = vmatmul.mubr.bf16.gmra.mxu0 %v209
    %v271 = vpop.f32.mrf.mxu0
    %v272 = vadd.f32 0.0, %v271
    %v273 = vpop.f32.mrf.mxu0
    %v274 = vpop.f32.mrf.mxu0
    %v275 = vadd.f32 0.0, %v274
    %v276 = vpop.f32.mrf.mxu0
    %277 = vmatprep.mubr.bf16.mxu0 0
    %278 = vmatmul.mubr.bf16.gmra.mxu0 %v212
    %v279 = vpop.f32.mrf.mxu0
    %v280 = vadd.f32 0.0, %v279
    %v281 = vpop.f32.mrf.mxu0
    %v282 = vpop.f32.mrf.mxu0
    %v283 = vadd.f32 0.0, %v282
    %v284 = vpop.f32.mrf.mxu0
    %285 = vmatprep.mubr.bf16.mxu0 0
    %286 = vmatmul.mubr.bf16.gmra.mxu0 %v215
    %v287 = vpop.f32.mrf.mxu0
    %v288 = vadd.f32 0.0, %v287
    %v289 = vpop.f32.mrf.mxu0
    %v290 = vpop.f32.mrf.mxu0
    %v291 = vadd.f32 0.0, %v290
    %v292 = vpop.f32.mrf.mxu0
    %293 = vmatprep.mubr.bf16.mxu0 0
    %294 = vmatmul.mubr.bf16.gmra.mxu0 %v218
    %v295 = vpop.f32.mrf.mxu0
    %v296 = vadd.f32 0.0, %v295
    %v297 = vpop.f32.mrf.mxu0
    %v298 = vpop.f32.mrf.mxu0
    %v299 = vadd.f32 0.0, %v298
    %v300 = vpop.f32.mrf.mxu0
    %301 = vmatprep.mubr.bf16.mxu0 0
    %302 = vmatmul.mubr.bf16.gmra.mxu0 %v221
    %v303 = vpop.f32.mrf.mxu0
    %v304 = vadd.f32 0.0, %v303
    %v305 = vpop.f32.mrf.mxu0
    %v306 = vpop.f32.mrf.mxu0
    %v307 = vadd.f32 0.0, %v306
    %v308 = vpop.f32.mrf.mxu0
    %309 = vdwg.mxu0
    %v310 = vld [vmem:[%s4] sm:$0xff]
    %v311 = vld [vmem:[%s4 + $0x8] sm:$0xff]
    %v312 = vld [vmem:[%s4 + $0x10] sm:$0xff]
    %v313 = vld [vmem:[%s4 + $0x18] sm:$0xff]
    %v314 = vld [vmem:[%s4 + $0x20] sm:$0xff]
    %v315 = vld [vmem:[%s4 + $0x28] sm:$0xff]
    %v316 = vld [vmem:[%s4 + $0x30] sm:$0xff]
    %v317 = vld [vmem:[%s4 + $0x38] sm:$0xff]
    %v318 = vld [vmem:[%s4 + $0x40] sm:$0xff]
    %v319 = vld [vmem:[%s4 + $0x48] sm:$0xff]
    %v320 = vld [vmem:[%s4 + $0x50] sm:$0xff]
    %v321 = vld [vmem:[%s4 + $0x58] sm:$0xff]
    %v322 = vld [vmem:[%s5] sm:$0xff]
    %v323 = vld [vmem:[%s5 + $0x8] sm:$0xff]
    %v324 = vld [vmem:[%s5 + $0x10] sm:$0xff]
    %v325 = vld [vmem:[%s5 + $0x18] sm:$0xff]
    %v326 = vld [vmem:[%s5 + $0x20] sm:$0xff]
    %v327 = vld [vmem:[%s5 + $0x28] sm:$0xff]
    %v328 = vld [vmem:[%s5 + $0x30] sm:$0xff]
    %v329 = vld [vmem:[%s5 + $0x38] sm:$0xff]
    %v330 = vld [vmem:[%s5 + $0x40] sm:$0xff]
    %v331 = vld [vmem:[%s5 + $0x48] sm:$0xff]
    %v332 = vld [vmem:[%s5 + $0x50] sm:$0xff]
    %v333 = vld [vmem:[%s5 + $0x58] sm:$0xff]
    %v334 = vld [vmem:[%s6] sm:$0xff]
    %v335 = vld [vmem:[%s7] sm:$0xff]
    %v336 = vld [vmem:[%s7 + $0x8] sm:$0xf]
    %v337 = vld [vmem:[%s11] sm:$0xff]
    %v338 = vld [vmem:[%s11 + $0x8] sm:$0xff]
    %v339 = vld [vmem:[%s11 + $0x10] sm:$0xff]
    %v340 = vld [vmem:[%s11 + $0x18] sm:$0xff]
    %v341 = vpack.c.bf16 %v125, %v125
    %v342 = vpack.c.bf16 %v338, %v337
    %v343 = vpack.c.bf16 %v340, %v339
    %v344 = vld [vmem:[%s12] sm:$0x1]
    %v346 = vlaneseq
    %v347 = vshrl.u32 %v346, 7
    %v348 = vsub.s32 0, %v347
    %v349 = vrot.slane %v344, %v348
    %vm351 = vcmask 261120
    %v353 = vsel %vm351, %v341, 0
    %355 = vmatprep.subr.bf16.mxu0 0
    %356 = vmatpush1.bf16.msra.mxu0 0
    %357 = vmatprep.subr.bf16.mxu0 0
    %358 = vmatpush1.bf16.msra.mxu0 0
    %359 = vmatprep.subr.bf16.mxu0 0
    %360 = vmatpush1.bf16.msra.mxu0 0
    %361 = vmatprep.subr.bf16.mxu0 0
    %362 = vmatpush1.bf16.msra.mxu0 0
    %363 = vmatprep.subr.bf16.mxu0 0
    %364 = vmatpush1.bf16.msra.mxu0 0
    %365 = vmatprep.subr.bf16.mxu0 0
    %366 = vmatpush1.bf16.msra.mxu0 0
    %367 = vmatprep.subr.bf16.mxu0 0
    %368 = vmatpush1.bf16.msra.mxu0 %v343
    %369 = vmatprep.subr.bf16.mxu0 0
    %370 = vmatpush1.bf16.msra.mxu0 %v342
    %371 = vmatprep.subr.bf16.mxu0 0
    %372 = vmatpush2.bf16.msra.mxu0 0
    %373 = vmatprep.subr.bf16.mxu0 0
    %374 = vmatpush2.bf16.msra.mxu0 0
    %375 = vmatprep.subr.bf16.mxu0 0
    %376 = vmatpush2.bf16.msra.mxu0 0
    %377 = vmatprep.subr.bf16.mxu0 0
    %378 = vmatpush2.bf16.msra.mxu0 0
    %379 = vmatprep.subr.bf16.mxu0 0
    %380 = vmatpush2.bf16.msra.mxu0 0
    %381 = vmatprep.subr.bf16.mxu0 0
    %382 = vmatpush2.bf16.msra.mxu0 0
    %383 = vmatprep.subr.bf16.mxu0 0
    %384 = vmatpush2.bf16.msra.mxu0 0
    %385 = vmatprep.subr.bf16.mxu0 0
    %386 = vmatpush2.bf16.msra.mxu0 0
    %387 = vmatprep.mubr.bf16.mxu0 0
    %388 = vmatmul.mubr.bf16.gmra.mxu0 %v353
    %v389 = vpop.f32.mrf.mxu0
    %v390 = vadd.f32 %v349, %v389
    %v391 = vpop.f32.mrf.mxu0
    %v392 = vpop.f32.mrf.mxu0
    %v393 = vpop.f32.mrf.mxu0
    %394 = vdwg.mxu0
    %v395 = vld [vmem:[%s13] sm:$0xff]
    %v396 = vld [vmem:[%s13 + $0x8] sm:$0xff]
    %v397 = vld [vmem:[%s13 + $0x10] sm:$0xff]
    %v398 = vld [vmem:[%s13 + $0x18] sm:$0xff]
    %v399 = vpack.c.bf16 %v181, %v178
    %v400 = vpack.c.bf16 %v396, %v395
    %v401 = vpack.c.bf16 %v398, %v397
    %v402 = vld [vmem:[%s14] sm:$0x1]
    %v404 = vlaneseq
    %v405 = vshrl.u32 %v404, 7
    %v406 = vsub.s32 0, %v405
    %v407 = vrot.slane %v402, %v406
    %v410 = vsel %vm351, %v399, 0
    %412 = vmatprep.subr.bf16.mxu0 0
    %413 = vmatpush1.bf16.msra.mxu0 0
    %414 = vmatprep.subr.bf16.mxu0 0
    %415 = vmatpush1.bf16.msra.mxu0 0
    %416 = vmatprep.subr.bf16.mxu0 0
    %417 = vmatpush1.bf16.msra.mxu0 0
    %418 = vmatprep.subr.bf16.mxu0 0
    %419 = vmatpush1.bf16.msra.mxu0 0
    %420 = vmatprep.subr.bf16.mxu0 0
    %421 = vmatpush1.bf16.msra.mxu0 0
    %422 = vmatprep.subr.bf16.mxu0 0
    %423 = vmatpush1.bf16.msra.mxu0 0
    %424 = vmatprep.subr.bf16.mxu0 0
    %425 = vmatpush1.bf16.msra.mxu0 %v401
    %426 = vmatprep.subr.bf16.mxu0 0
    %427 = vmatpush1.bf16.msra.mxu0 %v400
    %428 = vmatprep.subr.bf16.mxu0 0
    %429 = vmatpush2.bf16.msra.mxu0 0
    %430 = vmatprep.subr.bf16.mxu0 0
    %431 = vmatpush2.bf16.msra.mxu0 0
    %432 = vmatprep.subr.bf16.mxu0 0
    %433 = vmatpush2.bf16.msra.mxu0 0
    %434 = vmatprep.subr.bf16.mxu0 0
    %435 = vmatpush2.bf16.msra.mxu0 0
    %436 = vmatprep.subr.bf16.mxu0 0
    %437 = vmatpush2.bf16.msra.mxu0 0
    %438 = vmatprep.subr.bf16.mxu0 0
    %439 = vmatpush2.bf16.msra.mxu0 0
    %440 = vmatprep.subr.bf16.mxu0 0
    %441 = vmatpush2.bf16.msra.mxu0 0
    %442 = vmatprep.subr.bf16.mxu0 0
    %443 = vmatpush2.bf16.msra.mxu0 0
    %444 = vmatprep.mubr.bf16.mxu0 0
    %445 = vmatmul.mubr.bf16.gmra.mxu0 %v410
    %v446 = vpop.f32.mrf.mxu0
    %v447 = vadd.f32 %v407, %v446
    %v448 = vpop.f32.mrf.mxu0
    %v449 = vpop.f32.mrf.mxu0
    %v450 = vadd.f32 %v407, %v449
    %v451 = vpop.f32.mrf.mxu0
    %452 = vdwg.mxu0
    %v453 = vpack.c.bf16 %v311, %v310
    %v454 = vpack.c.bf16 %v313, %v312
    %v455 = vpack.c.bf16 %v315, %v314
    %v456 = vpack.c.bf16 %v317, %v316
    %v457 = vpack.c.bf16 %v319, %v318
    %v458 = vpack.c.bf16 %v321, %v320
    %v459 = vpack.c.bf16 %v390, %v390
    %vm460 = vcmask 64512
    %v462 = vsel %vm460, %v453, 0
    %v465 = vsel %vm460, %v454, 0
    %v468 = vsel %vm460, %v455, 0
    %v471 = vsel %vm460, %v456, 0
    %v474 = vsel %vm460, %v457, 0
    %v477 = vsel %vm460, %v458, 0
    %v480 = vsel %vm223, %v459, 0
    %482 = vmatprep.subr.bf16.mxu0 0
    %483 = vmatpush1.bf16.msra.mxu0 0
    %484 = vmatprep.subr.bf16.mxu0 0
    %485 = vmatpush1.bf16.msra.mxu0 0
    %486 = vmatprep.subr.bf16.mxu0 0
    %487 = vmatpush1.bf16.msra.mxu0 0
    %488 = vmatprep.subr.bf16.mxu0 0
    %489 = vmatpush1.bf16.msra.mxu0 0
    %490 = vmatprep.subr.bf16.mxu0 0
    %491 = vmatpush1.bf16.msra.mxu0 0
    %492 = vmatprep.subr.bf16.mxu0 0
    %493 = vmatpush1.bf16.msra.mxu0 0
    %494 = vmatprep.subr.bf16.mxu0 0
    %495 = vmatpush1.bf16.msra.mxu0 0
    %496 = vmatprep.subr.bf16.mxu0 0
    %497 = vmatpush1.bf16.msra.mxu0 %v480
    %498 = vmatprep.subr.bf16.mxu0 0
    %499 = vmatpush2.bf16.msra.mxu0 0
    %500 = vmatprep.subr.bf16.mxu0 0
    %501 = vmatpush2.bf16.msra.mxu0 0
    %502 = vmatprep.subr.bf16.mxu0 0
    %503 = vmatpush2.bf16.msra.mxu0 0
    %504 = vmatprep.subr.bf16.mxu0 0
    %505 = vmatpush2.bf16.msra.mxu0 0
    %506 = vmatprep.subr.bf16.mxu0 0
    %507 = vmatpush2.bf16.msra.mxu0 0
    %508 = vmatprep.subr.bf16.mxu0 0
    %509 = vmatpush2.bf16.msra.mxu0 0
    %510 = vmatprep.subr.bf16.mxu0 0
    %511 = vmatpush2.bf16.msra.mxu0 0
    %512 = vmatprep.subr.bf16.mxu0 0
    %513 = vmatpush2.bf16.msra.mxu0 0
    %514 = vmatprep.mubr.bf16.mxu0 0
    %515 = vmatmul.mubr.bf16.gmra.mxu0 %v462
    %v516 = vpop.f32.mrf.mxu0
    %v517 = vadd.f32 0.0, %v516
    %v518 = vpop.f32.mrf.mxu0
    %v519 = vpop.f32.mrf.mxu0
    %v520 = vadd.f32 0.0, %v519
    %v521 = vpop.f32.mrf.mxu0
    %522 = vmatprep.mubr.bf16.mxu0 0
    %523 = vmatmul.mubr.bf16.gmra.mxu0 %v465
    %v524 = vpop.f32.mrf.mxu0
    %v525 = vadd.f32 0.0, %v524
    %v526 = vpop.f32.mrf.mxu0
    %v527 = vpop.f32.mrf.mxu0
    %v528 = vadd.f32 0.0, %v527
    %v529 = vpop.f32.mrf.mxu0
    %530 = vmatprep.mubr.bf16.mxu0 0
    %531 = vmatmul.mubr.bf16.gmra.mxu0 %v468
    %v532 = vpop.f32.mrf.mxu0
    %v533 = vadd.f32 0.0, %v532
    %v534 = vpop.f32.mrf.mxu0
    %v535 = vpop.f32.mrf.mxu0
    %v536 = vadd.f32 0.0, %v535
    %v537 = vpop.f32.mrf.mxu0
    %538 = vmatprep.mubr.bf16.mxu0 0
    %539 = vmatmul.mubr.bf16.gmra.mxu0 %v471
    %v540 = vpop.f32.mrf.mxu0
    %v541 = vadd.f32 0.0, %v540
    %v542 = vpop.f32.mrf.mxu0
    %v543 = vpop.f32.mrf.mxu0
    %v544 = vadd.f32 0.0, %v543
    %v545 = vpop.f32.mrf.mxu0
    %546 = vmatprep.mubr.bf16.mxu0 0
    %547 = vmatmul.mubr.bf16.gmra.mxu0 %v474
    %v548 = vpop.f32.mrf.mxu0
    %v549 = vadd.f32 0.0, %v548
    %v550 = vpop.f32.mrf.mxu0
    %v551 = vpop.f32.mrf.mxu0
    %v552 = vadd.f32 0.0, %v551
    %v553 = vpop.f32.mrf.mxu0
    %554 = vmatprep.mubr.bf16.mxu0 0
    %555 = vmatmul.mubr.bf16.gmra.mxu0 %v477
    %v556 = vpop.f32.mrf.mxu0
    %v557 = vadd.f32 0.0, %v556
    %v558 = vpop.f32.mrf.mxu0
    %v559 = vpop.f32.mrf.mxu0
    %v560 = vadd.f32 0.0, %v559
    %v561 = vpop.f32.mrf.mxu0
    %562 = vdwg.mxu0
    %v563 = vpack.c.bf16 %v323, %v322
    %v564 = vpack.c.bf16 %v325, %v324
    %v565 = vpack.c.bf16 %v327, %v326
    %v566 = vpack.c.bf16 %v329, %v328
    %v567 = vpack.c.bf16 %v331, %v330
    %v568 = vpack.c.bf16 %v333, %v332
    %v569 = vpack.c.bf16 %v450, %v447
    %vm570 = vcmask 97280
    %v572 = vsel %vm570, %v563, 0
    %v575 = vsel %vm570, %v564, 0
    %v578 = vsel %vm570, %v565, 0
    %v581 = vsel %vm570, %v566, 0
    %v584 = vsel %vm570, %v567, 0
    %v587 = vsel %vm570, %v568, 0
    %vm589 = vcmask 1045504
    %v591 = vsel %vm589, %v569, 0
    %593 = vmatprep.subr.bf16.mxu0 0
    %594 = vmatpush1.bf16.msra.mxu0 0
    %595 = vmatprep.subr.bf16.mxu0 0
    %596 = vmatpush1.bf16.msra.mxu0 0
    %597 = vmatprep.subr.bf16.mxu0 0
    %598 = vmatpush1.bf16.msra.mxu0 0
    %599 = vmatprep.subr.bf16.mxu0 0
    %600 = vmatpush1.bf16.msra.mxu0 0
    %601 = vmatprep.subr.bf16.mxu0 0
    %602 = vmatpush1.bf16.msra.mxu0 0
    %603 = vmatprep.subr.bf16.mxu0 0
    %604 = vmatpush1.bf16.msra.mxu0 0
    %605 = vmatprep.subr.bf16.mxu0 0
    %606 = vmatpush1.bf16.msra.mxu0 0
    %607 = vmatprep.subr.bf16.mxu0 0
    %608 = vmatpush1.bf16.msra.mxu0 %v591
    %609 = vmatprep.subr.bf16.mxu0 0
    %610 = vmatpush2.bf16.msra.mxu0 0
    %611 = vmatprep.subr.bf16.mxu0 0
    %612 = vmatpush2.bf16.msra.mxu0 0
    %613 = vmatprep.subr.bf16.mxu0 0
    %614 = vmatpush2.bf16.msra.mxu0 0
    %615 = vmatprep.subr.bf16.mxu0 0
    %616 = vmatpush2.bf16.msra.mxu0 0
    %617 = vmatprep.subr.bf16.mxu0 0
    %618 = vmatpush2.bf16.msra.mxu0 0
    %619 = vmatprep.subr.bf16.mxu0 0
    %620 = vmatpush2.bf16.msra.mxu0 0
    %621 = vmatprep.subr.bf16.mxu0 0
    %622 = vmatpush2.bf16.msra.mxu0 0
    %623 = vmatprep.subr.bf16.mxu0 0
    %624 = vmatpush2.bf16.msra.mxu0 0
    %625 = vmatprep.mubr.bf16.mxu0 0
    %626 = vmatmul.mubr.bf16.gmra.mxu0 %v572
    %v627 = vpop.f32.mrf.mxu0
    %v628 = vadd.f32 0.0, %v627
    %v629 = vpop.f32.mrf.mxu0
    %v630 = vpop.f32.mrf.mxu0
    %v631 = vadd.f32 0.0, %v630
    %v632 = vpop.f32.mrf.mxu0
    %633 = vmatprep.mubr.bf16.mxu0 0
    %634 = vmatmul.mubr.bf16.gmra.mxu0 %v575
    %v635 = vpop.f32.mrf.mxu0
    %v636 = vadd.f32 0.0, %v635
    %v637 = vpop.f32.mrf.mxu0
    %v638 = vpop.f32.mrf.mxu0
    %v639 = vadd.f32 0.0, %v638
    %v640 = vpop.f32.mrf.mxu0
    %641 = vmatprep.mubr.bf16.mxu0 0
    %642 = vmatmul.mubr.bf16.gmra.mxu0 %v578
    %v643 = vpop.f32.mrf.mxu0
    %v644 = vadd.f32 0.0, %v643
    %v645 = vpop.f32.mrf.mxu0
    %v646 = vpop.f32.mrf.mxu0
    %v647 = vadd.f32 0.0, %v646
    %v648 = vpop.f32.mrf.mxu0
    %649 = vmatprep.mubr.bf16.mxu0 0
    %650 = vmatmul.mubr.bf16.gmra.mxu0 %v581
    %v651 = vpop.f32.mrf.mxu0
    %v652 = vadd.f32 0.0, %v651
    %v653 = vpop.f32.mrf.mxu0
    %v654 = vpop.f32.mrf.mxu0
    %v655 = vadd.f32 0.0, %v654
    %v656 = vpop.f32.mrf.mxu0
    %657 = vmatprep.mubr.bf16.mxu0 0
    %658 = vmatmul.mubr.bf16.gmra.mxu0 %v584
    %v659 = vpop.f32.mrf.mxu0
    %v660 = vadd.f32 0.0, %v659
    %v661 = vpop.f32.mrf.mxu0
    %v662 = vpop.f32.mrf.mxu0
    %v663 = vadd.f32 0.0, %v662
    %v664 = vpop.f32.mrf.mxu0
    %665 = vmatprep.mubr.bf16.mxu0 0
    %666 = vmatmul.mubr.bf16.gmra.mxu0 %v587
    %v667 = vpop.f32.mrf.mxu0
    %v668 = vadd.f32 0.0, %v667
    %v669 = vpop.f32.mrf.mxu0
    %v670 = vpop.f32.mrf.mxu0
    %v671 = vadd.f32 0.0, %v670
    %v672 = vpop.f32.mrf.mxu0
    %673 = vdwg.mxu0
    %v674 = vld [vmem:[%s15] sm:$0xff]
    %v675 = vld [vmem:[%s15 + $0x8] sm:$0xff]
    %v676 = vld [vmem:[%s15 + $0x10] sm:$0xff]
    %v677 = vld [vmem:[%s15 + $0x18] sm:$0xff]
    %v678 = vpack.c.bf16 %v267, %v264
    %v679 = vpack.c.bf16 %v275, %v272
    %v680 = vpack.c.bf16 %v283, %v280
    %v681 = vpack.c.bf16 %v291, %v288
    %v682 = vpack.c.bf16 %v299, %v296
    %v683 = vpack.c.bf16 %v307, %v304
    %v684 = vpack.c.bf16 %v675, %v674
    %v685 = vpack.c.bf16 %v677, %v676
    %v686 = vld [vmem:[%s16] sm:$0x1]
    %v688 = vlaneseq
    %v689 = vshrl.u32 %v688, 7
    %v690 = vsub.s32 0, %v689
    %v691 = vrot.slane %v686, %v690
    %v694 = vsel %vm351, %v678, 0
    %v697 = vsel %vm351, %v679, 0
    %v700 = vsel %vm351, %v680, 0
    %v703 = vsel %vm351, %v681, 0
    %v706 = vsel %vm351, %v682, 0
    %v709 = vsel %vm351, %v683, 0
    %711 = vmatprep.subr.bf16.mxu0 0
    %712 = vmatpush1.bf16.msra.mxu0 0
    %713 = vmatprep.subr.bf16.mxu0 0
    %714 = vmatpush1.bf16.msra.mxu0 0
    %715 = vmatprep.subr.bf16.mxu0 0
    %716 = vmatpush1.bf16.msra.mxu0 0
    %717 = vmatprep.subr.bf16.mxu0 0
    %718 = vmatpush1.bf16.msra.mxu0 0
    %719 = vmatprep.subr.bf16.mxu0 0
    %720 = vmatpush1.bf16.msra.mxu0 0
    %721 = vmatprep.subr.bf16.mxu0 0
    %722 = vmatpush1.bf16.msra.mxu0 0
    %723 = vmatprep.subr.bf16.mxu0 0
    %724 = vmatpush1.bf16.msra.mxu0 %v685
    %725 = vmatprep.subr.bf16.mxu0 0
    %726 = vmatpush1.bf16.msra.mxu0 %v684
    %727 = vmatprep.subr.bf16.mxu0 0
    %728 = vmatpush2.bf16.msra.mxu0 0
    %729 = vmatprep.subr.bf16.mxu0 0
    %730 = vmatpush2.bf16.msra.mxu0 0
    %731 = vmatprep.subr.bf16.mxu0 0
    %732 = vmatpush2.bf16.msra.mxu0 0
    %733 = vmatprep.subr.bf16.mxu0 0
    %734 = vmatpush2.bf16.msra.mxu0 0
    %735 = vmatprep.subr.bf16.mxu0 0
    %736 = vmatpush2.bf16.msra.mxu0 0
    %737 = vmatprep.subr.bf16.mxu0 0
    %738 = vmatpush2.bf16.msra.mxu0 0
    %739 = vmatprep.subr.bf16.mxu0 0
    %740 = vmatpush2.bf16.msra.mxu0 0
    %741 = vmatprep.subr.bf16.mxu0 0
    %742 = vmatpush2.bf16.msra.mxu0 0
    %743 = vmatprep.mubr.bf16.mxu0 0
    %744 = vmatmul.mubr.bf16.gmra.mxu0 %v694
    %v745 = vpop.f32.mrf.mxu0
    %v746 = vadd.f32 %v691, %v745
    %v747 = vpop.f32.mrf.mxu0
    %v748 = vpop.f32.mrf.mxu0
    %v749 = vadd.f32 %v691, %v748
    %v750 = vpop.f32.mrf.mxu0
    %751 = vmatprep.mubr.bf16.mxu0 0
    %752 = vmatmul.mubr.bf16.gmra.mxu0 %v697
    %v753 = vpop.f32.mrf.mxu0
    %v754 = vadd.f32 %v691, %v753
    %v755 = vpop.f32.mrf.mxu0
    %v756 = vpop.f32.mrf.mxu0
    %v757 = vadd.f32 %v691, %v756
    %v758 = vpop.f32.mrf.mxu0
    %759 = vmatprep.mubr.bf16.mxu0 0
    %760 = vmatmul.mubr.bf16.gmra.mxu0 %v700
    %v761 = vpop.f32.mrf.mxu0
    %v762 = vadd.f32 %v691, %v761
    %v763 = vpop.f32.mrf.mxu0
    %v764 = vpop.f32.mrf.mxu0
    %v765 = vadd.f32 %v691, %v764
    %v766 = vpop.f32.mrf.mxu0
    %767 = vmatprep.mubr.bf16.mxu0 0
    %768 = vmatmul.mubr.bf16.gmra.mxu0 %v703
    %v769 = vpop.f32.mrf.mxu0
    %v770 = vadd.f32 %v691, %v769
    %v771 = vpop.f32.mrf.mxu0
    %v772 = vpop.f32.mrf.mxu0
    %v773 = vadd.f32 %v691, %v772
    %v774 = vpop.f32.mrf.mxu0
    %775 = vmatprep.mubr.bf16.mxu0 0
    %776 = vmatmul.mubr.bf16.gmra.mxu0 %v706
    %v777 = vpop.f32.mrf.mxu0
    %v778 = vadd.f32 %v691, %v777
    %v779 = vpop.f32.mrf.mxu0
    %v780 = vpop.f32.mrf.mxu0
    %v781 = vadd.f32 %v691, %v780
    %v782 = vpop.f32.mrf.mxu0
    %783 = vmatprep.mubr.bf16.mxu0 0
    %784 = vmatmul.mubr.bf16.gmra.mxu0 %v709
    %v785 = vpop.f32.mrf.mxu0
    %v786 = vadd.f32 %v691, %v785
    %v787 = vpop.f32.mrf.mxu0
    %v788 = vpop.f32.mrf.mxu0
    %v789 = vadd.f32 %v691, %v788
    %v790 = vpop.f32.mrf.mxu0
    %791 = vdwg.mxu0
    %v792 = vadd.f32 %v746, %v517
    %v793 = vadd.f32 %v749, %v520
    %v794 = vadd.f32 %v754, %v525
    %v795 = vadd.f32 %v757, %v528
    %v796 = vadd.f32 %v762, %v533
    %v797 = vadd.f32 %v765, %v536
    %v798 = vadd.f32 %v770, %v541
    %v799 = vadd.f32 %v773, %v544
    %v800 = vadd.f32 %v778, %v549
    %v801 = vadd.f32 %v781, %v552
    %v802 = vadd.f32 %v786, %v557
    %v803 = vadd.f32 %v789, %v560
    %v804 = vadd.f32 %v792, %v628
    %v805 = vadd.f32 %v793, %v631
    %v806 = vadd.f32 %v794, %v636
    %v807 = vadd.f32 %v795, %v639
    %v808 = vadd.f32 %v796, %v644
    %v809 = vadd.f32 %v797, %v647
    %v810 = vadd.f32 %v798, %v652
    %v811 = vadd.f32 %v799, %v655
    %v812 = vadd.f32 %v800, %v660
    %v813 = vadd.f32 %v801, %v663
    %v814 = vadd.f32 %v802, %v668
    %v815 = vadd.f32 %v803, %v671
    %v816 = vxor.u32 %v804, 2147483648
    %v817 = vxor.u32 %v805, 2147483648
    %v818 = vxor.u32 %v806, 2147483648
    %v819 = vxor.u32 %v807, 2147483648
    %v820 = vxor.u32 %v808, 2147483648
    %v821 = vxor.u32 %v809, 2147483648
    %v822 = vxor.u32 %v810, 2147483648
    %v823 = vxor.u32 %v811, 2147483648
    %v824 = vxor.u32 %v812, 2147483648
    %v825 = vxor.u32 %v813, 2147483648
    %v826 = vxor.u32 %v814, 2147483648
    %v827 = vxor.u32 %v815, 2147483648
    %v828 = vmul.f32 %v816, 1.442695
    %v829 = vpow.pop %v828
    %v830 = vmul.f32 %v817, 1.442695
    %v831 = vpow.pop %v830
    %v832 = vmul.f32 %v818, 1.442695
    %v833 = vpow.pop %v832
    %v834 = vmul.f32 %v819, 1.442695
    %v835 = vpow.pop %v834
    %v836 = vmul.f32 %v820, 1.442695
    %v837 = vpow.pop %v836
    %v838 = vmul.f32 %v821, 1.442695
    %v839 = vpow.pop %v838
    %v840 = vmul.f32 %v822, 1.442695
    %v841 = vpow.pop %v840
    %v842 = vmul.f32 %v823, 1.442695
    %v843 = vpow.pop %v842
    %v844 = vmul.f32 %v824, 1.442695
    %v845 = vpow.pop %v844
    %v846 = vmul.f32 %v825, 1.442695
    %v847 = vpow.pop %v846
    %v848 = vmul.f32 %v826, 1.442695
    %v849 = vpow.pop %v848
    %v850 = vmul.f32 %v827, 1.442695
    %v851 = vpow.pop %v850
    %v852 = vadd.f32 %v829, 1.0
    %v853 = vadd.f32 %v831, 1.0
    %v854 = vadd.f32 %v833, 1.0
    %v855 = vadd.f32 %v835, 1.0
    %v856 = vadd.f32 %v837, 1.0
    %v857 = vadd.f32 %v839, 1.0
    %v858 = vadd.f32 %v841, 1.0
    %v859 = vadd.f32 %v843, 1.0
    %v860 = vadd.f32 %v845, 1.0
    %v861 = vadd.f32 %v847, 1.0
    %v862 = vadd.f32 %v849, 1.0
    %v863 = vadd.f32 %v851, 1.0
    %v864 = vrcp.pop %v852
    %v865 = vmul.f32 1.0, %v864
    %v866 = vrcp.pop %v853
    %v867 = vmul.f32 1.0, %v866
    %v868 = vrcp.pop %v854
    %v869 = vmul.f32 1.0, %v868
    %v870 = vrcp.pop %v855
    %v871 = vmul.f32 1.0, %v870
    %v872 = vrcp.pop %v856
    %v873 = vmul.f32 1.0, %v872
    %v874 = vrcp.pop %v857
    %v875 = vmul.f32 1.0, %v874
    %v876 = vrcp.pop %v858
    %v877 = vmul.f32 1.0, %v876
    %v878 = vrcp.pop %v859
    %v879 = vmul.f32 1.0, %v878
    %v880 = vrcp.pop %v860
    %v881 = vmul.f32 1.0, %v880
    %v882 = vrcp.pop %v861
    %v883 = vmul.f32 1.0, %v882
    %v884 = vrcp.pop %v862
    %v885 = vmul.f32 1.0, %v884
    %v886 = vrcp.pop %v863
    %v887 = vmul.f32 1.0, %v886
    %900 = vrot.lane.b32.xlu0 %v628, 96
    %v901 = vpop.permute.xlu0 %900
    %902 = vrot.lane.b32.xlu0 %v631, 96
    %v903 = vpop.permute.xlu0 %902
    %904 = vrot.lane.b32.xlu0 %v636, 96
    %v905 = vpop.permute.xlu0 %904
    %906 = vrot.lane.b32.xlu0 %v639, 96
    %v907 = vpop.permute.xlu0 %906
    %908 = vrot.lane.b32.xlu0 %v644, 96
    %v909 = vpop.permute.xlu0 %908
    %910 = vrot.lane.b32.xlu0 %v647, 96
    %v911 = vpop.permute.xlu0 %910
    %912 = vrot.lane.b32.xlu0 %v652, 96
    %v913 = vpop.permute.xlu0 %912
    %914 = vrot.lane.b32.xlu0 %v655, 96
    %v915 = vpop.permute.xlu0 %914
    %916 = vrot.lane.b32.xlu0 %v660, 96
    %v917 = vpop.permute.xlu0 %916
    %918 = vrot.lane.b32.xlu0 %v663, 96
    %v919 = vpop.permute.xlu0 %918
    %920 = vrot.lane.b32.xlu0 %v668, 96
    %v921 = vpop.permute.xlu0 %920
    %922 = vrot.lane.b32.xlu0 %v671, 96
    %v923 = vpop.permute.xlu0 %922
    %v936 = vmul.f32 %v865, %v901
    %v937 = vmul.f32 %v867, %v903
    %v938 = vmul.f32 %v869, %v905
    %v939 = vmul.f32 %v871, %v907
    %v940 = vmul.f32 %v873, %v909
    %v941 = vmul.f32 %v875, %v911
    %v942 = vmul.f32 %v877, %v913
    %v943 = vmul.f32 %v879, %v915
    %v944 = vmul.f32 %v881, %v917
    %v945 = vmul.f32 %v883, %v919
    %v946 = vmul.f32 %v885, %v921
    %v947 = vmul.f32 %v887, %v923
    %v948 = vpack.c.bf16 %v334, %v334
    %v949 = vpack.c.bf16 %v937, %v936
    %v950 = vpack.c.bf16 %v939, %v938
    %v951 = vpack.c.bf16 %v941, %v940
    %v952 = vpack.c.bf16 %v943, %v942
    %v953 = vpack.c.bf16 %v945, %v944
    %v954 = vpack.c.bf16 %v947, %v946
    %vm955 = vcmask 785408
    %v957 = vsel %vm955, %v948, 0
    %959 = vmatprep.subr.bf16.mxu0 0
    %960 = vmatpush1.bf16.msra.mxu0 0
    %961 = vmatprep.subr.bf16.mxu0 0
    %962 = vmatpush1.bf16.msra.mxu0 0
    %963 = vmatprep.subr.bf16.mxu0 0
    %964 = vmatpush1.bf16.msra.mxu0 %v954
    %965 = vmatprep.subr.bf16.mxu0 0
    %966 = vmatpush1.bf16.msra.mxu0 %v953
    %967 = vmatprep.subr.bf16.mxu0 0
    %968 = vmatpush1.bf16.msra.mxu0 %v952
    %969 = vmatprep.subr.bf16.mxu0 0
    %970 = vmatpush1.bf16.msra.mxu0 %v951
    %971 = vmatprep.subr.bf16.mxu0 0
    %972 = vmatpush1.bf16.msra.mxu0 %v950
    %973 = vmatprep.subr.bf16.mxu0 0
    %974 = vmatpush1.bf16.msra.mxu0 %v949
    %975 = vmatprep.subr.bf16.mxu0 0
    %976 = vmatpush2.bf16.msra.mxu0 0
    %977 = vmatprep.subr.bf16.mxu0 0
    %978 = vmatpush2.bf16.msra.mxu0 0
    %979 = vmatprep.subr.bf16.mxu0 0
    %980 = vmatpush2.bf16.msra.mxu0 0
    %981 = vmatprep.subr.bf16.mxu0 0
    %982 = vmatpush2.bf16.msra.mxu0 0
    %983 = vmatprep.subr.bf16.mxu0 0
    %984 = vmatpush2.bf16.msra.mxu0 0
    %985 = vmatprep.subr.bf16.mxu0 0
    %986 = vmatpush2.bf16.msra.mxu0 0
    %987 = vmatprep.subr.bf16.mxu0 0
    %988 = vmatpush2.bf16.msra.mxu0 0
    %989 = vmatprep.subr.bf16.mxu0 0
    %990 = vmatpush2.bf16.msra.mxu0 0
    %991 = vmatprep.mubr.bf16.mxu0 0
    %992 = vmatmul.mubr.bf16.gmra.mxu0 %v957
    %v993 = vpop.f32.mrf.mxu0
    %v994 = vadd.f32 0.0, %v993
    %v995 = vpop.f32.mrf.mxu0
    %v996 = vpop.f32.mrf.mxu0
    %v997 = vpop.f32.mrf.mxu0
    %998 = vdwg.mxu0
    %1011 = vrot.lane.b32.xlu0 %v517, 96
    %v1012 = vpop.permute.xlu0 %1011
    %1013 = vrot.lane.b32.xlu0 %v520, 96
    %v1014 = vpop.permute.xlu0 %1013
    %1015 = vrot.lane.b32.xlu0 %v525, 96
    %v1016 = vpop.permute.xlu0 %1015
    %1017 = vrot.lane.b32.xlu0 %v528, 96
    %v1018 = vpop.permute.xlu0 %1017
    %1019 = vrot.lane.b32.xlu0 %v533, 96
    %v1020 = vpop.permute.xlu0 %1019
    %1021 = vrot.lane.b32.xlu0 %v536, 96
    %v1022 = vpop.permute.xlu0 %1021
    %1023 = vrot.lane.b32.xlu0 %v541, 96
    %v1024 = vpop.permute.xlu0 %1023
    %1025 = vrot.lane.b32.xlu0 %v544, 96
    %v1026 = vpop.permute.xlu0 %1025
    %1027 = vrot.lane.b32.xlu0 %v549, 96
    %v1028 = vpop.permute.xlu0 %1027
    %1029 = vrot.lane.b32.xlu0 %v552, 96
    %v1030 = vpop.permute.xlu0 %1029
    %1031 = vrot.lane.b32.xlu0 %v557, 96
    %v1032 = vpop.permute.xlu0 %1031
    %1033 = vrot.lane.b32.xlu0 %v560, 96
    %v1034 = vpop.permute.xlu0 %1033
    %v1047 = vmul.f32 %v865, %v1012
    %v1048 = vmul.f32 %v867, %v1014
    %v1049 = vmul.f32 %v869, %v1016
    %v1050 = vmul.f32 %v871, %v1018
    %v1051 = vmul.f32 %v873, %v1020
    %v1052 = vmul.f32 %v875, %v1022
    %v1053 = vmul.f32 %v877, %v1024
    %v1054 = vmul.f32 %v879, %v1026
    %v1055 = vmul.f32 %v881, %v1028
    %v1056 = vmul.f32 %v883, %v1030
    %v1057 = vmul.f32 %v885, %v1032
    %v1058 = vmul.f32 %v887, %v1034
    %v1059 = vpack.c.bf16 %v336, %v335
    %v1060 = vpack.c.bf16 %v1048, %v1047
    %v1061 = vpack.c.bf16 %v1050, %v1049
    %v1062 = vpack.c.bf16 %v1052, %v1051
    %v1063 = vpack.c.bf16 %v1054, %v1053
    %v1064 = vpack.c.bf16 %v1056, %v1055
    %v1065 = vpack.c.bf16 %v1058, %v1057
    %v1067 = vsel %vm955, %v1059, 0
    %1069 = vmatprep.subr.bf16.mxu0 0
    %1070 = vmatpush1.bf16.msra.mxu0 0
    %1071 = vmatprep.subr.bf16.mxu0 0
    %1072 = vmatpush1.bf16.msra.mxu0 0
    %1073 = vmatprep.subr.bf16.mxu0 0
    %1074 = vmatpush1.bf16.msra.mxu0 %v1065
    %1075 = vmatprep.subr.bf16.mxu0 0
    %1076 = vmatpush1.bf16.msra.mxu0 %v1064
    %1077 = vmatprep.subr.bf16.mxu0 0
    %1078 = vmatpush1.bf16.msra.mxu0 %v1063
    %1079 = vmatprep.subr.bf16.mxu0 0
    %1080 = vmatpush1.bf16.msra.mxu0 %v1062
    %1081 = vmatprep.subr.bf16.mxu0 0
    %1082 = vmatpush1.bf16.msra.mxu0 %v1061
    %1083 = vmatprep.subr.bf16.mxu0 0
    %1084 = vmatpush1.bf16.msra.mxu0 %v1060
    %1085 = vmatprep.subr.bf16.mxu0 0
    %1086 = vmatpush2.bf16.msra.mxu0 0
    %1087 = vmatprep.subr.bf16.mxu0 0
    %1088 = vmatpush2.bf16.msra.mxu0 0
    %1089 = vmatprep.subr.bf16.mxu0 0
    %1090 = vmatpush2.bf16.msra.mxu0 0
    %1091 = vmatprep.subr.bf16.mxu0 0
    %1092 = vmatpush2.bf16.msra.mxu0 0
    %1093 = vmatprep.subr.bf16.mxu0 0
    %1094 = vmatpush2.bf16.msra.mxu0 0
    %1095 = vmatprep.subr.bf16.mxu0 0
    %1096 = vmatpush2.bf16.msra.mxu0 0
    %1097 = vmatprep.subr.bf16.mxu0 0
    %1098 = vmatpush2.bf16.msra.mxu0 0
    %1099 = vmatprep.subr.bf16.mxu0 0
    %1100 = vmatpush2.bf16.msra.mxu0 0
    %1101 = vmatprep.mubr.bf16.mxu0 0
    %1102 = vmatmul.mubr.bf16.gmra.mxu0 %v1067
    %v1103 = vpop.f32.mrf.mxu0
    %v1104 = vadd.f32 0.0, %v1103
    %v1105 = vpop.f32.mrf.mxu0
    %v1106 = vpop.f32.mrf.mxu0
    %v1107 = vadd.f32 0.0, %v1106
    %v1108 = vpop.f32.mrf.mxu0
    %1109 = vdwg.mxu0
    %v1110 = vpack.c.bf16 %v867, %v865
    %v1111 = vpack.c.bf16 %v871, %v869
    %v1112 = vpack.c.bf16 %v875, %v873
    %v1113 = vpack.c.bf16 %v879, %v877
    %v1114 = vpack.c.bf16 %v883, %v881
    %v1115 = vpack.c.bf16 %v887, %v885
    %1116 = vmatprep.subr.bf16.mxu0 0
    %1117 = vmatpush1.bf16.msra.mxu0 0
    %1118 = vmatprep.subr.bf16.mxu0 0
    %1119 = vmatpush1.bf16.msra.mxu0 0
    %1120 = vmatprep.subr.bf16.mxu0 0
    %1121 = vmatpush1.bf16.msra.mxu0 %v1115
    %1122 = vmatprep.subr.bf16.mxu0 0
    %1123 = vmatpush1.bf16.msra.mxu0 %v1114
    %1124 = vmatprep.subr.bf16.mxu0 0
    %1125 = vmatpush1.bf16.msra.mxu0 %v1113
    %1126 = vmatprep.subr.bf16.mxu0 0
    %1127 = vmatpush1.bf16.msra.mxu0 %v1112
    %1128 = vmatprep.subr.bf16.mxu0 0
    %1129 = vmatpush1.bf16.msra.mxu0 %v1111
    %1130 = vmatprep.subr.bf16.mxu0 0
    %1131 = vmatpush1.bf16.msra.mxu0 %v1110
    %1132 = vmatprep.subr.bf16.mxu0 0
    %1133 = vmatpush2.bf16.msra.mxu0 0
    %1134 = vmatprep.subr.bf16.mxu0 0
    %1135 = vmatpush2.bf16.msra.mxu0 0
    %1136 = vmatprep.subr.bf16.mxu0 0
    %1137 = vmatpush2.bf16.msra.mxu0 0
    %1138 = vmatprep.subr.bf16.mxu0 0
    %1139 = vmatpush2.bf16.msra.mxu0 0
    %1140 = vmatprep.subr.bf16.mxu0 0
    %1141 = vmatpush2.bf16.msra.mxu0 0
    %1142 = vmatprep.subr.bf16.mxu0 0
    %1143 = vmatpush2.bf16.msra.mxu0 0
    %1144 = vmatprep.subr.bf16.mxu0 0
    %1145 = vmatpush2.bf16.msra.mxu0 0
    %1146 = vmatprep.subr.bf16.mxu0 0
    %1147 = vmatpush2.bf16.msra.mxu0 0
    %1148 = vmatprep.mubr.bf16.mxu0 0
    %1149 = vmatmul.mubr.bf16.gmra.mxu0 %v957
    %v1150 = vpop.f32.mrf.mxu0
    %v1151 = vadd.f32 1e-20, %v1150
    %v1152 = vpop.f32.mrf.mxu0
    %v1153 = vpop.f32.mrf.mxu0
    %v1154 = vpop.f32.mrf.mxu0
    %1155 = vdwg.mxu0
    %v1156 = vrcp.pop %v1151
    %v1157 = vmul.f32 %v994, %v1156
    %1158 = vmatprep.subr.bf16.mxu0 0
    %1159 = vmatpush1.bf16.msra.mxu0 0
    %1160 = vmatprep.subr.bf16.mxu0 0
    %1161 = vmatpush1.bf16.msra.mxu0 0
    %1162 = vmatprep.subr.bf16.mxu0 0
    %1163 = vmatpush1.bf16.msra.mxu0 %v1115
    %1164 = vmatprep.subr.bf16.mxu0 0
    %1165 = vmatpush1.bf16.msra.mxu0 %v1114
    %1166 = vmatprep.subr.bf16.mxu0 0
    %1167 = vmatpush1.bf16.msra.mxu0 %v1113
    %1168 = vmatprep.subr.bf16.mxu0 0
    %1169 = vmatpush1.bf16.msra.mxu0 %v1112
    %1170 = vmatprep.subr.bf16.mxu0 0
    %1171 = vmatpush1.bf16.msra.mxu0 %v1111
    %1172 = vmatprep.subr.bf16.mxu0 0
    %1173 = vmatpush1.bf16.msra.mxu0 %v1110
    %1174 = vmatprep.subr.bf16.mxu0 0
    %1175 = vmatpush2.bf16.msra.mxu0 0
    %1176 = vmatprep.subr.bf16.mxu0 0
    %1177 = vmatpush2.bf16.msra.mxu0 0
    %1178 = vmatprep.subr.bf16.mxu0 0
    %1179 = vmatpush2.bf16.msra.mxu0 0
    %1180 = vmatprep.subr.bf16.mxu0 0
    %1181 = vmatpush2.bf16.msra.mxu0 0
    %1182 = vmatprep.subr.bf16.mxu0 0
    %1183 = vmatpush2.bf16.msra.mxu0 0
    %1184 = vmatprep.subr.bf16.mxu0 0
    %1185 = vmatpush2.bf16.msra.mxu0 0
    %1186 = vmatprep.subr.bf16.mxu0 0
    %1187 = vmatpush2.bf16.msra.mxu0 0
    %1188 = vmatprep.subr.bf16.mxu0 0
    %1189 = vmatpush2.bf16.msra.mxu0 0
    %1190 = vmatprep.mubr.bf16.mxu0 0
    %1191 = vmatmul.mubr.bf16.gmra.mxu0 %v1067
    %v1192 = vpop.f32.mrf.mxu0
    %v1193 = vadd.f32 1e-20, %v1192
    %v1194 = vpop.f32.mrf.mxu0
    %v1195 = vpop.f32.mrf.mxu0
    %v1196 = vadd.f32 1e-20, %v1195
    %v1197 = vpop.f32.mrf.mxu0
    %1198 = vdwg.mxu0
    %v1199 = vrcp.pop %v1193
    %v1200 = vrcp.pop %v1196
    %v1201 = vmul.f32 %v1104, %v1199
    %v1202 = vmul.f32 %v1107, %v1200
    %1204 = vrot.lane.b32.xlu0 %v1157, 64
    %v1205 = vpop.permute.xlu0 %1204
    %v1207 = vadd.f32 %v390, %v1205
    %1210 = vrot.lane.b32.xlu0 %v1201, 64
    %v1211 = vpop.permute.xlu0 %1210
    %1212 = vrot.lane.b32.xlu0 %v1202, 64
    %v1213 = vpop.permute.xlu0 %1212
    %v1216 = vadd.f32 %v447, %v1211
    %v1217 = vadd.f32 %v450, %v1213
    %v1218 = vld [vmem:[%s17] sm:$0x1]
    %v1219 = vld [vmem:[%s18] sm:$0x1]
    %v1220 = vsel %vm351, %v804, 0.0
    %v1221 = vsel %vm351, %v805, 0.0
    %v1222 = vadd.f32 %v1220, %v1221
    %v1223 = vsel %vm351, %v806, 0.0
    %v1224 = vadd.f32 %v1222, %v1223
    %v1225 = vsel %vm351, %v807, 0.0
    %v1226 = vadd.f32 %v1224, %v1225
    %v1227 = vsel %vm351, %v808, 0.0
    %v1228 = vadd.f32 %v1226, %v1227
    %v1229 = vsel %vm351, %v809, 0.0
    %v1230 = vadd.f32 %v1228, %v1229
    %v1231 = vsel %vm351, %v810, 0.0
    %v1232 = vadd.f32 %v1230, %v1231
    %v1233 = vsel %vm351, %v811, 0.0
    %v1234 = vadd.f32 %v1232, %v1233
    %v1235 = vsel %vm351, %v812, 0.0
    %v1236 = vadd.f32 %v1234, %v1235
    %v1237 = vsel %vm351, %v813, 0.0
    %v1238 = vadd.f32 %v1236, %v1237
    %v1239 = vsel %vm351, %v814, 0.0
    %v1240 = vadd.f32 %v1238, %v1239
    %v1241 = vsel %vm351, %v815, 0.0
    %v1242 = vadd.f32 %v1240, %v1241
    %v1243 = vrot.slane %v1242, 4
    %v1244 = vadd.f32 %v1242, %v1243
    %v1245 = vrot.slane %v1244, 2
    %v1246 = vadd.f32 %v1244, %v1245
    %v1247 = vrot.slane %v1246, 1
    %v1248 = vadd.f32 %v1246, %v1247
    %v1249 = vrcp.pop 96.0
    %v1250 = vmul.f32 %v1248, %v1249
    %v1251 = vsub.f32 %v804, %v1250
    %v1252 = vsub.f32 %v805, %v1250
    %v1253 = vsub.f32 %v806, %v1250
    %v1254 = vsub.f32 %v807, %v1250
    %v1255 = vsub.f32 %v808, %v1250
    %v1256 = vsub.f32 %v809, %v1250
    %v1257 = vsub.f32 %v810, %v1250
    %v1258 = vsub.f32 %v811, %v1250
    %v1259 = vsub.f32 %v812, %v1250
    %v1260 = vsub.f32 %v813, %v1250
    %v1261 = vsub.f32 %v814, %v1250
    %v1262 = vsub.f32 %v815, %v1250
    %v1263 = vmul.f32 %v1251, %v1251
    %v1264 = vmul.f32 %v1252, %v1252
    %v1265 = vmul.f32 %v1253, %v1253
    %v1266 = vmul.f32 %v1254, %v1254
    %v1267 = vmul.f32 %v1255, %v1255
    %v1268 = vmul.f32 %v1256, %v1256
    %v1269 = vmul.f32 %v1257, %v1257
    %v1270 = vmul.f32 %v1258, %v1258
    %v1271 = vmul.f32 %v1259, %v1259
    %v1272 = vmul.f32 %v1260, %v1260
    %v1273 = vmul.f32 %v1261, %v1261
    %v1274 = vmul.f32 %v1262, %v1262
    %v1275 = vsel %vm351, %v1263, 0.0
    %v1276 = vsel %vm351, %v1264, 0.0
    %v1277 = vadd.f32 %v1275, %v1276
    %v1278 = vsel %vm351, %v1265, 0.0
    %v1279 = vadd.f32 %v1277, %v1278
    %v1280 = vsel %vm351, %v1266, 0.0
    %v1281 = vadd.f32 %v1279, %v1280
    %v1282 = vsel %vm351, %v1267, 0.0
    %v1283 = vadd.f32 %v1281, %v1282
    %v1284 = vsel %vm351, %v1268, 0.0
    %v1285 = vadd.f32 %v1283, %v1284
    %v1286 = vsel %vm351, %v1269, 0.0
    %v1287 = vadd.f32 %v1285, %v1286
    %v1288 = vsel %vm351, %v1270, 0.0
    %v1289 = vadd.f32 %v1287, %v1288
    %v1290 = vsel %vm351, %v1271, 0.0
    %v1291 = vadd.f32 %v1289, %v1290
    %v1292 = vsel %vm351, %v1272, 0.0
    %v1293 = vadd.f32 %v1291, %v1292
    %v1294 = vsel %vm351, %v1273, 0.0
    %v1295 = vadd.f32 %v1293, %v1294
    %v1296 = vsel %vm351, %v1274, 0.0
    %v1297 = vadd.f32 %v1295, %v1296
    %v1298 = vrot.slane %v1297, 4
    %v1299 = vadd.f32 %v1297, %v1298
    %v1300 = vrot.slane %v1299, 2
    %v1301 = vadd.f32 %v1299, %v1300
    %v1302 = vrot.slane %v1301, 1
    %v1303 = vadd.f32 %v1301, %v1302
    %v1304 = vmul.f32 %v1303, %v1249
    %v1306 = vlaneseq
    %v1307 = vshrl.u32 %v1306, 7
    %v1308 = vsub.s32 0, %v1307
    %v1309 = vrot.slane %v1218, %v1308
    %v1311 = vmul.f32 %v1309, %v1251
    %v1312 = vmul.f32 %v1309, %v1252
    %v1313 = vmul.f32 %v1309, %v1253
    %v1314 = vmul.f32 %v1309, %v1254
    %v1315 = vmul.f32 %v1309, %v1255
    %v1316 = vmul.f32 %v1309, %v1256
    %v1317 = vmul.f32 %v1309, %v1257
    %v1318 = vmul.f32 %v1309, %v1258
    %v1319 = vmul.f32 %v1309, %v1259
    %v1320 = vmul.f32 %v1309, %v1260
    %v1321 = vmul.f32 %v1309, %v1261
    %v1322 = vmul.f32 %v1309, %v1262
    %v1323 = vadd.f32 %v1304, 1e-05
    %v1324 = vrsqrt.pop %v1323
    %v1325 = vmul.f32 %v1311, %v1324
    %v1326 = vmul.f32 %v1312, %v1324
    %v1327 = vmul.f32 %v1313, %v1324
    %v1328 = vmul.f32 %v1314, %v1324
    %v1329 = vmul.f32 %v1315, %v1324
    %v1330 = vmul.f32 %v1316, %v1324
    %v1331 = vmul.f32 %v1317, %v1324
    %v1332 = vmul.f32 %v1318, %v1324
    %v1333 = vmul.f32 %v1319, %v1324
    %v1334 = vmul.f32 %v1320, %v1324
    %v1335 = vmul.f32 %v1321, %v1324
    %v1336 = vmul.f32 %v1322, %v1324
    %v1338 = vlaneseq
    %v1339 = vshrl.u32 %v1338, 7
    %v1340 = vsub.s32 0, %v1339
    %v1341 = vrot.slane %v1219, %v1340
    %v1343 = vadd.f32 %v1325, %v1341
    %v1344 = vadd.f32 %v1326, %v1341
    %v1345 = vadd.f32 %v1327, %v1341
    %v1346 = vadd.f32 %v1328, %v1341
    %v1347 = vadd.f32 %v1329, %v1341
    %v1348 = vadd.f32 %v1330, %v1341
    %v1349 = vadd.f32 %v1331, %v1341
    %v1350 = vadd.f32 %v1332, %v1341
    %v1351 = vadd.f32 %v1333, %v1341
    %v1352 = vadd.f32 %v1334, %v1341
    %v1353 = vadd.f32 %v1335, %v1341
    %v1354 = vadd.f32 %v1336, %v1341
    %v1355 = vmax.f32 %v1343, 0.0
    %v1356 = vmax.f32 %v1344, 0.0
    %v1357 = vmax.f32 %v1345, 0.0
    %v1358 = vmax.f32 %v1346, 0.0
    %v1359 = vmax.f32 %v1347, 0.0
    %v1360 = vmax.f32 %v1348, 0.0
    %v1361 = vmax.f32 %v1349, 0.0
    %v1362 = vmax.f32 %v1350, 0.0
    %v1363 = vmax.f32 %v1351, 0.0
    %v1364 = vmax.f32 %v1352, 0.0
    %v1365 = vmax.f32 %v1353, 0.0
    %v1366 = vmax.f32 %v1354, 0.0
    %v1367 = vadd.f32 %v264, %v1355
    %v1368 = vadd.f32 %v267, %v1356
    %v1369 = vadd.f32 %v272, %v1357
    %v1370 = vadd.f32 %v275, %v1358
    %v1371 = vadd.f32 %v280, %v1359
    %v1372 = vadd.f32 %v283, %v1360
    %v1373 = vadd.f32 %v288, %v1361
    %v1374 = vadd.f32 %v291, %v1362
    %v1375 = vadd.f32 %v296, %v1363
    %v1376 = vadd.f32 %v299, %v1364
    %v1377 = vadd.f32 %v304, %v1365
    %v1378 = vadd.f32 %v307, %v1366
    %s1379 = scalar_lea.vmem %s17, 1
    %v1380 = vld [vmem:[%s1379] sm:$0x1]
    %s1381 = scalar_lea.vmem %s18, 1
    %v1382 = vld [vmem:[%s1381] sm:$0x1]
    %vm1383 = vcmask 785920
    %v1384 = vsel %vm1383, %v1207, 0.0
    %v1385 = vrot.slane %v1384, 4
    %v1386 = vadd.f32 %v1384, %v1385
    %v1387 = vrot.slane %v1386, 2
    %v1388 = vadd.f32 %v1386, %v1387
    %v1389 = vrot.slane %v1388, 1
    %v1390 = vadd.f32 %v1388, %v1389
    %v1391 = vrcp.pop 8.0
    %v1392 = vmul.f32 %v1390, %v1391
    %v1393 = vsub.f32 %v1207, %v1392
    %v1394 = vmul.f32 %v1393, %v1393
    %v1395 = vsel %vm1383, %v1394, 0.0
    %v1396 = vrot.slane %v1395, 4
    %v1397 = vadd.f32 %v1395, %v1396
    %v1398 = vrot.slane %v1397, 2
    %v1399 = vadd.f32 %v1397, %v1398
    %v1400 = vrot.slane %v1399, 1
    %v1401 = vadd.f32 %v1399, %v1400
    %v1402 = vmul.f32 %v1401, %v1391
    %v1404 = vlaneseq
    %v1405 = vshrl.u32 %v1404, 7
    %v1406 = vsub.s32 0, %v1405
    %v1407 = vrot.slane %v1380, %v1406
    %1410 = vrot.lane.b32.xlu0 %v1393, 64
    %v1411 = vpop.permute.xlu0 %1410
    %v1413 = vmul.f32 %v1407, %v1411
    %v1414 = vadd.f32 %v1402, 1e-05
    %v1415 = vrsqrt.pop %v1414
    %1417 = vrot.lane.b32.xlu0 %v1415, 64
    %v1418 = vpop.permute.xlu0 %1417
    %v1420 = vmul.f32 %v1413, %v1418
    %v1422 = vlaneseq
    %v1423 = vshrl.u32 %v1422, 7
    %v1424 = vsub.s32 0, %v1423
    %v1425 = vrot.slane %v1382, %v1424
    %v1427 = vadd.f32 %v1420, %v1425
    %v1428 = vmax.f32 %v1427, 0.0
    %v1429 = vadd.f32 %v125, %v1428
    %s1430 = scalar_lea.vmem %s17, 2
    %v1431 = vld [vmem:[%s1430] sm:$0x1]
    %s1432 = scalar_lea.vmem %s18, 2
    %v1433 = vld [vmem:[%s1432] sm:$0x1]
    %v1434 = vsel %vm1383, %v1216, 0.0
    %vm1435 = vcmask 781824
    %v1436 = vsel %vm1435, %v1217, 0.0
    %v1437 = vadd.f32 %v1434, %v1436
    %v1438 = vrot.slane %v1437, 4
    %v1439 = vadd.f32 %v1437, %v1438
    %v1440 = vrot.slane %v1439, 2
    %v1441 = vadd.f32 %v1439, %v1440
    %v1442 = vrot.slane %v1441, 1
    %v1443 = vadd.f32 %v1441, %v1442
    %v1444 = vrcp.pop 12.0
    %v1445 = vmul.f32 %v1443, %v1444
    %v1446 = vsub.f32 %v1216, %v1445
    %v1447 = vsub.f32 %v1217, %v1445
    %v1448 = vmul.f32 %v1446, %v1446
    %v1449 = vmul.f32 %v1447, %v1447
    %v1450 = vsel %vm1383, %v1448, 0.0
    %v1451 = vsel %vm1435, %v1449, 0.0
    %v1452 = vadd.f32 %v1450, %v1451
    %v1453 = vrot.slane %v1452, 4
    %v1454 = vadd.f32 %v1452, %v1453
    %v1455 = vrot.slane %v1454, 2
    %v1456 = vadd.f32 %v1454, %v1455
    %v1457 = vrot.slane %v1456, 1
    %v1458 = vadd.f32 %v1456, %v1457
    %v1459 = vmul.f32 %v1458, %v1444
    %v1461 = vlaneseq
    %v1462 = vshrl.u32 %v1461, 7
    %v1463 = vsub.s32 0, %v1462
    %v1464 = vrot.slane %v1431, %v1463
    %1468 = vrot.lane.b32.xlu0 %v1446, 64
    %v1469 = vpop.permute.xlu0 %1468
    %1470 = vrot.lane.b32.xlu0 %v1447, 64
    %v1471 = vpop.permute.xlu0 %1470
    %v1474 = vmul.f32 %v1464, %v1469
    %v1475 = vmul.f32 %v1464, %v1471
    %v1476 = vadd.f32 %v1459, 1e-05
    %v1477 = vrsqrt.pop %v1476
    %1479 = vrot.lane.b32.xlu0 %v1477, 64
    %v1480 = vpop.permute.xlu0 %1479
    %v1482 = vmul.f32 %v1474, %v1480
    %v1483 = vmul.f32 %v1475, %v1480
    %v1485 = vlaneseq
    %v1486 = vshrl.u32 %v1485, 7
    %v1487 = vsub.s32 0, %v1486
    %v1488 = vrot.slane %v1433, %v1487
    %v1490 = vadd.f32 %v1482, %v1488
    %v1491 = vadd.f32 %v1483, %v1488
    %v1492 = vmax.f32 %v1490, 0.0
    %v1493 = vmax.f32 %v1491, 0.0
    %v1494 = vadd.f32 %v178, %v1492
    %v1495 = vadd.f32 %v181, %v1493
    %s1496 = scalar_lea.vmem %s11, 32
    %v1497 = vld [vmem:[%s1496] sm:$0xff]
    %v1498 = vld [vmem:[%s1496 + $0x8] sm:$0xff]
    %v1499 = vld [vmem:[%s1496 + $0x10] sm:$0xff]
    %v1500 = vld [vmem:[%s1496 + $0x18] sm:$0xff]
    %v1501 = vpack.c.bf16 %v1429, %v1429
    %v1502 = vpack.c.bf16 %v1498, %v1497
    %v1503 = vpack.c.bf16 %v1500, %v1499
    %s1504 = scalar_lea.vmem %s12, 1
    %v1505 = vld [vmem:[%s1504] sm:$0x1]
    %v1507 = vlaneseq
    %v1508 = vshrl.u32 %v1507, 7
    %v1509 = vsub.s32 0, %v1508
    %v1510 = vrot.slane %v1505, %v1509
    %v1513 = vsel %vm351, %v1501, 0
    %1515 = vmatprep.subr.bf16.mxu0 0
    %1516 = vmatpush1.bf16.msra.mxu0 0
    %1517 = vmatprep.subr.bf16.mxu0 0
    %1518 = vmatpush1.bf16.msra.mxu0 0
    %1519 = vmatprep.subr.bf16.mxu0 0
    %1520 = vmatpush1.bf16.msra.mxu0 0
    %1521 = vmatprep.subr.bf16.mxu0 0
    %1522 = vmatpush1.bf16.msra.mxu0 0
    %1523 = vmatprep.subr.bf16.mxu0 0
    %1524 = vmatpush1.bf16.msra.mxu0 0
    %1525 = vmatprep.subr.bf16.mxu0 0
    %1526 = vmatpush1.bf16.msra.mxu0 0
    %1527 = vmatprep.subr.bf16.mxu0 0
    %1528 = vmatpush1.bf16.msra.mxu0 %v1503
    %1529 = vmatprep.subr.bf16.mxu0 0
    %1530 = vmatpush1.bf16.msra.mxu0 %v1502
    %1531 = vmatprep.subr.bf16.mxu0 0
    %1532 = vmatpush2.bf16.msra.mxu0 0
    %1533 = vmatprep.subr.bf16.mxu0 0
    %1534 = vmatpush2.bf16.msra.mxu0 0
    %1535 = vmatprep.subr.bf16.mxu0 0
    %1536 = vmatpush2.bf16.msra.mxu0 0
    %1537 = vmatprep.subr.bf16.mxu0 0
    %1538 = vmatpush2.bf16.msra.mxu0 0
    %1539 = vmatprep.subr.bf16.mxu0 0
    %1540 = vmatpush2.bf16.msra.mxu0 0
    %1541 = vmatprep.subr.bf16.mxu0 0
    %1542 = vmatpush2.bf16.msra.mxu0 0
    %1543 = vmatprep.subr.bf16.mxu0 0
    %1544 = vmatpush2.bf16.msra.mxu0 0
    %1545 = vmatprep.subr.bf16.mxu0 0
    %1546 = vmatpush2.bf16.msra.mxu0 0
    %1547 = vmatprep.mubr.bf16.mxu0 0
    %1548 = vmatmul.mubr.bf16.gmra.mxu0 %v1513
    %v1549 = vpop.f32.mrf.mxu0
    %v1550 = vadd.f32 %v1510, %v1549
    %v1551 = vpop.f32.mrf.mxu0
    %v1552 = vpop.f32.mrf.mxu0
    %v1553 = vpop.f32.mrf.mxu0
    %1554 = vdwg.mxu0
    %s1555 = scalar_lea.vmem %s13, 32
    %v1556 = vld [vmem:[%s1555] sm:$0xff]
    %v1557 = vld [vmem:[%s1555 + $0x8] sm:$0xff]
    %v1558 = vld [vmem:[%s1555 + $0x10] sm:$0xff]
    %v1559 = vld [vmem:[%s1555 + $0x18] sm:$0xff]
    %v1560 = vpack.c.bf16 %v1495, %v1494
    %v1561 = vpack.c.bf16 %v1557, %v1556
    %v1562 = vpack.c.bf16 %v1559, %v1558
    %s1563 = scalar_lea.vmem %s14, 1
    %v1564 = vld [vmem:[%s1563] sm:$0x1]
    %v1566 = vlaneseq
    %v1567 = vshrl.u32 %v1566, 7
    %v1568 = vsub.s32 0, %v1567
    %v1569 = vrot.slane %v1564, %v1568
    %v1572 = vsel %vm351, %v1560, 0
    %1574 = vmatprep.subr.bf16.mxu0 0
    %1575 = vmatpush1.bf16.msra.mxu0 0
    %1576 = vmatprep.subr.bf16.mxu0 0
    %1577 = vmatpush1.bf16.msra.mxu0 0
    %1578 = vmatprep.subr.bf16.mxu0 0
    %1579 = vmatpush1.bf16.msra.mxu0 0
    %1580 = vmatprep.subr.bf16.mxu0 0
    %1581 = vmatpush1.bf16.msra.mxu0 0
    %1582 = vmatprep.subr.bf16.mxu0 0
    %1583 = vmatpush1.bf16.msra.mxu0 0
    %1584 = vmatprep.subr.bf16.mxu0 0
    %1585 = vmatpush1.bf16.msra.mxu0 0
    %1586 = vmatprep.subr.bf16.mxu0 0
    %1587 = vmatpush1.bf16.msra.mxu0 %v1562
    %1588 = vmatprep.subr.bf16.mxu0 0
    %1589 = vmatpush1.bf16.msra.mxu0 %v1561
    %1590 = vmatprep.subr.bf16.mxu0 0
    %1591 = vmatpush2.bf16.msra.mxu0 0
    %1592 = vmatprep.subr.bf16.mxu0 0
    %1593 = vmatpush2.bf16.msra.mxu0 0
    %1594 = vmatprep.subr.bf16.mxu0 0
    %1595 = vmatpush2.bf16.msra.mxu0 0
    %1596 = vmatprep.subr.bf16.mxu0 0
    %1597 = vmatpush2.bf16.msra.mxu0 0
    %1598 = vmatprep.subr.bf16.mxu0 0
    %1599 = vmatpush2.bf16.msra.mxu0 0
    %1600 = vmatprep.subr.bf16.mxu0 0
    %1601 = vmatpush2.bf16.msra.mxu0 0
    %1602 = vmatprep.subr.bf16.mxu0 0
    %1603 = vmatpush2.bf16.msra.mxu0 0
    %1604 = vmatprep.subr.bf16.mxu0 0
    %1605 = vmatpush2.bf16.msra.mxu0 0
    %1606 = vmatprep.mubr.bf16.mxu0 0
    %1607 = vmatmul.mubr.bf16.gmra.mxu0 %v1572
    %v1608 = vpop.f32.mrf.mxu0
    %v1609 = vadd.f32 %v1569, %v1608
    %v1610 = vpop.f32.mrf.mxu0
    %v1611 = vpop.f32.mrf.mxu0
    %v1612 = vadd.f32 %v1569, %v1611
    %v1613 = vpop.f32.mrf.mxu0
    %1614 = vdwg.mxu0
    %v1615 = vpack.c.bf16 %v1550, %v1550
    %v1617 = vsel %vm223, %v1615, 0
    %1619 = vmatprep.subr.bf16.mxu0 0
    %1620 = vmatpush1.bf16.msra.mxu0 0
    %1621 = vmatprep.subr.bf16.mxu0 0
    %1622 = vmatpush1.bf16.msra.mxu0 0
    %1623 = vmatprep.subr.bf16.mxu0 0
    %1624 = vmatpush1.bf16.msra.mxu0 0
    %1625 = vmatprep.subr.bf16.mxu0 0
    %1626 = vmatpush1.bf16.msra.mxu0 0
    %1627 = vmatprep.subr.bf16.mxu0 0
    %1628 = vmatpush1.bf16.msra.mxu0 0
    %1629 = vmatprep.subr.bf16.mxu0 0
    %1630 = vmatpush1.bf16.msra.mxu0 0
    %1631 = vmatprep.subr.bf16.mxu0 0
    %1632 = vmatpush1.bf16.msra.mxu0 0
    %1633 = vmatprep.subr.bf16.mxu0 0
    %1634 = vmatpush1.bf16.msra.mxu0 %v1617
    %1635 = vmatprep.subr.bf16.mxu0 0
    %1636 = vmatpush2.bf16.msra.mxu0 0
    %1637 = vmatprep.subr.bf16.mxu0 0
    %1638 = vmatpush2.bf16.msra.mxu0 0
    %1639 = vmatprep.subr.bf16.mxu0 0
    %1640 = vmatpush2.bf16.msra.mxu0 0
    %1641 = vmatprep.subr.bf16.mxu0 0
    %1642 = vmatpush2.bf16.msra.mxu0 0
    %1643 = vmatprep.subr.bf16.mxu0 0
    %1644 = vmatpush2.bf16.msra.mxu0 0
    %1645 = vmatprep.subr.bf16.mxu0 0
    %1646 = vmatpush2.bf16.msra.mxu0 0
    %1647 = vmatprep.subr.bf16.mxu0 0
    %1648 = vmatpush2.bf16.msra.mxu0 0
    %1649 = vmatprep.subr.bf16.mxu0 0
    %1650 = vmatpush2.bf16.msra.mxu0 0
    %1651 = vmatprep.mubr.bf16.mxu0 0
    %1652 = vmatmul.mubr.bf16.gmra.mxu0 %v462
    %v1653 = vpop.f32.mrf.mxu0
    %v1654 = vadd.f32 0.0, %v1653
    %v1655 = vpop.f32.mrf.mxu0
    %v1656 = vpop.f32.mrf.mxu0
    %v1657 = vadd.f32 0.0, %v1656
    %v1658 = vpop.f32.mrf.mxu0
    %1659 = vmatprep.mubr.bf16.mxu0 0
    %1660 = vmatmul.mubr.bf16.gmra.mxu0 %v465
    %v1661 = vpop.f32.mrf.mxu0
    %v1662 = vadd.f32 0.0, %v1661
    %v1663 = vpop.f32.mrf.mxu0
    %v1664 = vpop.f32.mrf.mxu0
    %v1665 = vadd.f32 0.0, %v1664
    %v1666 = vpop.f32.mrf.mxu0
    %1667 = vmatprep.mubr.bf16.mxu0 0
    %1668 = vmatmul.mubr.bf16.gmra.mxu0 %v468
    %v1669 = vpop.f32.mrf.mxu0
    %v1670 = vadd.f32 0.0, %v1669
    %v1671 = vpop.f32.mrf.mxu0
    %v1672 = vpop.f32.mrf.mxu0
    %v1673 = vadd.f32 0.0, %v1672
    %v1674 = vpop.f32.mrf.mxu0
    %1675 = vmatprep.mubr.bf16.mxu0 0
    %1676 = vmatmul.mubr.bf16.gmra.mxu0 %v471
    %v1677 = vpop.f32.mrf.mxu0
    %v1678 = vadd.f32 0.0, %v1677
    %v1679 = vpop.f32.mrf.mxu0
    %v1680 = vpop.f32.mrf.mxu0
    %v1681 = vadd.f32 0.0, %v1680
    %v1682 = vpop.f32.mrf.mxu0
    %1683 = vmatprep.mubr.bf16.mxu0 0
    %1684 = vmatmul.mubr.bf16.gmra.mxu0 %v474
    %v1685 = vpop.f32.mrf.mxu0
    %v1686 = vadd.f32 0.0, %v1685
    %v1687 = vpop.f32.mrf.mxu0
    %v1688 = vpop.f32.mrf.mxu0
    %v1689 = vadd.f32 0.0, %v1688
    %v1690 = vpop.f32.mrf.mxu0
    %1691 = vmatprep.mubr.bf16.mxu0 0
    %1692 = vmatmul.mubr.bf16.gmra.mxu0 %v477
    %v1693 = vpop.f32.mrf.mxu0
    %v1694 = vadd.f32 0.0, %v1693
    %v1695 = vpop.f32.mrf.mxu0
    %v1696 = vpop.f32.mrf.mxu0
    %v1697 = vadd.f32 0.0, %v1696
    %v1698 = vpop.f32.mrf.mxu0
    %1699 = vdwg.mxu0
    %v1700 = vpack.c.bf16 %v1612, %v1609
    %v1702 = vsel %vm589, %v1700, 0
    %1704 = vmatprep.subr.bf16.mxu0 0
    %1705 = vmatpush1.bf16.msra.mxu0 0
    %1706 = vmatprep.subr.bf16.mxu0 0
    %1707 = vmatpush1.bf16.msra.mxu0 0
    %1708 = vmatprep.subr.bf16.mxu0 0
    %1709 = vmatpush1.bf16.msra.mxu0 0
    %1710 = vmatprep.subr.bf16.mxu0 0
    %1711 = vmatpush1.bf16.msra.mxu0 0
    %1712 = vmatprep.subr.bf16.mxu0 0
    %1713 = vmatpush1.bf16.msra.mxu0 0
    %1714 = vmatprep.subr.bf16.mxu0 0
    %1715 = vmatpush1.bf16.msra.mxu0 0
    %1716 = vmatprep.subr.bf16.mxu0 0
    %1717 = vmatpush1.bf16.msra.mxu0 0
    %1718 = vmatprep.subr.bf16.mxu0 0
    %1719 = vmatpush1.bf16.msra.mxu0 %v1702
    %1720 = vmatprep.subr.bf16.mxu0 0
    %1721 = vmatpush2.bf16.msra.mxu0 0
    %1722 = vmatprep.subr.bf16.mxu0 0
    %1723 = vmatpush2.bf16.msra.mxu0 0
    %1724 = vmatprep.subr.bf16.mxu0 0
    %1725 = vmatpush2.bf16.msra.mxu0 0
    %1726 = vmatprep.subr.bf16.mxu0 0
    %1727 = vmatpush2.bf16.msra.mxu0 0
    %1728 = vmatprep.subr.bf16.mxu0 0
    %1729 = vmatpush2.bf16.msra.mxu0 0
    %1730 = vmatprep.subr.bf16.mxu0 0
    %1731 = vmatpush2.bf16.msra.mxu0 0
    %1732 = vmatprep.subr.bf16.mxu0 0
    %1733 = vmatpush2.bf16.msra.mxu0 0
    %1734 = vmatprep.subr.bf16.mxu0 0
    %1735 = vmatpush2.bf16.msra.mxu0 0
    %1736 = vmatprep.mubr.bf16.mxu0 0
    %1737 = vmatmul.mubr.bf16.gmra.mxu0 %v572
    %v1738 = vpop.f32.mrf.mxu0
    %v1739 = vadd.f32 0.0, %v1738
    %v1740 = vpop.f32.mrf.mxu0
    %v1741 = vpop.f32.mrf.mxu0
    %v1742 = vadd.f32 0.0, %v1741
    %v1743 = vpop.f32.mrf.mxu0
    %1744 = vmatprep.mubr.bf16.mxu0 0
    %1745 = vmatmul.mubr.bf16.gmra.mxu0 %v575
    %v1746 = vpop.f32.mrf.mxu0
    %v1747 = vadd.f32 0.0, %v1746
    %v1748 = vpop.f32.mrf.mxu0
    %v1749 = vpop.f32.mrf.mxu0
    %v1750 = vadd.f32 0.0, %v1749
    %v1751 = vpop.f32.mrf.mxu0
    %1752 = vmatprep.mubr.bf16.mxu0 0
    %1753 = vmatmul.mubr.bf16.gmra.mxu0 %v578
    %v1754 = vpop.f32.mrf.mxu0
    %v1755 = vadd.f32 0.0, %v1754
    %v1756 = vpop.f32.mrf.mxu0
    %v1757 = vpop.f32.mrf.mxu0
    %v1758 = vadd.f32 0.0, %v1757
    %v1759 = vpop.f32.mrf.mxu0
    %1760 = vmatprep.mubr.bf16.mxu0 0
    %1761 = vmatmul.mubr.bf16.gmra.mxu0 %v581
    %v1762 = vpop.f32.mrf.mxu0
    %v1763 = vadd.f32 0.0, %v1762
    %v1764 = vpop.f32.mrf.mxu0
    %v1765 = vpop.f32.mrf.mxu0
    %v1766 = vadd.f32 0.0, %v1765
    %v1767 = vpop.f32.mrf.mxu0
    %1768 = vmatprep.mubr.bf16.mxu0 0
    %1769 = vmatmul.mubr.bf16.gmra.mxu0 %v584
    %v1770 = vpop.f32.mrf.mxu0
    %v1771 = vadd.f32 0.0, %v1770
    %v1772 = vpop.f32.mrf.mxu0
    %v1773 = vpop.f32.mrf.mxu0
    %v1774 = vadd.f32 0.0, %v1773
    %v1775 = vpop.f32.mrf.mxu0
    %1776 = vmatprep.mubr.bf16.mxu0 0
    %1777 = vmatmul.mubr.bf16.gmra.mxu0 %v587
    %v1778 = vpop.f32.mrf.mxu0
    %v1779 = vadd.f32 0.0, %v1778
    %v1780 = vpop.f32.mrf.mxu0
    %v1781 = vpop.f32.mrf.mxu0
    %v1782 = vadd.f32 0.0, %v1781
    %v1783 = vpop.f32.mrf.mxu0
    %1784 = vdwg.mxu0
    %s1785 = scalar_lea.vmem %s15, 32
    %v1786 = vld [vmem:[%s1785] sm:$0xff]
    %v1787 = vld [vmem:[%s1785 + $0x8] sm:$0xff]
    %v1788 = vld [vmem:[%s1785 + $0x10] sm:$0xff]
    %v1789 = vld [vmem:[%s1785 + $0x18] sm:$0xff]
    %v1790 = vpack.c.bf16 %v1368, %v1367
    %v1791 = vpack.c.bf16 %v1370, %v1369
    %v1792 = vpack.c.bf16 %v1372, %v1371
    %v1793 = vpack.c.bf16 %v1374, %v1373
    %v1794 = vpack.c.bf16 %v1376, %v1375
    %v1795 = vpack.c.bf16 %v1378, %v1377
    %v1796 = vpack.c.bf16 %v1787, %v1786
    %v1797 = vpack.c.bf16 %v1789, %v1788
    %s1798 = scalar_lea.vmem %s16, 1
    %v1799 = vld [vmem:[%s1798] sm:$0x1]
    %v1801 = vlaneseq
    %v1802 = vshrl.u32 %v1801, 7
    %v1803 = vsub.s32 0, %v1802
    %v1804 = vrot.slane %v1799, %v1803
    %v1807 = vsel %vm351, %v1790, 0
    %v1810 = vsel %vm351, %v1791, 0
    %v1813 = vsel %vm351, %v1792, 0
    %v1816 = vsel %vm351, %v1793, 0
    %v1819 = vsel %vm351, %v1794, 0
    %v1822 = vsel %vm351, %v1795, 0
    %1824 = vmatprep.subr.bf16.mxu0 0
    %1825 = vmatpush1.bf16.msra.mxu0 0
    %1826 = vmatprep.subr.bf16.mxu0 0
    %1827 = vmatpush1.bf16.msra.mxu0 0
    %1828 = vmatprep.subr.bf16.mxu0 0
    %1829 = vmatpush1.bf16.msra.mxu0 0
    %1830 = vmatprep.subr.bf16.mxu0 0
    %1831 = vmatpush1.bf16.msra.mxu0 0
    %1832 = vmatprep.subr.bf16.mxu0 0
    %1833 = vmatpush1.bf16.msra.mxu0 0
    %1834 = vmatprep.subr.bf16.mxu0 0
    %1835 = vmatpush1.bf16.msra.mxu0 0
    %1836 = vmatprep.subr.bf16.mxu0 0
    %1837 = vmatpush1.bf16.msra.mxu0 %v1797
    %1838 = vmatprep.subr.bf16.mxu0 0
    %1839 = vmatpush1.bf16.msra.mxu0 %v1796
    %1840 = vmatprep.subr.bf16.mxu0 0
    %1841 = vmatpush2.bf16.msra.mxu0 0
    %1842 = vmatprep.subr.bf16.mxu0 0
    %1843 = vmatpush2.bf16.msra.mxu0 0
    %1844 = vmatprep.subr.bf16.mxu0 0
    %1845 = vmatpush2.bf16.msra.mxu0 0
    %1846 = vmatprep.subr.bf16.mxu0 0
    %1847 = vmatpush2.bf16.msra.mxu0 0
    %1848 = vmatprep.subr.bf16.mxu0 0
    %1849 = vmatpush2.bf16.msra.mxu0 0
    %1850 = vmatprep.subr.bf16.mxu0 0
    %1851 = vmatpush2.bf16.msra.mxu0 0
    %1852 = vmatprep.subr.bf16.mxu0 0
    %1853 = vmatpush2.bf16.msra.mxu0 0
    %1854 = vmatprep.subr.bf16.mxu0 0
    %1855 = vmatpush2.bf16.msra.mxu0 0
    %1856 = vmatprep.mubr.bf16.mxu0 0
    %1857 = vmatmul.mubr.bf16.gmra.mxu0 %v1807
    %v1858 = vpop.f32.mrf.mxu0
    %v1859 = vadd.f32 %v1804, %v1858
    %v1860 = vpop.f32.mrf.mxu0
    %v1861 = vpop.f32.mrf.mxu0
    %v1862 = vadd.f32 %v1804, %v1861
    %v1863 = vpop.f32.mrf.mxu0
    %1864 = vmatprep.mubr.bf16.mxu0 0
    %1865 = vmatmul.mubr.bf16.gmra.mxu0 %v1810
    %v1866 = vpop.f32.mrf.mxu0
    %v1867 = vadd.f32 %v1804, %v1866
    %v1868 = vpop.f32.mrf.mxu0
    %v1869 = vpop.f32.mrf.mxu0
    %v1870 = vadd.f32 %v1804, %v1869
    %v1871 = vpop.f32.mrf.mxu0
    %1872 = vmatprep.mubr.bf16.mxu0 0
    %1873 = vmatmul.mubr.bf16.gmra.mxu0 %v1813
    %v1874 = vpop.f32.mrf.mxu0
    %v1875 = vadd.f32 %v1804, %v1874
    %v1876 = vpop.f32.mrf.mxu0
    %v1877 = vpop.f32.mrf.mxu0
    %v1878 = vadd.f32 %v1804, %v1877
    %v1879 = vpop.f32.mrf.mxu0
    %1880 = vmatprep.mubr.bf16.mxu0 0
    %1881 = vmatmul.mubr.bf16.gmra.mxu0 %v1816
    %v1882 = vpop.f32.mrf.mxu0
    %v1883 = vadd.f32 %v1804, %v1882
    %v1884 = vpop.f32.mrf.mxu0
    %v1885 = vpop.f32.mrf.mxu0
    %v1886 = vadd.f32 %v1804, %v1885
    %v1887 = vpop.f32.mrf.mxu0
    %1888 = vmatprep.mubr.bf16.mxu0 0
    %1889 = vmatmul.mubr.bf16.gmra.mxu0 %v1819
    %v1890 = vpop.f32.mrf.mxu0
    %v1891 = vadd.f32 %v1804, %v1890
    %v1892 = vpop.f32.mrf.mxu0
    %v1893 = vpop.f32.mrf.mxu0
    %v1894 = vadd.f32 %v1804, %v1893
    %v1895 = vpop.f32.mrf.mxu0
    %1896 = vmatprep.mubr.bf16.mxu0 0
    %1897 = vmatmul.mubr.bf16.gmra.mxu0 %v1822
    %v1898 = vpop.f32.mrf.mxu0
    %v1899 = vadd.f32 %v1804, %v1898
    %v1900 = vpop.f32.mrf.mxu0
    %v1901 = vpop.f32.mrf.mxu0
    %v1902 = vadd.f32 %v1804, %v1901
    %v1903 = vpop.f32.mrf.mxu0
    %1904 = vdwg.mxu0
    %v1905 = vadd.f32 %v1859, %v1654
    %v1906 = vadd.f32 %v1862, %v1657
    %v1907 = vadd.f32 %v1867, %v1662
    %v1908 = vadd.f32 %v1870, %v1665
    %v1909 = vadd.f32 %v1875, %v1670
    %v1910 = vadd.f32 %v1878, %v1673
    %v1911 = vadd.f32 %v1883, %v1678
    %v1912 = vadd.f32 %v1886, %v1681
    %v1913 = vadd.f32 %v1891, %v1686
    %v1914 = vadd.f32 %v1894, %v1689
    %v1915 = vadd.f32 %v1899, %v1694
    %v1916 = vadd.f32 %v1902, %v1697
    %v1917 = vadd.f32 %v1905, %v1739
    %v1918 = vadd.f32 %v1906, %v1742
    %v1919 = vadd.f32 %v1907, %v1747
    %v1920 = vadd.f32 %v1908, %v1750
    %v1921 = vadd.f32 %v1909, %v1755
    %v1922 = vadd.f32 %v1910, %v1758
    %v1923 = vadd.f32 %v1911, %v1763
    %v1924 = vadd.f32 %v1912, %v1766
    %v1925 = vadd.f32 %v1913, %v1771
    %v1926 = vadd.f32 %v1914, %v1774
    %v1927 = vadd.f32 %v1915, %v1779
    %v1928 = vadd.f32 %v1916, %v1782
    %s1929 = scalar_lea.vmem %s17, 3
    %v1930 = vld [vmem:[%s1929] sm:$0x1]
    %s1931 = scalar_lea.vmem %s18, 3
    %v1932 = vld [vmem:[%s1931] sm:$0x1]
    %v1933 = vsel %vm351, %v1917, 0.0
    %v1934 = vsel %vm351, %v1918, 0.0
    %v1935 = vadd.f32 %v1933, %v1934
    %v1936 = vsel %vm351, %v1919, 0.0
    %v1937 = vadd.f32 %v1935, %v1936
    %v1938 = vsel %vm351, %v1920, 0.0
    %v1939 = vadd.f32 %v1937, %v1938
    %v1940 = vsel %vm351, %v1921, 0.0
    %v1941 = vadd.f32 %v1939, %v1940
    %v1942 = vsel %vm351, %v1922, 0.0
    %v1943 = vadd.f32 %v1941, %v1942
    %v1944 = vsel %vm351, %v1923, 0.0
    %v1945 = vadd.f32 %v1943, %v1944
    %v1946 = vsel %vm351, %v1924, 0.0
    %v1947 = vadd.f32 %v1945, %v1946
    %v1948 = vsel %vm351, %v1925, 0.0
    %v1949 = vadd.f32 %v1947, %v1948
    %v1950 = vsel %vm351, %v1926, 0.0
    %v1951 = vadd.f32 %v1949, %v1950
    %v1952 = vsel %vm351, %v1927, 0.0
    %v1953 = vadd.f32 %v1951, %v1952
    %v1954 = vsel %vm351, %v1928, 0.0
    %v1955 = vadd.f32 %v1953, %v1954
    %v1956 = vrot.slane %v1955, 4
    %v1957 = vadd.f32 %v1955, %v1956
    %v1958 = vrot.slane %v1957, 2
    %v1959 = vadd.f32 %v1957, %v1958
    %v1960 = vrot.slane %v1959, 1
    %v1961 = vadd.f32 %v1959, %v1960
    %v1962 = vmul.f32 %v1961, %v1249
    %v1963 = vsub.f32 %v1917, %v1962
    %v1964 = vsub.f32 %v1918, %v1962
    %v1965 = vsub.f32 %v1919, %v1962
    %v1966 = vsub.f32 %v1920, %v1962
    %v1967 = vsub.f32 %v1921, %v1962
    %v1968 = vsub.f32 %v1922, %v1962
    %v1969 = vsub.f32 %v1923, %v1962
    %v1970 = vsub.f32 %v1924, %v1962
    %v1971 = vsub.f32 %v1925, %v1962
    %v1972 = vsub.f32 %v1926, %v1962
    %v1973 = vsub.f32 %v1927, %v1962
    %v1974 = vsub.f32 %v1928, %v1962
    %v1975 = vmul.f32 %v1963, %v1963
    %v1976 = vmul.f32 %v1964, %v1964
    %v1977 = vmul.f32 %v1965, %v1965
    %v1978 = vmul.f32 %v1966, %v1966
    %v1979 = vmul.f32 %v1967, %v1967
    %v1980 = vmul.f32 %v1968, %v1968
    %v1981 = vmul.f32 %v1969, %v1969
    %v1982 = vmul.f32 %v1970, %v1970
    %v1983 = vmul.f32 %v1971, %v1971
    %v1984 = vmul.f32 %v1972, %v1972
    %v1985 = vmul.f32 %v1973, %v1973
    %v1986 = vmul.f32 %v1974, %v1974
    %v1987 = vsel %vm351, %v1975, 0.0
    %v1988 = vsel %vm351, %v1976, 0.0
    %v1989 = vadd.f32 %v1987, %v1988
    %v1990 = vsel %vm351, %v1977, 0.0
    %v1991 = vadd.f32 %v1989, %v1990
    %v1992 = vsel %vm351, %v1978, 0.0
    %v1993 = vadd.f32 %v1991, %v1992
    %v1994 = vsel %vm351, %v1979, 0.0
    %v1995 = vadd.f32 %v1993, %v1994
    %v1996 = vsel %vm351, %v1980, 0.0
    %v1997 = vadd.f32 %v1995, %v1996
    %v1998 = vsel %vm351, %v1981, 0.0
    %v1999 = vadd.f32 %v1997, %v1998
    %v2000 = vsel %vm351, %v1982, 0.0
    %v2001 = vadd.f32 %v1999, %v2000
    %v2002 = vsel %vm351, %v1983, 0.0
    %v2003 = vadd.f32 %v2001, %v2002
    %v2004 = vsel %vm351, %v1984, 0.0
    %v2005 = vadd.f32 %v2003, %v2004
    %v2006 = vsel %vm351, %v1985, 0.0
    %v2007 = vadd.f32 %v2005, %v2006
    %v2008 = vsel %vm351, %v1986, 0.0
    %v2009 = vadd.f32 %v2007, %v2008
    %v2010 = vrot.slane %v2009, 4
    %v2011 = vadd.f32 %v2009, %v2010
    %v2012 = vrot.slane %v2011, 2
    %v2013 = vadd.f32 %v2011, %v2012
    %v2014 = vrot.slane %v2013, 1
    %v2015 = vadd.f32 %v2013, %v2014
    %v2016 = vmul.f32 %v2015, %v1249
    %v2018 = vlaneseq
    %v2019 = vshrl.u32 %v2018, 7
    %v2020 = vsub.s32 0, %v2019
    %v2021 = vrot.slane %v1930, %v2020
    %v2023 = vmul.f32 %v2021, %v1963
    %v2024 = vmul.f32 %v2021, %v1964
    %v2025 = vmul.f32 %v2021, %v1965
    %v2026 = vmul.f32 %v2021, %v1966
    %v2027 = vmul.f32 %v2021, %v1967
    %v2028 = vmul.f32 %v2021, %v1968
    %v2029 = vmul.f32 %v2021, %v1969
    %v2030 = vmul.f32 %v2021, %v1970
    %v2031 = vmul.f32 %v2021, %v1971
    %v2032 = vmul.f32 %v2021, %v1972
    %v2033 = vmul.f32 %v2021, %v1973
    %v2034 = vmul.f32 %v2021, %v1974
    %v2035 = vadd.f32 %v2016, 1e-05
    %v2036 = vrsqrt.pop %v2035
    %v2037 = vmul.f32 %v2023, %v2036
    %v2038 = vmul.f32 %v2024, %v2036
    %v2039 = vmul.f32 %v2025, %v2036
    %v2040 = vmul.f32 %v2026, %v2036
    %v2041 = vmul.f32 %v2027, %v2036
    %v2042 = vmul.f32 %v2028, %v2036
    %v2043 = vmul.f32 %v2029, %v2036
    %v2044 = vmul.f32 %v2030, %v2036
    %v2045 = vmul.f32 %v2031, %v2036
    %v2046 = vmul.f32 %v2032, %v2036
    %v2047 = vmul.f32 %v2033, %v2036
    %v2048 = vmul.f32 %v2034, %v2036
    %v2050 = vlaneseq
    %v2051 = vshrl.u32 %v2050, 7
    %v2052 = vsub.s32 0, %v2051
    %v2053 = vrot.slane %v1932, %v2052
    %v2055 = vadd.f32 %v2037, %v2053
    %v2056 = vadd.f32 %v2038, %v2053
    %v2057 = vadd.f32 %v2039, %v2053
    %v2058 = vadd.f32 %v2040, %v2053
    %v2059 = vadd.f32 %v2041, %v2053
    %v2060 = vadd.f32 %v2042, %v2053
    %v2061 = vadd.f32 %v2043, %v2053
    %v2062 = vadd.f32 %v2044, %v2053
    %v2063 = vadd.f32 %v2045, %v2053
    %v2064 = vadd.f32 %v2046, %v2053
    %v2065 = vadd.f32 %v2047, %v2053
    %v2066 = vadd.f32 %v2048, %v2053
    %v2067 = vmax.f32 %v2055, 0.0
    %v2068 = vmax.f32 %v2056, 0.0
    %v2069 = vmax.f32 %v2057, 0.0
    %v2070 = vmax.f32 %v2058, 0.0
    %v2071 = vmax.f32 %v2059, 0.0
    %v2072 = vmax.f32 %v2060, 0.0
    %v2073 = vmax.f32 %v2061, 0.0
    %v2074 = vmax.f32 %v2062, 0.0
    %v2075 = vmax.f32 %v2063, 0.0
    %v2076 = vmax.f32 %v2064, 0.0
    %v2077 = vmax.f32 %v2065, 0.0
    %v2078 = vmax.f32 %v2066, 0.0
    %v2079 = vadd.f32 %v1367, %v2067
    %v2080 = vadd.f32 %v1368, %v2068
    %v2081 = vadd.f32 %v1369, %v2069
    %v2082 = vadd.f32 %v1370, %v2070
    %v2083 = vadd.f32 %v1371, %v2071
    %v2084 = vadd.f32 %v1372, %v2072
    %v2085 = vadd.f32 %v1373, %v2073
    %v2086 = vadd.f32 %v1374, %v2074
    %v2087 = vadd.f32 %v1375, %v2075
    %v2088 = vadd.f32 %v1376, %v2076
    %v2089 = vadd.f32 %v1377, %v2077
    %v2090 = vadd.f32 %v1378, %v2078
    %v2091 = vld [vmem:[%s19] sm:$0xff]
    %v2092 = vld [vmem:[%s19 + $0x8] sm:$0xff]
    %v2093 = vld [vmem:[%s19 + $0x10] sm:$0xff]
    %v2094 = vld [vmem:[%s19 + $0x18] sm:$0xff]
    %v2095 = vpack.c.bf16 %v2080, %v2079
    %v2096 = vpack.c.bf16 %v2082, %v2081
    %v2097 = vpack.c.bf16 %v2084, %v2083
    %v2098 = vpack.c.bf16 %v2086, %v2085
    %v2099 = vpack.c.bf16 %v2088, %v2087
    %v2100 = vpack.c.bf16 %v2090, %v2089
    %v2101 = vpack.c.bf16 %v2092, %v2091
    %v2102 = vpack.c.bf16 %v2094, %v2093
    %v2103 = vld [vmem:[%s20] sm:$0x1]
    %v2105 = vlaneseq
    %v2106 = vshrl.u32 %v2105, 7
    %v2107 = vsub.s32 0, %v2106
    %v2108 = vrot.slane %v2103, %v2107
    %v2111 = vsel %vm351, %v2095, 0
    %v2114 = vsel %vm351, %v2096, 0
    %v2117 = vsel %vm351, %v2097, 0
    %v2120 = vsel %vm351, %v2098, 0
    %v2123 = vsel %vm351, %v2099, 0
    %v2126 = vsel %vm351, %v2100, 0
    %2128 = vmatprep.subr.bf16.mxu0 0
    %2129 = vmatpush1.bf16.msra.mxu0 0
    %2130 = vmatprep.subr.bf16.mxu0 0
    %2131 = vmatpush1.bf16.msra.mxu0 0
    %2132 = vmatprep.subr.bf16.mxu0 0
    %2133 = vmatpush1.bf16.msra.mxu0 0
    %2134 = vmatprep.subr.bf16.mxu0 0
    %2135 = vmatpush1.bf16.msra.mxu0 0
    %2136 = vmatprep.subr.bf16.mxu0 0
    %2137 = vmatpush1.bf16.msra.mxu0 0
    %2138 = vmatprep.subr.bf16.mxu0 0
    %2139 = vmatpush1.bf16.msra.mxu0 0
    %2140 = vmatprep.subr.bf16.mxu0 0
    %2141 = vmatpush1.bf16.msra.mxu0 %v2102
    %2142 = vmatprep.subr.bf16.mxu0 0
    %2143 = vmatpush1.bf16.msra.mxu0 %v2101
    %2144 = vmatprep.subr.bf16.mxu0 0
    %2145 = vmatpush2.bf16.msra.mxu0 0
    %2146 = vmatprep.subr.bf16.mxu0 0
    %2147 = vmatpush2.bf16.msra.mxu0 0
    %2148 = vmatprep.subr.bf16.mxu0 0
    %2149 = vmatpush2.bf16.msra.mxu0 0
    %2150 = vmatprep.subr.bf16.mxu0 0
    %2151 = vmatpush2.bf16.msra.mxu0 0
    %2152 = vmatprep.subr.bf16.mxu0 0
    %2153 = vmatpush2.bf16.msra.mxu0 0
    %2154 = vmatprep.subr.bf16.mxu0 0
    %2155 = vmatpush2.bf16.msra.mxu0 0
    %2156 = vmatprep.subr.bf16.mxu0 0
    %2157 = vmatpush2.bf16.msra.mxu0 0
    %2158 = vmatprep.subr.bf16.mxu0 0
    %2159 = vmatpush2.bf16.msra.mxu0 0
    %2160 = vmatprep.mubr.bf16.mxu0 0
    %2161 = vmatmul.mubr.bf16.gmra.mxu0 %v2111
    %v2162 = vpop.f32.mrf.mxu0
    %v2163 = vadd.f32 %v2108, %v2162
    %v2164 = vpop.f32.mrf.mxu0
    %v2165 = vpop.f32.mrf.mxu0
    %v2166 = vadd.f32 %v2108, %v2165
    %v2167 = vpop.f32.mrf.mxu0
    %2168 = vmatprep.mubr.bf16.mxu0 0
    %2169 = vmatmul.mubr.bf16.gmra.mxu0 %v2114
    %v2170 = vpop.f32.mrf.mxu0
    %v2171 = vadd.f32 %v2108, %v2170
    %v2172 = vpop.f32.mrf.mxu0
    %v2173 = vpop.f32.mrf.mxu0
    %v2174 = vadd.f32 %v2108, %v2173
    %v2175 = vpop.f32.mrf.mxu0
    %2176 = vmatprep.mubr.bf16.mxu0 0
    %2177 = vmatmul.mubr.bf16.gmra.mxu0 %v2117
    %v2178 = vpop.f32.mrf.mxu0
    %v2179 = vadd.f32 %v2108, %v2178
    %v2180 = vpop.f32.mrf.mxu0
    %v2181 = vpop.f32.mrf.mxu0
    %v2182 = vadd.f32 %v2108, %v2181
    %v2183 = vpop.f32.mrf.mxu0
    %2184 = vmatprep.mubr.bf16.mxu0 0
    %2185 = vmatmul.mubr.bf16.gmra.mxu0 %v2120
    %v2186 = vpop.f32.mrf.mxu0
    %v2187 = vadd.f32 %v2108, %v2186
    %v2188 = vpop.f32.mrf.mxu0
    %v2189 = vpop.f32.mrf.mxu0
    %v2190 = vadd.f32 %v2108, %v2189
    %v2191 = vpop.f32.mrf.mxu0
    %2192 = vmatprep.mubr.bf16.mxu0 0
    %2193 = vmatmul.mubr.bf16.gmra.mxu0 %v2123
    %v2194 = vpop.f32.mrf.mxu0
    %v2195 = vadd.f32 %v2108, %v2194
    %v2196 = vpop.f32.mrf.mxu0
    %v2197 = vpop.f32.mrf.mxu0
    %v2198 = vadd.f32 %v2108, %v2197
    %v2199 = vpop.f32.mrf.mxu0
    %2200 = vmatprep.mubr.bf16.mxu0 0
    %2201 = vmatmul.mubr.bf16.gmra.mxu0 %v2126
    %v2202 = vpop.f32.mrf.mxu0
    %v2203 = vadd.f32 %v2108, %v2202
    %v2204 = vpop.f32.mrf.mxu0
    %v2205 = vpop.f32.mrf.mxu0
    %v2206 = vadd.f32 %v2108, %v2205
    %v2207 = vpop.f32.mrf.mxu0
    %2208 = vdwg.mxu0
    %v2209 = vmax.f32 %v2163, 0.0
    %v2210 = vmax.f32 %v2166, 0.0
    %v2211 = vmax.f32 %v2171, 0.0
    %v2212 = vmax.f32 %v2174, 0.0
    %v2213 = vmax.f32 %v2179, 0.0
    %v2214 = vmax.f32 %v2182, 0.0
    %v2215 = vmax.f32 %v2187, 0.0
    %v2216 = vmax.f32 %v2190, 0.0
    %v2217 = vmax.f32 %v2195, 0.0
    %v2218 = vmax.f32 %v2198, 0.0
    %v2219 = vmax.f32 %v2203, 0.0
    %v2220 = vmax.f32 %v2206, 0.0
    %v2221 = vld [vmem:[%s21] sm:$0xff]
    %v2222 = vld [vmem:[%s21 + $0x8] sm:$0xff]
    %v2223 = vld [vmem:[%s21 + $0x10] sm:$0xff]
    %v2224 = vld [vmem:[%s21 + $0x18] sm:$0xff]
    %v2225 = vpack.c.bf16 %v2210, %v2209
    %v2226 = vpack.c.bf16 %v2212, %v2211
    %v2227 = vpack.c.bf16 %v2214, %v2213
    %v2228 = vpack.c.bf16 %v2216, %v2215
    %v2229 = vpack.c.bf16 %v2218, %v2217
    %v2230 = vpack.c.bf16 %v2220, %v2219
    %v2231 = vpack.c.bf16 %v2222, %v2221
    %v2232 = vpack.c.bf16 %v2224, %v2223
    %v2233 = vld [vmem:[%s22] sm:$0x1]
    %v2235 = vlaneseq
    %v2236 = vshrl.u32 %v2235, 7
    %v2237 = vsub.s32 0, %v2236
    %v2238 = vrot.slane %v2233, %v2237
    %v2241 = vsel %vm351, %v2225, 0
    %v2244 = vsel %vm351, %v2226, 0
    %v2247 = vsel %vm351, %v2227, 0
    %v2250 = vsel %vm351, %v2228, 0
    %v2253 = vsel %vm351, %v2229, 0
    %v2256 = vsel %vm351, %v2230, 0
    %2258 = vmatprep.subr.bf16.mxu0 0
    %2259 = vmatpush1.bf16.msra.mxu0 0
    %2260 = vmatprep.subr.bf16.mxu0 0
    %2261 = vmatpush1.bf16.msra.mxu0 0
    %2262 = vmatprep.subr.bf16.mxu0 0
    %2263 = vmatpush1.bf16.msra.mxu0 0
    %2264 = vmatprep.subr.bf16.mxu0 0
    %2265 = vmatpush1.bf16.msra.mxu0 0
    %2266 = vmatprep.subr.bf16.mxu0 0
    %2267 = vmatpush1.bf16.msra.mxu0 0
    %2268 = vmatprep.subr.bf16.mxu0 0
    %2269 = vmatpush1.bf16.msra.mxu0 0
    %2270 = vmatprep.subr.bf16.mxu0 0
    %2271 = vmatpush1.bf16.msra.mxu0 %v2232
    %2272 = vmatprep.subr.bf16.mxu0 0
    %2273 = vmatpush1.bf16.msra.mxu0 %v2231
    %2274 = vmatprep.subr.bf16.mxu0 0
    %2275 = vmatpush2.bf16.msra.mxu0 0
    %2276 = vmatprep.subr.bf16.mxu0 0
    %2277 = vmatpush2.bf16.msra.mxu0 0
    %2278 = vmatprep.subr.bf16.mxu0 0
    %2279 = vmatpush2.bf16.msra.mxu0 0
    %2280 = vmatprep.subr.bf16.mxu0 0
    %2281 = vmatpush2.bf16.msra.mxu0 0
    %2282 = vmatprep.subr.bf16.mxu0 0
    %2283 = vmatpush2.bf16.msra.mxu0 0
    %2284 = vmatprep.subr.bf16.mxu0 0
    %2285 = vmatpush2.bf16.msra.mxu0 0
    %2286 = vmatprep.subr.bf16.mxu0 0
    %2287 = vmatpush2.bf16.msra.mxu0 0
    %2288 = vmatprep.subr.bf16.mxu0 0
    %2289 = vmatpush2.bf16.msra.mxu0 0
    %2290 = vmatprep.mubr.bf16.mxu0 0
    %2291 = vmatmul.mubr.bf16.gmra.mxu0 %v2241
    %v2292 = vpop.f32.mrf.mxu0
    %v2293 = vadd.f32 %v2238, %v2292
    %v2294 = vpop.f32.mrf.mxu0
    %v2295 = vpop.f32.mrf.mxu0
    %v2296 = vadd.f32 %v2238, %v2295
    %v2297 = vpop.f32.mrf.mxu0
    %2298 = vmatprep.mubr.bf16.mxu0 0
    %2299 = vmatmul.mubr.bf16.gmra.mxu0 %v2244
    %v2300 = vpop.f32.mrf.mxu0
    %v2301 = vadd.f32 %v2238, %v2300
    %v2302 = vpop.f32.mrf.mxu0
    %v2303 = vpop.f32.mrf.mxu0
    %v2304 = vadd.f32 %v2238, %v2303
    %v2305 = vpop.f32.mrf.mxu0
    %2306 = vmatprep.mubr.bf16.mxu0 0
    %2307 = vmatmul.mubr.bf16.gmra.mxu0 %v2247
    %v2308 = vpop.f32.mrf.mxu0
    %v2309 = vadd.f32 %v2238, %v2308
    %v2310 = vpop.f32.mrf.mxu0
    %v2311 = vpop.f32.mrf.mxu0
    %v2312 = vadd.f32 %v2238, %v2311
    %v2313 = vpop.f32.mrf.mxu0
    %2314 = vmatprep.mubr.bf16.mxu0 0
    %2315 = vmatmul.mubr.bf16.gmra.mxu0 %v2250
    %v2316 = vpop.f32.mrf.mxu0
    %v2317 = vadd.f32 %v2238, %v2316
    %v2318 = vpop.f32.mrf.mxu0
    %v2319 = vpop.f32.mrf.mxu0
    %v2320 = vadd.f32 %v2238, %v2319
    %v2321 = vpop.f32.mrf.mxu0
    %2322 = vmatprep.mubr.bf16.mxu0 0
    %2323 = vmatmul.mubr.bf16.gmra.mxu0 %v2253
    %v2324 = vpop.f32.mrf.mxu0
    %v2325 = vadd.f32 %v2238, %v2324
    %v2326 = vpop.f32.mrf.mxu0
    %v2327 = vpop.f32.mrf.mxu0
    %v2328 = vadd.f32 %v2238, %v2327
    %v2329 = vpop.f32.mrf.mxu0
    %2330 = vmatprep.mubr.bf16.mxu0 0
    %2331 = vmatmul.mubr.bf16.gmra.mxu0 %v2256
    %v2332 = vpop.f32.mrf.mxu0
    %v2333 = vadd.f32 %v2238, %v2332
    %v2334 = vpop.f32.mrf.mxu0
    %v2335 = vpop.f32.mrf.mxu0
    %v2336 = vadd.f32 %v2238, %v2335
    %v2337 = vpop.f32.mrf.mxu0
    %2338 = vdwg.mxu0
    %vm2339 = vcmask 15360
    %2340 = vst.msk [vmem:[%s23] sm:$0xff] %vm2339, %v2293
    %2341 = vst.msk [vmem:[%s23 + $0x8] sm:$0xff] %vm2339, %v2296
    %2342 = vst.msk [vmem:[%s23 + $0x10] sm:$0xff] %vm2339, %v2301
    %2343 = vst.msk [vmem:[%s23 + $0x18] sm:$0xff] %vm2339, %v2304
    %2344 = vst.msk [vmem:[%s23 + $0x20] sm:$0xff] %vm2339, %v2309
    %2345 = vst.msk [vmem:[%s23 + $0x28] sm:$0xff] %vm2339, %v2312
    %2346 = vst.msk [vmem:[%s23 + $0x30] sm:$0xff] %vm2339, %v2317
    %2347 = vst.msk [vmem:[%s23 + $0x38] sm:$0xff] %vm2339, %v2320
    %2348 = vst.msk [vmem:[%s23 + $0x40] sm:$0xff] %vm2339, %v2325
    %2349 = vst.msk [vmem:[%s23 + $0x48] sm:$0xff] %vm2339, %v2328
    %2350 = vst.msk [vmem:[%s23 + $0x50] sm:$0xff] %vm2339, %v2333
    %2351 = vst.msk [vmem:[%s23 + $0x58] sm:$0xff] %vm2339, %v2336
    %v2352 = vsel %vm2339, %v2293, -inf
    %2353 = vmax.xlane.f32.xlu0 %v2352
    %v2354 = vpop.xlane.xlu0 %2353
    %v2355 = vsel %vm2339, %v2296, -inf
    %2356 = vmax.xlane.f32.xlu0 %v2355
    %v2357 = vpop.xlane.xlu0 %2356
    %v2358 = vsel %vm2339, %v2301, -inf
    %2359 = vmax.xlane.f32.xlu0 %v2358
    %v2360 = vpop.xlane.xlu0 %2359
    %v2361 = vsel %vm2339, %v2304, -inf
    %2362 = vmax.xlane.f32.xlu0 %v2361
    %v2363 = vpop.xlane.xlu0 %2362
    %v2364 = vsel %vm2339, %v2309, -inf
    %2365 = vmax.xlane.f32.xlu0 %v2364
    %v2366 = vpop.xlane.xlu0 %2365
    %v2367 = vsel %vm2339, %v2312, -inf
    %2368 = vmax.xlane.f32.xlu0 %v2367
    %v2369 = vpop.xlane.xlu0 %2368
    %v2370 = vsel %vm2339, %v2317, -inf
    %2371 = vmax.xlane.f32.xlu0 %v2370
    %v2372 = vpop.xlane.xlu0 %2371
    %v2373 = vsel %vm2339, %v2320, -inf
    %2374 = vmax.xlane.f32.xlu0 %v2373
    %v2375 = vpop.xlane.xlu0 %2374
    %v2376 = vsel %vm2339, %v2325, -inf
    %2377 = vmax.xlane.f32.xlu0 %v2376
    %v2378 = vpop.xlane.xlu0 %2377
    %v2379 = vsel %vm2339, %v2328, -inf
    %2380 = vmax.xlane.f32.xlu0 %v2379
    %v2381 = vpop.xlane.xlu0 %2380
    %v2382 = vsel %vm2339, %v2333, -inf
    %2383 = vmax.xlane.f32.xlu0 %v2382
    %v2384 = vpop.xlane.xlu0 %2383
    %v2385 = vsel %vm2339, %v2336, -inf
    %2386 = vmax.xlane.f32.xlu0 %v2385
    %v2387 = vpop.xlane.xlu0 %2386
    %v2388 = vsub.f32 %v2293, %v2354
    %v2389 = vsub.f32 %v2296, %v2357
    %v2390 = vsub.f32 %v2301, %v2360
    %v2391 = vsub.f32 %v2304, %v2363
    %v2392 = vsub.f32 %v2309, %v2366
    %v2393 = vsub.f32 %v2312, %v2369
    %v2394 = vsub.f32 %v2317, %v2372
    %v2395 = vsub.f32 %v2320, %v2375
    %v2396 = vsub.f32 %v2325, %v2378
    %v2397 = vsub.f32 %v2328, %v2381
    %v2398 = vsub.f32 %v2333, %v2384
    %v2399 = vsub.f32 %v2336, %v2387
    %v2400 = vmul.f32 %v2388, 1.442695
    %v2401 = vpow.pop %v2400
    %v2402 = vmul.f32 %v2389, 1.442695
    %v2403 = vpow.pop %v2402
    %v2404 = vmul.f32 %v2390, 1.442695
    %v2405 = vpow.pop %v2404
    %v2406 = vmul.f32 %v2391, 1.442695
    %v2407 = vpow.pop %v2406
    %v2408 = vmul.f32 %v2392, 1.442695
    %v2409 = vpow.pop %v2408
    %v2410 = vmul.f32 %v2393, 1.442695
    %v2411 = vpow.pop %v2410
    %v2412 = vmul.f32 %v2394, 1.442695
    %v2413 = vpow.pop %v2412
    %v2414 = vmul.f32 %v2395, 1.442695
    %v2415 = vpow.pop %v2414
    %v2416 = vmul.f32 %v2396, 1.442695
    %v2417 = vpow.pop %v2416
    %v2418 = vmul.f32 %v2397, 1.442695
    %v2419 = vpow.pop %v2418
    %v2420 = vmul.f32 %v2398, 1.442695
    %v2421 = vpow.pop %v2420
    %v2422 = vmul.f32 %v2399, 1.442695
    %v2423 = vpow.pop %v2422
    %v2424 = vsel %vm2339, %v2401, 0.0
    %2425 = vadd.xlane.f32.xlu0 %v2424
    %v2426 = vpop.xlane.xlu0 %2425
    %v2427 = vsel %vm2339, %v2403, 0.0
    %2428 = vadd.xlane.f32.xlu0 %v2427
    %v2429 = vpop.xlane.xlu0 %2428
    %v2430 = vsel %vm2339, %v2405, 0.0
    %2431 = vadd.xlane.f32.xlu0 %v2430
    %v2432 = vpop.xlane.xlu0 %2431
    %v2433 = vsel %vm2339, %v2407, 0.0
    %2434 = vadd.xlane.f32.xlu0 %v2433
    %v2435 = vpop.xlane.xlu0 %2434
    %v2436 = vsel %vm2339, %v2409, 0.0
    %2437 = vadd.xlane.f32.xlu0 %v2436
    %v2438 = vpop.xlane.xlu0 %2437
    %v2439 = vsel %vm2339, %v2411, 0.0
    %2440 = vadd.xlane.f32.xlu0 %v2439
    %v2441 = vpop.xlane.xlu0 %2440
    %v2442 = vsel %vm2339, %v2413, 0.0
    %2443 = vadd.xlane.f32.xlu0 %v2442
    %v2444 = vpop.xlane.xlu0 %2443
    %v2445 = vsel %vm2339, %v2415, 0.0
    %2446 = vadd.xlane.f32.xlu0 %v2445
    %v2447 = vpop.xlane.xlu0 %2446
    %v2448 = vsel %vm2339, %v2417, 0.0
    %2449 = vadd.xlane.f32.xlu0 %v2448
    %v2450 = vpop.xlane.xlu0 %2449
    %v2451 = vsel %vm2339, %v2419, 0.0
    %2452 = vadd.xlane.f32.xlu0 %v2451
    %v2453 = vpop.xlane.xlu0 %2452
    %v2454 = vsel %vm2339, %v2421, 0.0
    %2455 = vadd.xlane.f32.xlu0 %v2454
    %v2456 = vpop.xlane.xlu0 %2455
    %v2457 = vsel %vm2339, %v2423, 0.0
    %2458 = vadd.xlane.f32.xlu0 %v2457
    %v2459 = vpop.xlane.xlu0 %2458
    %v2460 = vlog2.pop %v2426
    %v2461 = vmul.f32 %v2460, 0.6931472
    %v2462 = vlog2.pop %v2429
    %v2463 = vmul.f32 %v2462, 0.6931472
    %v2464 = vlog2.pop %v2432
    %v2465 = vmul.f32 %v2464, 0.6931472
    %v2466 = vlog2.pop %v2435
    %v2467 = vmul.f32 %v2466, 0.6931472
    %v2468 = vlog2.pop %v2438
    %v2469 = vmul.f32 %v2468, 0.6931472
    %v2470 = vlog2.pop %v2441
    %v2471 = vmul.f32 %v2470, 0.6931472
    %v2472 = vlog2.pop %v2444
    %v2473 = vmul.f32 %v2472, 0.6931472
    %v2474 = vlog2.pop %v2447
    %v2475 = vmul.f32 %v2474, 0.6931472
    %v2476 = vlog2.pop %v2450
    %v2477 = vmul.f32 %v2476, 0.6931472
    %v2478 = vlog2.pop %v2453
    %v2479 = vmul.f32 %v2478, 0.6931472
    %v2480 = vlog2.pop %v2456
    %v2481 = vmul.f32 %v2480, 0.6931472
    %v2482 = vlog2.pop %v2459
    %v2483 = vmul.f32 %v2482, 0.6931472
    %v2484 = vadd.f32 %v2354, %v2461
    %v2485 = vadd.f32 %v2357, %v2463
    %v2486 = vadd.f32 %v2360, %v2465
    %v2487 = vadd.f32 %v2363, %v2467
    %v2488 = vadd.f32 %v2366, %v2469
    %v2489 = vadd.f32 %v2369, %v2471
    %v2490 = vadd.f32 %v2372, %v2473
    %v2491 = vadd.f32 %v2375, %v2475
    %v2492 = vadd.f32 %v2378, %v2477
    %v2493 = vadd.f32 %v2381, %v2479
    %v2494 = vadd.f32 %v2384, %v2481
    %v2495 = vadd.f32 %v2387, %v2483
    %v2496 = vld [vmem:[%s3] sm:$0xff]
    %v2497 = vld [vmem:[%s3 + $0x8] sm:$0xff]
    %v2498 = vld [vmem:[%s3 + $0x10] sm:$0xff]
    %v2499 = vld [vmem:[%s3 + $0x18] sm:$0xff]
    %v2500 = vld [vmem:[%s3 + $0x20] sm:$0xff]
    %v2501 = vld [vmem:[%s3 + $0x28] sm:$0xff]
    %v2502 = vld [vmem:[%s3 + $0x30] sm:$0xff]
    %v2503 = vld [vmem:[%s3 + $0x38] sm:$0xff]
    %v2504 = vld [vmem:[%s3 + $0x40] sm:$0xff]
    %v2505 = vld [vmem:[%s3 + $0x48] sm:$0xff]
    %v2506 = vld [vmem:[%s3 + $0x50] sm:$0xff]
    %v2507 = vld [vmem:[%s3 + $0x58] sm:$0xff]
    %v2508 = vmul.f32 %v2496, %v2293
    %v2509 = vmul.f32 %v2497, %v2296
    %v2510 = vmul.f32 %v2498, %v2301
    %v2511 = vmul.f32 %v2499, %v2304
    %v2512 = vmul.f32 %v2500, %v2309
    %v2513 = vmul.f32 %v2501, %v2312
    %v2514 = vmul.f32 %v2502, %v2317
    %v2515 = vmul.f32 %v2503, %v2320
    %v2516 = vmul.f32 %v2504, %v2325
    %v2517 = vmul.f32 %v2505, %v2328
    %v2518 = vmul.f32 %v2506, %v2333
    %v2519 = vmul.f32 %v2507, %v2336
    %v2520 = vsel %vm2339, %v2508, 0.0
    %2521 = vadd.xlane.f32.xlu0 %v2520
    %v2522 = vpop.xlane.xlu0 %2521
    %v2523 = vsel %vm2339, %v2509, 0.0
    %2524 = vadd.xlane.f32.xlu0 %v2523
    %v2525 = vpop.xlane.xlu0 %2524
    %v2526 = vsel %vm2339, %v2510, 0.0
    %2527 = vadd.xlane.f32.xlu0 %v2526
    %v2528 = vpop.xlane.xlu0 %2527
    %v2529 = vsel %vm2339, %v2511, 0.0
    %2530 = vadd.xlane.f32.xlu0 %v2529
    %v2531 = vpop.xlane.xlu0 %2530
    %v2532 = vsel %vm2339, %v2512, 0.0
    %2533 = vadd.xlane.f32.xlu0 %v2532
    %v2534 = vpop.xlane.xlu0 %2533
    %v2535 = vsel %vm2339, %v2513, 0.0
    %2536 = vadd.xlane.f32.xlu0 %v2535
    %v2537 = vpop.xlane.xlu0 %2536
    %v2538 = vsel %vm2339, %v2514, 0.0
    %2539 = vadd.xlane.f32.xlu0 %v2538
    %v2540 = vpop.xlane.xlu0 %2539
    %v2541 = vsel %vm2339, %v2515, 0.0
    %2542 = vadd.xlane.f32.xlu0 %v2541
    %v2543 = vpop.xlane.xlu0 %2542
    %v2544 = vsel %vm2339, %v2516, 0.0
    %2545 = vadd.xlane.f32.xlu0 %v2544
    %v2546 = vpop.xlane.xlu0 %2545
    %v2547 = vsel %vm2339, %v2517, 0.0
    %2548 = vadd.xlane.f32.xlu0 %v2547
    %v2549 = vpop.xlane.xlu0 %2548
    %v2550 = vsel %vm2339, %v2518, 0.0
    %2551 = vadd.xlane.f32.xlu0 %v2550
    %v2552 = vpop.xlane.xlu0 %2551
    %v2553 = vsel %vm2339, %v2519, 0.0
    %2554 = vadd.xlane.f32.xlu0 %v2553
    %v2555 = vpop.xlane.xlu0 %2554
    %v2556 = vsub.f32 %v2484, %v2522
    %v2557 = vsub.f32 %v2485, %v2525
    %v2558 = vsub.f32 %v2486, %v2528
    %v2559 = vsub.f32 %v2487, %v2531
    %v2560 = vsub.f32 %v2488, %v2534
    %v2561 = vsub.f32 %v2489, %v2537
    %v2562 = vsub.f32 %v2490, %v2540
    %v2563 = vsub.f32 %v2491, %v2543
    %v2564 = vsub.f32 %v2492, %v2546
    %v2565 = vsub.f32 %v2493, %v2549
    %v2566 = vsub.f32 %v2494, %v2552
    %v2567 = vsub.f32 %v2495, %v2555
    %v2568 = vadd.f32 %v2556, %v2557
    %v2569 = vadd.f32 %v2568, %v2558
    %v2570 = vadd.f32 %v2569, %v2559
    %v2571 = vadd.f32 %v2570, %v2560
    %v2572 = vadd.f32 %v2571, %v2561
    %v2573 = vadd.f32 %v2572, %v2562
    %v2574 = vadd.f32 %v2573, %v2563
    %v2575 = vadd.f32 %v2574, %v2564
    %v2576 = vadd.f32 %v2575, %v2565
    %v2577 = vadd.f32 %v2576, %v2566
    %v2578 = vadd.f32 %v2577, %v2567
    %v2579 = vrot.slane %v2578, 4
    %v2580 = vadd.f32 %v2578, %v2579
    %v2581 = vrot.slane %v2580, 2
    %v2582 = vadd.f32 %v2580, %v2581
    %v2583 = vrot.slane %v2582, 1
    %v2584 = vadd.f32 %v2582, %v2583
    %v2585 = vmul.f32 %v2584, 0.010416667
    %vm2586 = vcmask 0
    %2587 = vst.msk [vmem:[#allocation2] sm:$0x1] %vm2586, %v2585
    // Predicated region
    $region94: #{tpu_custom_call.1} parent=1 // pred_check
      _
    $region95: #{tpu_custom_call.1} parent=1 // pred_check_branch
      %2589 = sbr.rel (0) target = $region97
    $region96: #{tpu_custom_call.1} parent=1 // pred_region
      _
    $region97: #{tpu_custom_call.1} parent=1 // pred_fallthru
      _
    // Predicated region
    $region98: #{tpu_custom_call.1} parent=1 // pred_check
      _
    $region99: #{tpu_custom_call.1} parent=1 // pred_check_branch
      %2591 = sbr.rel (0) target = $region101
    $region100: #{tpu_custom_call.1} parent=1 // pred_region
      %s2593 = ssub.s32 16, 16
      %2594 = vsyncadd [#allocation3], %s2593
      %s2596 = sshll.u32 [#allocation2], 4
      %s2597 = int_to_ptr.vmem [resolvable:$true] %s2596
      %2599 = dma.vmem_to_hbm [thread:$0]  %s2597, 16, %s24, [#allocation3]
    $region101: #{tpu_custom_call.1} parent=1 // pred_fallthru
      _
    // Predicated region
    $region102: #{tpu_custom_call.1} parent=1 // pred_check
      _
    $region103: #{tpu_custom_call.1} parent=1 // pred_check_branch
      %2601 = sbr.rel (0) target = $region105
    $region104: #{tpu_custom_call.1} parent=1 // pred_region
      _
    $region105: #{tpu_custom_call.1} parent=1 // pred_fallthru
      _
    // Predicated region
    $region106: #{tpu_custom_call.1} parent=1 // pred_check
      _
    $region107: #{tpu_custom_call.1} parent=1 // pred_check_branch
      %2603 = sbr.rel (0) target = $region109
    $region108: #{tpu_custom_call.1} parent=1 // pred_region
      %2604 = dma.done [#allocation3], 16
    $region109: #{tpu_custom_call.1} parent=1 // pred_fallthru
      _
    %2605 = vsyncpa [#allocation3], 1

</llo_original>
